<compile_context>
chip_gen: v6e
topology: v6e:2x2x1
jax: 0.10.0
libtpu: 0.0.40
codegen_flags: <defaults>
</compile_context>

<pallas_src>
import jax
import jax.numpy as jnp
from jax.experimental import pallas as pl
from jax.experimental.pallas import tpu as pltpu

# ----------------------------- model config ---------------------------------
VOCAB = 256
D_MODEL = 128
N_HEADS = 4
HEAD_DIM = D_MODEL // N_HEADS       # 32
D_FF = 256
N_LAYERS = 2
BS = 2                              # `bs` argument of forward()
PROMPT_LEN = 6
MAX_NEW = PROMPT_LEN + 50           # module: max_tokens = prompt_len + 50
SEQ_PAD = 64                        # KV-cache length (>= PROMPT_LEN + MAX_NEW)
EPS = 1e-5
TOP_P = 0.9
TEMPERATURE = 1.0
ATTN_SCALE = 1.0 / (HEAD_DIM ** 0.5)

assert PROMPT_LEN + MAX_NEW <= SEQ_PAD


# ------------------- fused single-token decode-step kernel -------------------
def _decode_step_kernel(pos_ref,                     # SMEM (1,) int32
                        x_ref,                       # [B, D]      f32
                        ln1_ref, wqkv_ref, wo_ref,   # [L,1,D] f32, [L,D,3D] bf16, [L,D,D] bf16
                        ln2_ref, wgu_ref, wdown_ref, # [L,1,D] f32, [L,D,2F] bf16, [L,F,D] bf16
                        lnf_ref, lmhead_ref,         # [1,D] f32, [D,V] bf16
                        kc_in_ref, vc_in_ref,        # [L,B,S,D] f32 (aliased)
                        logits_ref,                  # out [B,V] f32
                        kc_out_ref, vc_out_ref):     # out [L,B,S,D] f32 (aliased)
    pos = pos_ref[0]
    x = x_ref[...].astype(jnp.float32)                               # [B, D]

    col = jax.lax.broadcasted_iota(jnp.int32, (1, SEQ_PAD), 1)       # [1, S]
    row = jax.lax.broadcasted_iota(jnp.int32, (SEQ_PAD, 1), 0)       # [S, 1]
    keep = col <= pos                                                # causal mask
    row_is_pos = row == pos                                          # cache update mask

    def rmsnorm(v, w):                                   # fp32 math
        var = jnp.mean(v * v, axis=-1, keepdims=True)
        return v * jax.lax.rsqrt(var + EPS) * w

    def mm(a, w):                                        # bf16 MXU, fp32 accum
        return jnp.dot(a.astype(jnp.bfloat16), w,
                       preferred_element_type=jnp.float32)

    for l in range(N_LAYERS):
        # ------------------------- attention block --------------------------
        h1 = rmsnorm(x, ln1_ref[l])
        qkv = mm(h1, wqkv_ref[l])                                    # [B, 3D]
        q = qkv[:, :D_MODEL]
        k = qkv[:, D_MODEL:2 * D_MODEL]
        v = qkv[:, 2 * D_MODEL:]

        att_rows = []
        for b in range(BS):
            # merge new K/V row into the cache slab and write it back (aliased)
            k_full = jnp.where(row_is_pos, k[b:b + 1, :], kc_in_ref[l, b])  # [S, D]
            v_full = jnp.where(row_is_pos, v[b:b + 1, :], vc_in_ref[l, b])
            kc_out_ref[l, b] = k_full
            vc_out_ref[l, b] = v_full

            head_outs = []
            for hh in range(N_HEADS):
                lo = hh * HEAD_DIM
                hi = lo + HEAD_DIM
                qh = q[b:b + 1, lo:hi]                               # [1, hd]
                kh = k_full[:, lo:hi]                                # [S, hd]
                vh = v_full[:, lo:hi]                                # [S, hd]
                # q . k^T without an explicit transpose (contract last dims)
                s = jax.lax.dot_general(
                    qh, kh, (((1,), (1,)), ((), ())),
                    preferred_element_type=jnp.float32) * ATTN_SCALE  # [1, S]
                s = jnp.where(keep, s, -1e30)
                m = jnp.max(s, axis=-1, keepdims=True)
                p = jnp.exp(s - m)
                denom = jnp.sum(p, axis=-1, keepdims=True)
                p = p * pl.reciprocal(denom, approx=True)
                head_outs.append(
                    jnp.dot(p, vh, preferred_element_type=jnp.float32))  # [1, hd]
            att_rows.append(jnp.concatenate(head_outs, axis=-1))         # [1, D]
        att = jnp.concatenate(att_rows, axis=0)                           # [B, D]

        x = x + mm(att, wo_ref[l])

        # ------------------------- SwiGLU MLP block --------------------------
        h2 = rmsnorm(x, ln2_ref[l])
        gu = mm(h2, wgu_ref[l])                                      # [B, 2F]
        g = gu[:, :D_FF]
        u = gu[:, D_FF:]
        act = g * jax.lax.logistic(g) * u                            # fp32
        x = x + mm(act, wdown_ref[l])

    hf = rmsnorm(x, lnf_ref[...])
    logits_ref[...] = mm(hf, lmhead_ref[...])                        # [B, V]


def _build_decode_step():
    kv_struct = jax.ShapeDtypeStruct((N_LAYERS, BS, SEQ_PAD, D_MODEL), jnp.float32)
    vmem = pltpu.MemorySpace.VMEM
    smem = pltpu.MemorySpace.SMEM
    return pl.pallas_call(
        _decode_step_kernel,
        out_shape=(jax.ShapeDtypeStruct((BS, VOCAB), jnp.float32),  # logits
                   kv_struct,                                        # k cache
                   kv_struct),                                       # v cache
        in_specs=[pl.BlockSpec(memory_space=smem)] +                 # pos
                 [pl.BlockSpec(memory_space=vmem)] * 11,             # x, weights, caches
        out_specs=(pl.BlockSpec(memory_space=vmem),
                   pl.BlockSpec(memory_space=vmem),
                   pl.BlockSpec(memory_space=vmem)),
        # KV caches are updated in place (P8 KV-cache writeback pattern).
        input_output_aliases={10: 1, 11: 2},
    )


_decode_step = _build_decode_step()


def decode_step(params, x, k_cache, v_cache, pos):
    pos_arr = jnp.reshape(pos, (1,)).astype(jnp.int32)
    return _decode_step(pos_arr, x,
                        params["ln1"], params["wqkv"], params["wo"],
                        params["ln2"], params["wgu"], params["wdown"],
                        params["lnf"], params["lm_head"],
                        k_cache, v_cache)


# ----------------------------- parameters ------------------------------------
def init_params(key):
    def nrm(k, shape, dtype=jnp.bfloat16, scale=0.02):
        return (scale * jax.random.normal(k, shape, dtype=jnp.float32)).astype(dtype)

    keys = jax.random.split(key, 2 + N_LAYERS)
    wqkv, wo, wgu, wdown = [], [], [], []
    for l in range(N_LAYERS):
        lk = jax.random.split(keys[2 + l], 4)
        wqkv.append(nrm(lk[0], (D_MODEL, 3 * D_MODEL)))      # fused Wq|Wk|Wv
        wo.append(nrm(lk[1], (D_MODEL, D_MODEL)))
        wgu.append(nrm(lk[2], (D_MODEL, 2 * D_FF)))          # fused gate|up
        wdown.append(nrm(lk[3], (D_FF, D_MODEL)))
    return {
        "embed": nrm(keys[0], (VOCAB, D_MODEL), dtype=jnp.float32),
        "lm_head": nrm(keys[1], (D_MODEL, VOCAB)),
        "ln1": jnp.ones((N_LAYERS, 1, D_MODEL), jnp.float32),
        "ln2": jnp.ones((N_LAYERS, 1, D_MODEL), jnp.float32),
        "lnf": jnp.ones((1, D_MODEL), jnp.float32),
        "wqkv": jnp.stack(wqkv),
        "wo": jnp.stack(wo),
        "wgu": jnp.stack(wgu),
        "wdown": jnp.stack(wdown),
    }


# --------------------- HF-style temperature / top-p sampling -----------------
def sample_top_p(logits, key):
    """logits: [B, V]. do_sample=True, temperature=1.0, top_p=0.9,
    renormalize_logits=False (renormalization does not change the sample)."""
    logits = logits / TEMPERATURE
    sorted_idx = jnp.argsort(-logits, axis=-1)                       # descending
    sorted_logits = jnp.take_along_axis(logits, sorted_idx, axis=-1)
    probs = jax.nn.softmax(sorted_logits, axis=-1)
    cum = jnp.cumsum(probs, axis=-1)
    # remove tokens whose cumulative prob (excluding themselves) exceeds top_p;
    # the highest-prob token is always kept.
    remove = (cum - probs) > TOP_P
    filtered = jnp.where(remove, -jnp.inf, sorted_logits)
    choice = jax.random.categorical(key, filtered, axis=-1)          # [B]
    next_tok = jnp.take_along_axis(sorted_idx, choice[:, None], axis=-1)[:, 0]
    return next_tok.astype(jnp.int32)


# --------------------------------- generate -----------------------------------
@jax.jit
def generate(params, prompt_ids, key):
    """Mirrors Model.forward: repeat prompt to batch size, sample MAX_NEW tokens
    autoregressively (KV-cached, one fused kernel per position), return only
    the newly generated ids."""
    tokens = jnp.zeros((BS, SEQ_PAD), jnp.int32)
    tokens = tokens.at[:, :PROMPT_LEN].set(
        jnp.tile(prompt_ids[None, :], (BS, 1)))       # batch = v.repeat(bs, 1)
    k_cache = jnp.zeros((N_LAYERS, BS, SEQ_PAD, D_MODEL), jnp.float32)
    v_cache = jnp.zeros((N_LAYERS, BS, SEQ_PAD, D_MODEL), jnp.float32)

    # positions 0..PROMPT_LEN-2 are prefill-only; sampling starts at the last
    # prompt position and produces exactly MAX_NEW new tokens.
    total_steps = PROMPT_LEN - 1 + MAX_NEW

    def step(i, carry):
        toks, kc, vc, rng = carry
        cur = jax.lax.dynamic_slice_in_dim(toks, i, 1, axis=1)[:, 0]     # [B]
        x = jnp.take(params["embed"], cur, axis=0)                       # [B, D]
        logits, kc, vc = decode_step(params, x, kc, vc, i)               # fused kernel
        rng, sk = jax.random.split(rng)
        nxt = sample_top_p(logits, sk)                                   # [B]
        old_next = jax.lax.dynamic_slice_in_dim(toks, i + 1, 1, axis=1)[:, 0]
        new_next = jnp.where(i >= PROMPT_LEN - 1, nxt, old_next)         # keep prompt
        toks = jax.lax.dynamic_update_slice_in_dim(
            toks, new_next[:, None], i + 1, axis=1)
        return toks, kc, vc, rng

    tokens, _, _, _ = jax.lax.fori_loop(0, total_steps, step,
                                        (tokens, k_cache, v_cache, key))
    # generate_ids[:, num_input_ids:]
    return jax.lax.dynamic_slice_in_dim(tokens, PROMPT_LEN, MAX_NEW, axis=1)


# --------------------------------- main ---------------------------------------
if __name__ == "__main__":
    root = jax.random.PRNGKey(0)
    k_params, k_prompt, k_sample = jax.random.split(root, 3)

    params = init_params(k_params)
    # synthetic "tokenized prompt" (the tokenizer itself is untranslatable)
    prompt_ids = jax.random.randint(k_prompt, (PROMPT_LEN,), 0, VOCAB,
                                    dtype=jnp.int32)

    gen_ids = generate(params, prompt_ids, k_sample)
    gen_ids = jax.block_until_ready(gen_ids)

    assert gen_ids.shape == (BS, MAX_NEW)
    assert bool(jnp.all((gen_ids >= 0) & (gen_ids < VOCAB)))
    print("KERNEL_OK")
</pallas_src>

<mosaic_0001>
module attributes {stable_mosaic.version = 11 : i64} {
  func.func @_decode_step_kernel(%arg0: memref<1xi32, #tpu.memory_space<smem>>, %arg1: memref<2x128xf32, #tpu.memory_space<vmem>>, %arg2: memref<2x1x128xf32, #tpu.memory_space<vmem>>, %arg3: memref<2x128x384xbf16, #tpu.memory_space<vmem>>, %arg4: memref<2x128x128xbf16, #tpu.memory_space<vmem>>, %arg5: memref<2x1x128xf32, #tpu.memory_space<vmem>>, %arg6: memref<2x128x512xbf16, #tpu.memory_space<vmem>>, %arg7: memref<2x256x128xbf16, #tpu.memory_space<vmem>>, %arg8: memref<1x128xf32, #tpu.memory_space<vmem>>, %arg9: memref<128x256xbf16, #tpu.memory_space<vmem>>, %arg10: memref<2x2x64x128xf32, #tpu.memory_space<vmem>>, %arg11: memref<2x2x64x128xf32, #tpu.memory_space<vmem>>, %arg12: memref<2x256xf32, #tpu.memory_space<vmem>>, %arg13: memref<2x2x64x128xf32, #tpu.memory_space<vmem>>, %arg14: memref<2x2x64x128xf32, #tpu.memory_space<vmem>>) attributes {dimension_semantics = [], scalar_prefetch = 0 : i64, scratch_operands = 0 : i64, tpu.core_type = #tpu.core_type<tc>} {
    %c0 = arith.constant 0 : index
    %0 = memref.load %arg0[%c0] : memref<1xi32, #tpu.memory_space<smem>>
    %c0_0 = arith.constant 0 : index
    %c0_1 = arith.constant 0 : index
    %1 = vector.load %arg1[%c0_0, %c0_1] : memref<2x128xf32, #tpu.memory_space<vmem>>, vector<2x128xf32>
    %2 = tpu.iota {dimensions = array<i32: 1>} : vector<1x64xi32>
    %3 = tpu.iota {dimensions = array<i32: 0>} : vector<64x1xi32>
    %4 = vector.broadcast %0 : i32 to vector<1x64xi32>
    %5 = arith.cmpi sle, %2, %4 : vector<1x64xi32>
    %6 = vector.broadcast %0 : i32 to vector<64x1xi32>
    %7 = arith.cmpi eq, %3, %6 : vector<64x1xi32>
    %c0_2 = arith.constant 0 : index
    %c0_3 = arith.constant 0 : index
    %c0_4 = arith.constant 0 : index
    %8 = vector.load %arg2[%c0_2, %c0_3, %c0_4] : memref<2x1x128xf32, #tpu.memory_space<vmem>>, vector<1x1x128xf32>
    %9 = vector.shape_cast %8 : vector<1x1x128xf32> to vector<1x128xf32>
    %10 = arith.mulf %1, %1 : vector<2x128xf32>
    %cst = arith.constant dense<0.000000e+00> : vector<2xf32>
    %11 = vector.multi_reduction <add>, %10, %cst [1] : vector<2x128xf32> to vector<2xf32>
    %12 = vector.shape_cast %11 : vector<2xf32> to vector<2x1xf32>
    %cst_5 = arith.constant 1.280000e+02 : f32
    %13 = vector.broadcast %cst_5 : f32 to vector<2x1xf32>
    %14 = arith.divf %12, %13 : vector<2x1xf32>
    %cst_6 = arith.constant 9.99999974E-6 : f32
    %15 = vector.broadcast %cst_6 : f32 to vector<2x1xf32>
    %16 = arith.addf %14, %15 : vector<2x1xf32>
    %17 = math.rsqrt %16 : vector<2x1xf32>
    %18 = vector.broadcast %17 : vector<2x1xf32> to vector<2x128xf32>
    %19 = arith.mulf %1, %18 : vector<2x128xf32>
    %20 = vector.broadcast %9 : vector<1x128xf32> to vector<2x128xf32>
    %21 = arith.mulf %19, %20 : vector<2x128xf32>
    %c0_7 = arith.constant 0 : index
    %c0_8 = arith.constant 0 : index
    %c0_9 = arith.constant 0 : index
    %22 = vector.load %arg3[%c0_7, %c0_8, %c0_9] : memref<2x128x384xbf16, #tpu.memory_space<vmem>>, vector<1x128x384xbf16>
    %23 = vector.shape_cast %22 : vector<1x128x384xbf16> to vector<128x384xbf16>
    %24 = arith.truncf %21 : vector<2x128xf32> to vector<2x128xbf16>
    %cst_10 = arith.constant dense<0.000000e+00> : vector<2x384xf32>
    %25 = tpu.matmul %24, %23, %cst_10 {dimension_numbers = #tpu.dot_dimension_numbers<[1], [0], [0], [1], [0, 0, 1, 1], [], []>} : vector<2x128xbf16>, vector<128x384xbf16>, vector<2x384xf32> -> vector<2x384xf32>
    %26 = vector.extract_strided_slice %25 {offsets = [0, 0], sizes = [2, 128], strides = [1, 1]} : vector<2x384xf32> to vector<2x128xf32>
    %27 = vector.extract_strided_slice %25 {offsets = [0, 128], sizes = [2, 128], strides = [1, 1]} : vector<2x384xf32> to vector<2x128xf32>
    %28 = vector.extract_strided_slice %25 {offsets = [0, 256], sizes = [2, 128], strides = [1, 1]} : vector<2x384xf32> to vector<2x128xf32>
    %29 = vector.extract_strided_slice %27 {offsets = [0, 0], sizes = [1, 128], strides = [1, 1]} : vector<2x128xf32> to vector<1x128xf32>
    %c0_11 = arith.constant 0 : index
    %c0_12 = arith.constant 0 : index
    %c0_13 = arith.constant 0 : index
    %c0_14 = arith.constant 0 : index
    %30 = vector.load %arg10[%c0_11, %c0_12, %c0_13, %c0_14] : memref<2x2x64x128xf32, #tpu.memory_space<vmem>>, vector<1x1x64x128xf32>
    %31 = vector.shape_cast %30 : vector<1x1x64x128xf32> to vector<64x128xf32>
    %32 = vector.shape_cast %7 : vector<64x1xi1> to vector<64x1xi1>
    %33 = vector.broadcast %32 : vector<64x1xi1> to vector<64x128xi1>
    %34 = vector.shape_cast %29 : vector<1x128xf32> to vector<1x128xf32>
    %35 = vector.broadcast %34 : vector<1x128xf32> to vector<64x128xf32>
    %36 = arith.select %33, %35, %31 : vector<64x128xi1>, vector<64x128xf32>
    %37 = vector.extract_strided_slice %28 {offsets = [0, 0], sizes = [1, 128], strides = [1, 1]} : vector<2x128xf32> to vector<1x128xf32>
    %c0_15 = arith.constant 0 : index
    %c0_16 = arith.constant 0 : index
    %c0_17 = arith.constant 0 : index
    %c0_18 = arith.constant 0 : index
    %38 = vector.load %arg11[%c0_15, %c0_16, %c0_17, %c0_18] : memref<2x2x64x128xf32, #tpu.memory_space<vmem>>, vector<1x1x64x128xf32>
    %39 = vector.shape_cast %38 : vector<1x1x64x128xf32> to vector<64x128xf32>
    %40 = vector.shape_cast %7 : vector<64x1xi1> to vector<64x1xi1>
    %41 = vector.broadcast %40 : vector<64x1xi1> to vector<64x128xi1>
    %42 = vector.shape_cast %37 : vector<1x128xf32> to vector<1x128xf32>
    %43 = vector.broadcast %42 : vector<1x128xf32> to vector<64x128xf32>
    %44 = arith.select %41, %43, %39 : vector<64x128xi1>, vector<64x128xf32>
    %c0_19 = arith.constant 0 : index
    %c0_20 = arith.constant 0 : index
    %c0_21 = arith.constant 0 : index
    %c0_22 = arith.constant 0 : index
    %45 = vector.load %arg13[%c0_19, %c0_20, %c0_21, %c0_22] : memref<2x2x64x128xf32, #tpu.memory_space<vmem>>, vector<1x1x64x128xf32>
    %46 = vector.shape_cast %45 : vector<1x1x64x128xf32> to vector<64x128xf32>
    %47 = vector.shape_cast %36 : vector<64x128xf32> to vector<1x1x64x128xf32>
    tpu.vector_store %arg13[%c0_19, %c0_20, %c0_21, %c0_22], %47 {strides = array<i32>} : memref<2x2x64x128xf32, #tpu.memory_space<vmem>>, vector<1x1x64x128xf32>,
    %c0_23 = arith.constant 0 : index
    %c0_24 = arith.constant 0 : index
    %c0_25 = arith.constant 0 : index
    %c0_26 = arith.constant 0 : index
    %48 = vector.load %arg14[%c0_23, %c0_24, %c0_25, %c0_26] : memref<2x2x64x128xf32, #tpu.memory_space<vmem>>, vector<1x1x64x128xf32>
    %49 = vector.shape_cast %48 : vector<1x1x64x128xf32> to vector<64x128xf32>
    %50 = vector.shape_cast %44 : vector<64x128xf32> to vector<1x1x64x128xf32>
    tpu.vector_store %arg14[%c0_23, %c0_24, %c0_25, %c0_26], %50 {strides = array<i32>} : memref<2x2x64x128xf32, #tpu.memory_space<vmem>>, vector<1x1x64x128xf32>,
    %51 = vector.extract_strided_slice %26 {offsets = [0, 0], sizes = [1, 32], strides = [1, 1]} : vector<2x128xf32> to vector<1x32xf32>
    %52 = vector.extract_strided_slice %36 {offsets = [0, 0], sizes = [64, 32], strides = [1, 1]} : vector<64x128xf32> to vector<64x32xf32>
    %53 = vector.extract_strided_slice %44 {offsets = [0, 0], sizes = [64, 32], strides = [1, 1]} : vector<64x128xf32> to vector<64x32xf32>
    %cst_27 = arith.constant dense<0.000000e+00> : vector<1x64xf32>
    %54 = tpu.matmul %51, %52, %cst_27 {dimension_numbers = #tpu.dot_dimension_numbers<[1], [1], [0], [0], [0, 0, 1, 0], [], []>} : vector<1x32xf32>, vector<64x32xf32>, vector<1x64xf32> -> vector<1x64xf32>
    %cst_28 = arith.constant 0.176776692 : f32
    %55 = vector.broadcast %cst_28 : f32 to vector<1x64xf32>
    %56 = arith.mulf %54, %55 : vector<1x64xf32>
    %cst_29 = arith.constant -1.000000e+30 : f32
    %57 = vector.broadcast %cst_29 : f32 to vector<1x64xf32>
    %58 = arith.select %5, %56, %57 : vector<1x64xi1>, vector<1x64xf32>
    %cst_30 = arith.constant dense<0xFF800000> : vector<1xf32>
    %59 = vector.multi_reduction <maximumf>, %58, %cst_30 [1] : vector<1x64xf32> to vector<1xf32>
    %60 = vector.shape_cast %59 : vector<1xf32> to vector<1x1xf32>
    %61 = vector.broadcast %60 : vector<1x1xf32> to vector<1x64xf32>
    %62 = arith.subf %58, %61 : vector<1x64xf32>
    %63 = math.exp %62 : vector<1x64xf32>
    %cst_31 = arith.constant dense<0.000000e+00> : vector<1xf32>
    %64 = vector.multi_reduction <add>, %63, %cst_31 [1] : vector<1x64xf32> to vector<1xf32>
    %65 = vector.shape_cast %64 : vector<1xf32> to vector<1x1xf32>
    %66 = tpu.reciprocal %65 {approx = true} : vector<1x1xf32> -> vector<1x1xf32>
    %67 = vector.broadcast %66 : vector<1x1xf32> to vector<1x64xf32>
    %68 = arith.mulf %63, %67 : vector<1x64xf32>
    %cst_32 = arith.constant dense<0.000000e+00> : vector<1x32xf32>
    %69 = tpu.matmul %68, %53, %cst_32 {dimension_numbers = #tpu.dot_dimension_numbers<[1], [0], [0], [1], [0, 0, 1, 1], [], []>} : vector<1x64xf32>, vector<64x32xf32>, vector<1x32xf32> -> vector<1x32xf32>
    %70 = vector.extract_strided_slice %26 {offsets = [0, 32], sizes = [1, 32], strides = [1, 1]} : vector<2x128xf32> to vector<1x32xf32>
    %71 = vector.extract_strided_slice %36 {offsets = [0, 32], sizes = [64, 32], strides = [1, 1]} : vector<64x128xf32> to vector<64x32xf32>
    %72 = vector.extract_strided_slice %44 {offsets = [0, 32], sizes = [64, 32], strides = [1, 1]} : vector<64x128xf32> to vector<64x32xf32>
    %cst_33 = arith.constant dense<0.000000e+00> : vector<1x64xf32>
    %73 = tpu.matmul %70, %71, %cst_33 {dimension_numbers = #tpu.dot_dimension_numbers<[1], [1], [0], [0], [0, 0, 1, 0], [], []>} : vector<1x32xf32>, vector<64x32xf32>, vector<1x64xf32> -> vector<1x64xf32>
    %cst_34 = arith.constant 0.176776692 : f32
    %74 = vector.broadcast %cst_34 : f32 to vector<1x64xf32>
    %75 = arith.mulf %73, %74 : vector<1x64xf32>
    %cst_35 = arith.constant -1.000000e+30 : f32
    %76 = vector.broadcast %cst_35 : f32 to vector<1x64xf32>
    %77 = arith.select %5, %75, %76 : vector<1x64xi1>, vector<1x64xf32>
    %cst_36 = arith.constant dense<0xFF800000> : vector<1xf32>
    %78 = vector.multi_reduction <maximumf>, %77, %cst_36 [1] : vector<1x64xf32> to vector<1xf32>
    %79 = vector.shape_cast %78 : vector<1xf32> to vector<1x1xf32>
    %80 = vector.broadcast %79 : vector<1x1xf32> to vector<1x64xf32>
    %81 = arith.subf %77, %80 : vector<1x64xf32>
    %82 = math.exp %81 : vector<1x64xf32>
    %cst_37 = arith.constant dense<0.000000e+00> : vector<1xf32>
    %83 = vector.multi_reduction <add>, %82, %cst_37 [1] : vector<1x64xf32> to vector<1xf32>
    %84 = vector.shape_cast %83 : vector<1xf32> to vector<1x1xf32>
    %85 = tpu.reciprocal %84 {approx = true} : vector<1x1xf32> -> vector<1x1xf32>
    %86 = vector.broadcast %85 : vector<1x1xf32> to vector<1x64xf32>
    %87 = arith.mulf %82, %86 : vector<1x64xf32>
    %cst_38 = arith.constant dense<0.000000e+00> : vector<1x32xf32>
    %88 = tpu.matmul %87, %72, %cst_38 {dimension_numbers = #tpu.dot_dimension_numbers<[1], [0], [0], [1], [0, 0, 1, 1], [], []>} : vector<1x64xf32>, vector<64x32xf32>, vector<1x32xf32> -> vector<1x32xf32>
    %89 = vector.extract_strided_slice %26 {offsets = [0, 64], sizes = [1, 32], strides = [1, 1]} : vector<2x128xf32> to vector<1x32xf32>
    %90 = vector.extract_strided_slice %36 {offsets = [0, 64], sizes = [64, 32], strides = [1, 1]} : vector<64x128xf32> to vector<64x32xf32>
    %91 = vector.extract_strided_slice %44 {offsets = [0, 64], sizes = [64, 32], strides = [1, 1]} : vector<64x128xf32> to vector<64x32xf32>
    %cst_39 = arith.constant dense<0.000000e+00> : vector<1x64xf32>
    %92 = tpu.matmul %89, %90, %cst_39 {dimension_numbers = #tpu.dot_dimension_numbers<[1], [1], [0], [0], [0, 0, 1, 0], [], []>} : vector<1x32xf32>, vector<64x32xf32>, vector<1x64xf32> -> vector<1x64xf32>
    %cst_40 = arith.constant 0.176776692 : f32
    %93 = vector.broadcast %cst_40 : f32 to vector<1x64xf32>
    %94 = arith.mulf %92, %93 : vector<1x64xf32>
    %cst_41 = arith.constant -1.000000e+30 : f32
    %95 = vector.broadcast %cst_41 : f32 to vector<1x64xf32>
    %96 = arith.select %5, %94, %95 : vector<1x64xi1>, vector<1x64xf32>
    %cst_42 = arith.constant dense<0xFF800000> : vector<1xf32>
    %97 = vector.multi_reduction <maximumf>, %96, %cst_42 [1] : vector<1x64xf32> to vector<1xf32>
    %98 = vector.shape_cast %97 : vector<1xf32> to vector<1x1xf32>
    %99 = vector.broadcast %98 : vector<1x1xf32> to vector<1x64xf32>
    %100 = arith.subf %96, %99 : vector<1x64xf32>
    %101 = math.exp %100 : vector<1x64xf32>
    %cst_43 = arith.constant dense<0.000000e+00> : vector<1xf32>
    %102 = vector.multi_reduction <add>, %101, %cst_43 [1] : vector<1x64xf32> to vector<1xf32>
    %103 = vector.shape_cast %102 : vector<1xf32> to vector<1x1xf32>
    %104 = tpu.reciprocal %103 {approx = true} : vector<1x1xf32> -> vector<1x1xf32>
    %105 = vector.broadcast %104 : vector<1x1xf32> to vector<1x64xf32>
    %106 = arith.mulf %101, %105 : vector<1x64xf32>
    %cst_44 = arith.constant dense<0.000000e+00> : vector<1x32xf32>
    %107 = tpu.matmul %106, %91, %cst_44 {dimension_numbers = #tpu.dot_dimension_numbers<[1], [0], [0], [1], [0, 0, 1, 1], [], []>} : vector<1x64xf32>, vector<64x32xf32>, vector<1x32xf32> -> vector<1x32xf32>
    %108 = vector.extract_strided_slice %26 {offsets = [0, 96], sizes = [1, 32], strides = [1, 1]} : vector<2x128xf32> to vector<1x32xf32>
    %109 = vector.extract_strided_slice %36 {offsets = [0, 96], sizes = [64, 32], strides = [1, 1]} : vector<64x128xf32> to vector<64x32xf32>
    %110 = vector.extract_strided_slice %44 {offsets = [0, 96], sizes = [64, 32], strides = [1, 1]} : vector<64x128xf32> to vector<64x32xf32>
    %cst_45 = arith.constant dense<0.000000e+00> : vector<1x64xf32>
    %111 = tpu.matmul %108, %109, %cst_45 {dimension_numbers = #tpu.dot_dimension_numbers<[1], [1], [0], [0], [0, 0, 1, 0], [], []>} : vector<1x32xf32>, vector<64x32xf32>, vector<1x64xf32> -> vector<1x64xf32>
    %cst_46 = arith.constant 0.176776692 : f32
    %112 = vector.broadcast %cst_46 : f32 to vector<1x64xf32>
    %113 = arith.mulf %111, %112 : vector<1x64xf32>
    %cst_47 = arith.constant -1.000000e+30 : f32
    %114 = vector.broadcast %cst_47 : f32 to vector<1x64xf32>
    %115 = arith.select %5, %113, %114 : vector<1x64xi1>, vector<1x64xf32>
    %cst_48 = arith.constant dense<0xFF800000> : vector<1xf32>
    %116 = vector.multi_reduction <maximumf>, %115, %cst_48 [1] : vector<1x64xf32> to vector<1xf32>
    %117 = vector.shape_cast %116 : vector<1xf32> to vector<1x1xf32>
    %118 = vector.broadcast %117 : vector<1x1xf32> to vector<1x64xf32>
    %119 = arith.subf %115, %118 : vector<1x64xf32>
    %120 = math.exp %119 : vector<1x64xf32>
    %cst_49 = arith.constant dense<0.000000e+00> : vector<1xf32>
    %121 = vector.multi_reduction <add>, %120, %cst_49 [1] : vector<1x64xf32> to vector<1xf32>
    %122 = vector.shape_cast %121 : vector<1xf32> to vector<1x1xf32>
    %123 = tpu.reciprocal %122 {approx = true} : vector<1x1xf32> -> vector<1x1xf32>
    %124 = vector.broadcast %123 : vector<1x1xf32> to vector<1x64xf32>
    %125 = arith.mulf %120, %124 : vector<1x64xf32>
    %cst_50 = arith.constant dense<0.000000e+00> : vector<1x32xf32>
    %126 = tpu.matmul %125, %110, %cst_50 {dimension_numbers = #tpu.dot_dimension_numbers<[1], [0], [0], [1], [0, 0, 1, 1], [], []>} : vector<1x64xf32>, vector<64x32xf32>, vector<1x32xf32> -> vector<1x32xf32>
    %127 = tpu.concatenate %69, %88, %107, %126 in 1 : vector<1x32xf32>, vector<1x32xf32>, vector<1x32xf32>, vector<1x32xf32> -> vector<1x128xf32>
    %128 = vector.extract_strided_slice %27 {offsets = [1, 0], sizes = [1, 128], strides = [1, 1]} : vector<2x128xf32> to vector<1x128xf32>
    %c0_51 = arith.constant 0 : index
    %c1 = arith.constant 1 : index
    %c0_52 = arith.constant 0 : index
    %c0_53 = arith.constant 0 : index
    %129 = vector.load %arg10[%c0_51, %c1, %c0_52, %c0_53] : memref<2x2x64x128xf32, #tpu.memory_space<vmem>>, vector<1x1x64x128xf32>
    %130 = vector.shape_cast %129 : vector<1x1x64x128xf32> to vector<64x128xf32>
    %131 = vector.shape_cast %7 : vector<64x1xi1> to vector<64x1xi1>
    %132 = vector.broadcast %131 : vector<64x1xi1> to vector<64x128xi1>
    %133 = vector.shape_cast %128 : vector<1x128xf32> to vector<1x128xf32>
    %134 = vector.broadcast %133 : vector<1x128xf32> to vector<64x128xf32>
    %135 = arith.select %132, %134, %130 : vector<64x128xi1>, vector<64x128xf32>
    %136 = vector.extract_strided_slice %28 {offsets = [1, 0], sizes = [1, 128], strides = [1, 1]} : vector<2x128xf32> to vector<1x128xf32>
    %c0_54 = arith.constant 0 : index
    %c1_55 = arith.constant 1 : index
    %c0_56 = arith.constant 0 : index
    %c0_57 = arith.constant 0 : index
    %137 = vector.load %arg11[%c0_54, %c1_55, %c0_56, %c0_57] : memref<2x2x64x128xf32, #tpu.memory_space<vmem>>, vector<1x1x64x128xf32>
    %138 = vector.shape_cast %137 : vector<1x1x64x128xf32> to vector<64x128xf32>
    %139 = vector.shape_cast %7 : vector<64x1xi1> to vector<64x1xi1>
    %140 = vector.broadcast %139 : vector<64x1xi1> to vector<64x128xi1>
    %141 = vector.shape_cast %136 : vector<1x128xf32> to vector<1x128xf32>
    %142 = vector.broadcast %141 : vector<1x128xf32> to vector<64x128xf32>
    %143 = arith.select %140, %142, %138 : vector<64x128xi1>, vector<64x128xf32>
    %c0_58 = arith.constant 0 : index
    %c1_59 = arith.constant 1 : index
    %c0_60 = arith.constant 0 : index
    %c0_61 = arith.constant 0 : index
    %144 = vector.load %arg13[%c0_58, %c1_59, %c0_60, %c0_61] : memref<2x2x64x128xf32, #tpu.memory_space<vmem>>, vector<1x1x64x128xf32>
    %145 = vector.shape_cast %144 : vector<1x1x64x128xf32> to vector<64x128xf32>
    %146 = vector.shape_cast %135 : vector<64x128xf32> to vector<1x1x64x128xf32>
    tpu.vector_store %arg13[%c0_58, %c1_59, %c0_60, %c0_61], %146 {strides = array<i32>} : memref<2x2x64x128xf32, #tpu.memory_space<vmem>>, vector<1x1x64x128xf32>,
    %c0_62 = arith.constant 0 : index
    %c1_63 = arith.constant 1 : index
    %c0_64 = arith.constant 0 : index
    %c0_65 = arith.constant 0 : index
    %147 = vector.load %arg14[%c0_62, %c1_63, %c0_64, %c0_65] : memref<2x2x64x128xf32, #tpu.memory_space<vmem>>, vector<1x1x64x128xf32>
    %148 = vector.shape_cast %147 : vector<1x1x64x128xf32> to vector<64x128xf32>
    %149 = vector.shape_cast %143 : vector<64x128xf32> to vector<1x1x64x128xf32>
    tpu.vector_store %arg14[%c0_62, %c1_63, %c0_64, %c0_65], %149 {strides = array<i32>} : memref<2x2x64x128xf32, #tpu.memory_space<vmem>>, vector<1x1x64x128xf32>,
    %150 = vector.extract_strided_slice %26 {offsets = [1, 0], sizes = [1, 32], strides = [1, 1]} : vector<2x128xf32> to vector<1x32xf32>
    %151 = vector.extract_strided_slice %135 {offsets = [0, 0], sizes = [64, 32], strides = [1, 1]} : vector<64x128xf32> to vector<64x32xf32>
    %152 = vector.extract_strided_slice %143 {offsets = [0, 0], sizes = [64, 32], strides = [1, 1]} : vector<64x128xf32> to vector<64x32xf32>
    %cst_66 = arith.constant dense<0.000000e+00> : vector<1x64xf32>
    %153 = tpu.matmul %150, %151, %cst_66 {dimension_numbers = #tpu.dot_dimension_numbers<[1], [1], [0], [0], [0, 0, 1, 0], [], []>} : vector<1x32xf32>, vector<64x32xf32>, vector<1x64xf32> -> vector<1x64xf32>
    %cst_67 = arith.constant 0.176776692 : f32
    %154 = vector.broadcast %cst_67 : f32 to vector<1x64xf32>
    %155 = arith.mulf %153, %154 : vector<1x64xf32>
    %cst_68 = arith.constant -1.000000e+30 : f32
    %156 = vector.broadcast %cst_68 : f32 to vector<1x64xf32>
    %157 = arith.select %5, %155, %156 : vector<1x64xi1>, vector<1x64xf32>
    %cst_69 = arith.constant dense<0xFF800000> : vector<1xf32>
    %158 = vector.multi_reduction <maximumf>, %157, %cst_69 [1] : vector<1x64xf32> to vector<1xf32>
    %159 = vector.shape_cast %158 : vector<1xf32> to vector<1x1xf32>
    %160 = vector.broadcast %159 : vector<1x1xf32> to vector<1x64xf32>
    %161 = arith.subf %157, %160 : vector<1x64xf32>
    %162 = math.exp %161 : vector<1x64xf32>
    %cst_70 = arith.constant dense<0.000000e+00> : vector<1xf32>
    %163 = vector.multi_reduction <add>, %162, %cst_70 [1] : vector<1x64xf32> to vector<1xf32>
    %164 = vector.shape_cast %163 : vector<1xf32> to vector<1x1xf32>
    %165 = tpu.reciprocal %164 {approx = true} : vector<1x1xf32> -> vector<1x1xf32>
    %166 = vector.broadcast %165 : vector<1x1xf32> to vector<1x64xf32>
    %167 = arith.mulf %162, %166 : vector<1x64xf32>
    %cst_71 = arith.constant dense<0.000000e+00> : vector<1x32xf32>
    %168 = tpu.matmul %167, %152, %cst_71 {dimension_numbers = #tpu.dot_dimension_numbers<[1], [0], [0], [1], [0, 0, 1, 1], [], []>} : vector<1x64xf32>, vector<64x32xf32>, vector<1x32xf32> -> vector<1x32xf32>
    %169 = vector.extract_strided_slice %26 {offsets = [1, 32], sizes = [1, 32], strides = [1, 1]} : vector<2x128xf32> to vector<1x32xf32>
    %170 = vector.extract_strided_slice %135 {offsets = [0, 32], sizes = [64, 32], strides = [1, 1]} : vector<64x128xf32> to vector<64x32xf32>
    %171 = vector.extract_strided_slice %143 {offsets = [0, 32], sizes = [64, 32], strides = [1, 1]} : vector<64x128xf32> to vector<64x32xf32>
    %cst_72 = arith.constant dense<0.000000e+00> : vector<1x64xf32>
    %172 = tpu.matmul %169, %170, %cst_72 {dimension_numbers = #tpu.dot_dimension_numbers<[1], [1], [0], [0], [0, 0, 1, 0], [], []>} : vector<1x32xf32>, vector<64x32xf32>, vector<1x64xf32> -> vector<1x64xf32>
    %cst_73 = arith.constant 0.176776692 : f32
    %173 = vector.broadcast %cst_73 : f32 to vector<1x64xf32>
    %174 = arith.mulf %172, %173 : vector<1x64xf32>
    %cst_74 = arith.constant -1.000000e+30 : f32
    %175 = vector.broadcast %cst_74 : f32 to vector<1x64xf32>
    %176 = arith.select %5, %174, %175 : vector<1x64xi1>, vector<1x64xf32>
    %cst_75 = arith.constant dense<0xFF800000> : vector<1xf32>
    %177 = vector.multi_reduction <maximumf>, %176, %cst_75 [1] : vector<1x64xf32> to vector<1xf32>
    %178 = vector.shape_cast %177 : vector<1xf32> to vector<1x1xf32>
    %179 = vector.broadcast %178 : vector<1x1xf32> to vector<1x64xf32>
    %180 = arith.subf %176, %179 : vector<1x64xf32>
    %181 = math.exp %180 : vector<1x64xf32>
    %cst_76 = arith.constant dense<0.000000e+00> : vector<1xf32>
    %182 = vector.multi_reduction <add>, %181, %cst_76 [1] : vector<1x64xf32> to vector<1xf32>
    %183 = vector.shape_cast %182 : vector<1xf32> to vector<1x1xf32>
    %184 = tpu.reciprocal %183 {approx = true} : vector<1x1xf32> -> vector<1x1xf32>
    %185 = vector.broadcast %184 : vector<1x1xf32> to vector<1x64xf32>
    %186 = arith.mulf %181, %185 : vector<1x64xf32>
    %cst_77 = arith.constant dense<0.000000e+00> : vector<1x32xf32>
    %187 = tpu.matmul %186, %171, %cst_77 {dimension_numbers = #tpu.dot_dimension_numbers<[1], [0], [0], [1], [0, 0, 1, 1], [], []>} : vector<1x64xf32>, vector<64x32xf32>, vector<1x32xf32> -> vector<1x32xf32>
    %188 = vector.extract_strided_slice %26 {offsets = [1, 64], sizes = [1, 32], strides = [1, 1]} : vector<2x128xf32> to vector<1x32xf32>
    %189 = vector.extract_strided_slice %135 {offsets = [0, 64], sizes = [64, 32], strides = [1, 1]} : vector<64x128xf32> to vector<64x32xf32>
    %190 = vector.extract_strided_slice %143 {offsets = [0, 64], sizes = [64, 32], strides = [1, 1]} : vector<64x128xf32> to vector<64x32xf32>
    %cst_78 = arith.constant dense<0.000000e+00> : vector<1x64xf32>
    %191 = tpu.matmul %188, %189, %cst_78 {dimension_numbers = #tpu.dot_dimension_numbers<[1], [1], [0], [0], [0, 0, 1, 0], [], []>} : vector<1x32xf32>, vector<64x32xf32>, vector<1x64xf32> -> vector<1x64xf32>
    %cst_79 = arith.constant 0.176776692 : f32
    %192 = vector.broadcast %cst_79 : f32 to vector<1x64xf32>
    %193 = arith.mulf %191, %192 : vector<1x64xf32>
    %cst_80 = arith.constant -1.000000e+30 : f32
    %194 = vector.broadcast %cst_80 : f32 to vector<1x64xf32>
    %195 = arith.select %5, %193, %194 : vector<1x64xi1>, vector<1x64xf32>
    %cst_81 = arith.constant dense<0xFF800000> : vector<1xf32>
    %196 = vector.multi_reduction <maximumf>, %195, %cst_81 [1] : vector<1x64xf32> to vector<1xf32>
    %197 = vector.shape_cast %196 : vector<1xf32> to vector<1x1xf32>
    %198 = vector.broadcast %197 : vector<1x1xf32> to vector<1x64xf32>
    %199 = arith.subf %195, %198 : vector<1x64xf32>
    %200 = math.exp %199 : vector<1x64xf32>
    %cst_82 = arith.constant dense<0.000000e+00> : vector<1xf32>
    %201 = vector.multi_reduction <add>, %200, %cst_82 [1] : vector<1x64xf32> to vector<1xf32>
    %202 = vector.shape_cast %201 : vector<1xf32> to vector<1x1xf32>
    %203 = tpu.reciprocal %202 {approx = true} : vector<1x1xf32> -> vector<1x1xf32>
    %204 = vector.broadcast %203 : vector<1x1xf32> to vector<1x64xf32>
    %205 = arith.mulf %200, %204 : vector<1x64xf32>
    %cst_83 = arith.constant dense<0.000000e+00> : vector<1x32xf32>
    %206 = tpu.matmul %205, %190, %cst_83 {dimension_numbers = #tpu.dot_dimension_numbers<[1], [0], [0], [1], [0, 0, 1, 1], [], []>} : vector<1x64xf32>, vector<64x32xf32>, vector<1x32xf32> -> vector<1x32xf32>
    %207 = vector.extract_strided_slice %26 {offsets = [1, 96], sizes = [1, 32], strides = [1, 1]} : vector<2x128xf32> to vector<1x32xf32>
    %208 = vector.extract_strided_slice %135 {offsets = [0, 96], sizes = [64, 32], strides = [1, 1]} : vector<64x128xf32> to vector<64x32xf32>
    %209 = vector.extract_strided_slice %143 {offsets = [0, 96], sizes = [64, 32], strides = [1, 1]} : vector<64x128xf32> to vector<64x32xf32>
    %cst_84 = arith.constant dense<0.000000e+00> : vector<1x64xf32>
    %210 = tpu.matmul %207, %208, %cst_84 {dimension_numbers = #tpu.dot_dimension_numbers<[1], [1], [0], [0], [0, 0, 1, 0], [], []>} : vector<1x32xf32>, vector<64x32xf32>, vector<1x64xf32> -> vector<1x64xf32>
    %cst_85 = arith.constant 0.176776692 : f32
    %211 = vector.broadcast %cst_85 : f32 to vector<1x64xf32>
    %212 = arith.mulf %210, %211 : vector<1x64xf32>
    %cst_86 = arith.constant -1.000000e+30 : f32
    %213 = vector.broadcast %cst_86 : f32 to vector<1x64xf32>
    %214 = arith.select %5, %212, %213 : vector<1x64xi1>, vector<1x64xf32>
    %cst_87 = arith.constant dense<0xFF800000> : vector<1xf32>
    %215 = vector.multi_reduction <maximumf>, %214, %cst_87 [1] : vector<1x64xf32> to vector<1xf32>
    %216 = vector.shape_cast %215 : vector<1xf32> to vector<1x1xf32>
    %217 = vector.broadcast %216 : vector<1x1xf32> to vector<1x64xf32>
    %218 = arith.subf %214, %217 : vector<1x64xf32>
    %219 = math.exp %218 : vector<1x64xf32>
    %cst_88 = arith.constant dense<0.000000e+00> : vector<1xf32>
    %220 = vector.multi_reduction <add>, %219, %cst_88 [1] : vector<1x64xf32> to vector<1xf32>
    %221 = vector.shape_cast %220 : vector<1xf32> to vector<1x1xf32>
    %222 = tpu.reciprocal %221 {approx = true} : vector<1x1xf32> -> vector<1x1xf32>
    %223 = vector.broadcast %222 : vector<1x1xf32> to vector<1x64xf32>
    %224 = arith.mulf %219, %223 : vector<1x64xf32>
    %cst_89 = arith.constant dense<0.000000e+00> : vector<1x32xf32>
    %225 = tpu.matmul %224, %209, %cst_89 {dimension_numbers = #tpu.dot_dimension_numbers<[1], [0], [0], [1], [0, 0, 1, 1], [], []>} : vector<1x64xf32>, vector<64x32xf32>, vector<1x32xf32> -> vector<1x32xf32>
    %226 = tpu.concatenate %168, %187, %206, %225 in 1 : vector<1x32xf32>, vector<1x32xf32>, vector<1x32xf32>, vector<1x32xf32> -> vector<1x128xf32>
    %227 = tpu.concatenate %127, %226 in 0 : vector<1x128xf32>, vector<1x128xf32> -> vector<2x128xf32>
    %c0_90 = arith.constant 0 : index
    %c0_91 = arith.constant 0 : index
    %c0_92 = arith.constant 0 : index
    %228 = vector.load %arg4[%c0_90, %c0_91, %c0_92] : memref<2x128x128xbf16, #tpu.memory_space<vmem>>, vector<1x128x128xbf16>
    %229 = vector.shape_cast %228 : vector<1x128x128xbf16> to vector<128x128xbf16>
    %230 = arith.truncf %227 : vector<2x128xf32> to vector<2x128xbf16>
    %cst_93 = arith.constant dense<0.000000e+00> : vector<2x128xf32>
    %231 = tpu.matmul %230, %229, %cst_93 {dimension_numbers = #tpu.dot_dimension_numbers<[1], [0], [0], [1], [0, 0, 1, 1], [], []>} : vector<2x128xbf16>, vector<128x128xbf16>, vector<2x128xf32> -> vector<2x128xf32>
    %232 = arith.addf %1, %231 : vector<2x128xf32>
    %c0_94 = arith.constant 0 : index
    %c0_95 = arith.constant 0 : index
    %c0_96 = arith.constant 0 : index
    %233 = vector.load %arg5[%c0_94, %c0_95, %c0_96] : memref<2x1x128xf32, #tpu.memory_space<vmem>>, vector<1x1x128xf32>
    %234 = vector.shape_cast %233 : vector<1x1x128xf32> to vector<1x128xf32>
    %235 = arith.mulf %232, %232 : vector<2x128xf32>
    %cst_97 = arith.constant dense<0.000000e+00> : vector<2xf32>
    %236 = vector.multi_reduction <add>, %235, %cst_97 [1] : vector<2x128xf32> to vector<2xf32>
    %237 = vector.shape_cast %236 : vector<2xf32> to vector<2x1xf32>
    %cst_98 = arith.constant 1.280000e+02 : f32
    %238 = vector.broadcast %cst_98 : f32 to vector<2x1xf32>
    %239 = arith.divf %237, %238 : vector<2x1xf32>
    %cst_99 = arith.constant 9.99999974E-6 : f32
    %240 = vector.broadcast %cst_99 : f32 to vector<2x1xf32>
    %241 = arith.addf %239, %240 : vector<2x1xf32>
    %242 = math.rsqrt %241 : vector<2x1xf32>
    %243 = vector.broadcast %242 : vector<2x1xf32> to vector<2x128xf32>
    %244 = arith.mulf %232, %243 : vector<2x128xf32>
    %245 = vector.broadcast %234 : vector<1x128xf32> to vector<2x128xf32>
    %246 = arith.mulf %244, %245 : vector<2x128xf32>
    %c0_100 = arith.constant 0 : index
    %c0_101 = arith.constant 0 : index
    %c0_102 = arith.constant 0 : index
    %247 = vector.load %arg6[%c0_100, %c0_101, %c0_102] : memref<2x128x512xbf16, #tpu.memory_space<vmem>>, vector<1x128x512xbf16>
    %248 = vector.shape_cast %247 : vector<1x128x512xbf16> to vector<128x512xbf16>
    %249 = arith.truncf %246 : vector<2x128xf32> to vector<2x128xbf16>
    %cst_103 = arith.constant dense<0.000000e+00> : vector<2x512xf32>
    %250 = tpu.matmul %249, %248, %cst_103 {dimension_numbers = #tpu.dot_dimension_numbers<[1], [0], [0], [1], [0, 0, 1, 1], [], []>} : vector<2x128xbf16>, vector<128x512xbf16>, vector<2x512xf32> -> vector<2x512xf32>
    %251 = vector.extract_strided_slice %250 {offsets = [0, 0], sizes = [2, 256], strides = [1, 1]} : vector<2x512xf32> to vector<2x256xf32>
    %252 = vector.extract_strided_slice %250 {offsets = [0, 256], sizes = [2, 256], strides = [1, 1]} : vector<2x512xf32> to vector<2x256xf32>
    %253 = arith.negf %251 : vector<2x256xf32>
    %254 = math.exp %253 : vector<2x256xf32>
    %cst_104 = arith.constant 1.000000e+00 : f32
    %255 = vector.broadcast %cst_104 : f32 to vector<2x256xf32>
    %256 = arith.addf %255, %254 : vector<2x256xf32>
    %257 = arith.divf %255, %256 : vector<2x256xf32>
    %258 = arith.mulf %251, %257 : vector<2x256xf32>
    %259 = arith.mulf %258, %252 : vector<2x256xf32>
    %c0_105 = arith.constant 0 : index
    %c0_106 = arith.constant 0 : index
    %c0_107 = arith.constant 0 : index
    %260 = vector.load %arg7[%c0_105, %c0_106, %c0_107] : memref<2x256x128xbf16, #tpu.memory_space<vmem>>, vector<1x256x128xbf16>
    %261 = vector.shape_cast %260 : vector<1x256x128xbf16> to vector<256x128xbf16>
    %262 = arith.truncf %259 : vector<2x256xf32> to vector<2x256xbf16>
    %cst_108 = arith.constant dense<0.000000e+00> : vector<2x128xf32>
    %263 = tpu.matmul %262, %261, %cst_108 {dimension_numbers = #tpu.dot_dimension_numbers<[1], [0], [0], [1], [0, 0, 1, 1], [], []>} : vector<2x256xbf16>, vector<256x128xbf16>, vector<2x128xf32> -> vector<2x128xf32>
    %264 = arith.addf %232, %263 : vector<2x128xf32>
    %c1_109 = arith.constant 1 : index
    %c0_110 = arith.constant 0 : index
    %c0_111 = arith.constant 0 : index
    %265 = vector.load %arg2[%c1_109, %c0_110, %c0_111] : memref<2x1x128xf32, #tpu.memory_space<vmem>>, vector<1x1x128xf32>
    %266 = vector.shape_cast %265 : vector<1x1x128xf32> to vector<1x128xf32>
    %267 = arith.mulf %264, %264 : vector<2x128xf32>
    %cst_112 = arith.constant dense<0.000000e+00> : vector<2xf32>
    %268 = vector.multi_reduction <add>, %267, %cst_112 [1] : vector<2x128xf32> to vector<2xf32>
    %269 = vector.shape_cast %268 : vector<2xf32> to vector<2x1xf32>
    %cst_113 = arith.constant 1.280000e+02 : f32
    %270 = vector.broadcast %cst_113 : f32 to vector<2x1xf32>
    %271 = arith.divf %269, %270 : vector<2x1xf32>
    %cst_114 = arith.constant 9.99999974E-6 : f32
    %272 = vector.broadcast %cst_114 : f32 to vector<2x1xf32>
    %273 = arith.addf %271, %272 : vector<2x1xf32>
    %274 = math.rsqrt %273 : vector<2x1xf32>
    %275 = vector.broadcast %274 : vector<2x1xf32> to vector<2x128xf32>
    %276 = arith.mulf %264, %275 : vector<2x128xf32>
    %277 = vector.broadcast %266 : vector<1x128xf32> to vector<2x128xf32>
    %278 = arith.mulf %276, %277 : vector<2x128xf32>
    %c1_115 = arith.constant 1 : index
    %c0_116 = arith.constant 0 : index
    %c0_117 = arith.constant 0 : index
    %279 = vector.load %arg3[%c1_115, %c0_116, %c0_117] : memref<2x128x384xbf16, #tpu.memory_space<vmem>>, vector<1x128x384xbf16>
    %280 = vector.shape_cast %279 : vector<1x128x384xbf16> to vector<128x384xbf16>
    %281 = arith.truncf %278 : vector<2x128xf32> to vector<2x128xbf16>
    %cst_118 = arith.constant dense<0.000000e+00> : vector<2x384xf32>
    %282 = tpu.matmul %281, %280, %cst_118 {dimension_numbers = #tpu.dot_dimension_numbers<[1], [0], [0], [1], [0, 0, 1, 1], [], []>} : vector<2x128xbf16>, vector<128x384xbf16>, vector<2x384xf32> -> vector<2x384xf32>
    %283 = vector.extract_strided_slice %282 {offsets = [0, 0], sizes = [2, 128], strides = [1, 1]} : vector<2x384xf32> to vector<2x128xf32>
    %284 = vector.extract_strided_slice %282 {offsets = [0, 128], sizes = [2, 128], strides = [1, 1]} : vector<2x384xf32> to vector<2x128xf32>
    %285 = vector.extract_strided_slice %282 {offsets = [0, 256], sizes = [2, 128], strides = [1, 1]} : vector<2x384xf32> to vector<2x128xf32>
    %286 = vector.extract_strided_slice %284 {offsets = [0, 0], sizes = [1, 128], strides = [1, 1]} : vector<2x128xf32> to vector<1x128xf32>
    %c1_119 = arith.constant 1 : index
    %c0_120 = arith.constant 0 : index
    %c0_121 = arith.constant 0 : index
    %c0_122 = arith.constant 0 : index
    %287 = vector.load %arg10[%c1_119, %c0_120, %c0_121, %c0_122] : memref<2x2x64x128xf32, #tpu.memory_space<vmem>>, vector<1x1x64x128xf32>
    %288 = vector.shape_cast %287 : vector<1x1x64x128xf32> to vector<64x128xf32>
    %289 = vector.shape_cast %7 : vector<64x1xi1> to vector<64x1xi1>
    %290 = vector.broadcast %289 : vector<64x1xi1> to vector<64x128xi1>
    %291 = vector.shape_cast %286 : vector<1x128xf32> to vector<1x128xf32>
    %292 = vector.broadcast %291 : vector<1x128xf32> to vector<64x128xf32>
    %293 = arith.select %290, %292, %288 : vector<64x128xi1>, vector<64x128xf32>
    %294 = vector.extract_strided_slice %285 {offsets = [0, 0], sizes = [1, 128], strides = [1, 1]} : vector<2x128xf32> to vector<1x128xf32>
    %c1_123 = arith.constant 1 : index
    %c0_124 = arith.constant 0 : index
    %c0_125 = arith.constant 0 : index
    %c0_126 = arith.constant 0 : index
    %295 = vector.load %arg11[%c1_123, %c0_124, %c0_125, %c0_126] : memref<2x2x64x128xf32, #tpu.memory_space<vmem>>, vector<1x1x64x128xf32>
    %296 = vector.shape_cast %295 : vector<1x1x64x128xf32> to vector<64x128xf32>
    %297 = vector.shape_cast %7 : vector<64x1xi1> to vector<64x1xi1>
    %298 = vector.broadcast %297 : vector<64x1xi1> to vector<64x128xi1>
    %299 = vector.shape_cast %294 : vector<1x128xf32> to vector<1x128xf32>
    %300 = vector.broadcast %299 : vector<1x128xf32> to vector<64x128xf32>
    %301 = arith.select %298, %300, %296 : vector<64x128xi1>, vector<64x128xf32>
    %c1_127 = arith.constant 1 : index
    %c0_128 = arith.constant 0 : index
    %c0_129 = arith.constant 0 : index
    %c0_130 = arith.constant 0 : index
    %302 = vector.load %arg13[%c1_127, %c0_128, %c0_129, %c0_130] : memref<2x2x64x128xf32, #tpu.memory_space<vmem>>, vector<1x1x64x128xf32>
    %303 = vector.shape_cast %302 : vector<1x1x64x128xf32> to vector<64x128xf32>
    %304 = vector.shape_cast %293 : vector<64x128xf32> to vector<1x1x64x128xf32>
    tpu.vector_store %arg13[%c1_127, %c0_128, %c0_129, %c0_130], %304 {strides = array<i32>} : memref<2x2x64x128xf32, #tpu.memory_space<vmem>>, vector<1x1x64x128xf32>,
    %c1_131 = arith.constant 1 : index
    %c0_132 = arith.constant 0 : index
    %c0_133 = arith.constant 0 : index
    %c0_134 = arith.constant 0 : index
    %305 = vector.load %arg14[%c1_131, %c0_132, %c0_133, %c0_134] : memref<2x2x64x128xf32, #tpu.memory_space<vmem>>, vector<1x1x64x128xf32>
    %306 = vector.shape_cast %305 : vector<1x1x64x128xf32> to vector<64x128xf32>
    %307 = vector.shape_cast %301 : vector<64x128xf32> to vector<1x1x64x128xf32>
    tpu.vector_store %arg14[%c1_131, %c0_132, %c0_133, %c0_134], %307 {strides = array<i32>} : memref<2x2x64x128xf32, #tpu.memory_space<vmem>>, vector<1x1x64x128xf32>,
    %308 = vector.extract_strided_slice %283 {offsets = [0, 0], sizes = [1, 32], strides = [1, 1]} : vector<2x128xf32> to vector<1x32xf32>
    %309 = vector.extract_strided_slice %293 {offsets = [0, 0], sizes = [64, 32], strides = [1, 1]} : vector<64x128xf32> to vector<64x32xf32>
    %310 = vector.extract_strided_slice %301 {offsets = [0, 0], sizes = [64, 32], strides = [1, 1]} : vector<64x128xf32> to vector<64x32xf32>
    %cst_135 = arith.constant dense<0.000000e+00> : vector<1x64xf32>
    %311 = tpu.matmul %308, %309, %cst_135 {dimension_numbers = #tpu.dot_dimension_numbers<[1], [1], [0], [0], [0, 0, 1, 0], [], []>} : vector<1x32xf32>, vector<64x32xf32>, vector<1x64xf32> -> vector<1x64xf32>
    %cst_136 = arith.constant 0.176776692 : f32
    %312 = vector.broadcast %cst_136 : f32 to vector<1x64xf32>
    %313 = arith.mulf %311, %312 : vector<1x64xf32>
    %cst_137 = arith.constant -1.000000e+30 : f32
    %314 = vector.broadcast %cst_137 : f32 to vector<1x64xf32>
    %315 = arith.select %5, %313, %314 : vector<1x64xi1>, vector<1x64xf32>
    %cst_138 = arith.constant dense<0xFF800000> : vector<1xf32>
    %316 = vector.multi_reduction <maximumf>, %315, %cst_138 [1] : vector<1x64xf32> to vector<1xf32>
    %317 = vector.shape_cast %316 : vector<1xf32> to vector<1x1xf32>
    %318 = vector.broadcast %317 : vector<1x1xf32> to vector<1x64xf32>
    %319 = arith.subf %315, %318 : vector<1x64xf32>
    %320 = math.exp %319 : vector<1x64xf32>
    %cst_139 = arith.constant dense<0.000000e+00> : vector<1xf32>
    %321 = vector.multi_reduction <add>, %320, %cst_139 [1] : vector<1x64xf32> to vector<1xf32>
    %322 = vector.shape_cast %321 : vector<1xf32> to vector<1x1xf32>
    %323 = tpu.reciprocal %322 {approx = true} : vector<1x1xf32> -> vector<1x1xf32>
    %324 = vector.broadcast %323 : vector<1x1xf32> to vector<1x64xf32>
    %325 = arith.mulf %320, %324 : vector<1x64xf32>
    %cst_140 = arith.constant dense<0.000000e+00> : vector<1x32xf32>
    %326 = tpu.matmul %325, %310, %cst_140 {dimension_numbers = #tpu.dot_dimension_numbers<[1], [0], [0], [1], [0, 0, 1, 1], [], []>} : vector<1x64xf32>, vector<64x32xf32>, vector<1x32xf32> -> vector<1x32xf32>
    %327 = vector.extract_strided_slice %283 {offsets = [0, 32], sizes = [1, 32], strides = [1, 1]} : vector<2x128xf32> to vector<1x32xf32>
    %328 = vector.extract_strided_slice %293 {offsets = [0, 32], sizes = [64, 32], strides = [1, 1]} : vector<64x128xf32> to vector<64x32xf32>
    %329 = vector.extract_strided_slice %301 {offsets = [0, 32], sizes = [64, 32], strides = [1, 1]} : vector<64x128xf32> to vector<64x32xf32>
    %cst_141 = arith.constant dense<0.000000e+00> : vector<1x64xf32>
    %330 = tpu.matmul %327, %328, %cst_141 {dimension_numbers = #tpu.dot_dimension_numbers<[1], [1], [0], [0], [0, 0, 1, 0], [], []>} : vector<1x32xf32>, vector<64x32xf32>, vector<1x64xf32> -> vector<1x64xf32>
    %cst_142 = arith.constant 0.176776692 : f32
    %331 = vector.broadcast %cst_142 : f32 to vector<1x64xf32>
    %332 = arith.mulf %330, %331 : vector<1x64xf32>
    %cst_143 = arith.constant -1.000000e+30 : f32
    %333 = vector.broadcast %cst_143 : f32 to vector<1x64xf32>
    %334 = arith.select %5, %332, %333 : vector<1x64xi1>, vector<1x64xf32>
    %cst_144 = arith.constant dense<0xFF800000> : vector<1xf32>
    %335 = vector.multi_reduction <maximumf>, %334, %cst_144 [1] : vector<1x64xf32> to vector<1xf32>
    %336 = vector.shape_cast %335 : vector<1xf32> to vector<1x1xf32>
    %337 = vector.broadcast %336 : vector<1x1xf32> to vector<1x64xf32>
    %338 = arith.subf %334, %337 : vector<1x64xf32>
    %339 = math.exp %338 : vector<1x64xf32>
    %cst_145 = arith.constant dense<0.000000e+00> : vector<1xf32>
    %340 = vector.multi_reduction <add>, %339, %cst_145 [1] : vector<1x64xf32> to vector<1xf32>
    %341 = vector.shape_cast %340 : vector<1xf32> to vector<1x1xf32>
    %342 = tpu.reciprocal %341 {approx = true} : vector<1x1xf32> -> vector<1x1xf32>
    %343 = vector.broadcast %342 : vector<1x1xf32> to vector<1x64xf32>
    %344 = arith.mulf %339, %343 : vector<1x64xf32>
    %cst_146 = arith.constant dense<0.000000e+00> : vector<1x32xf32>
    %345 = tpu.matmul %344, %329, %cst_146 {dimension_numbers = #tpu.dot_dimension_numbers<[1], [0], [0], [1], [0, 0, 1, 1], [], []>} : vector<1x64xf32>, vector<64x32xf32>, vector<1x32xf32> -> vector<1x32xf32>
    %346 = vector.extract_strided_slice %283 {offsets = [0, 64], sizes = [1, 32], strides = [1, 1]} : vector<2x128xf32> to vector<1x32xf32>
    %347 = vector.extract_strided_slice %293 {offsets = [0, 64], sizes = [64, 32], strides = [1, 1]} : vector<64x128xf32> to vector<64x32xf32>
    %348 = vector.extract_strided_slice %301 {offsets = [0, 64], sizes = [64, 32], strides = [1, 1]} : vector<64x128xf32> to vector<64x32xf32>
    %cst_147 = arith.constant dense<0.000000e+00> : vector<1x64xf32>
    %349 = tpu.matmul %346, %347, %cst_147 {dimension_numbers = #tpu.dot_dimension_numbers<[1], [1], [0], [0], [0, 0, 1, 0], [], []>} : vector<1x32xf32>, vector<64x32xf32>, vector<1x64xf32> -> vector<1x64xf32>
    %cst_148 = arith.constant 0.176776692 : f32
    %350 = vector.broadcast %cst_148 : f32 to vector<1x64xf32>
    %351 = arith.mulf %349, %350 : vector<1x64xf32>
    %cst_149 = arith.constant -1.000000e+30 : f32
    %352 = vector.broadcast %cst_149 : f32 to vector<1x64xf32>
    %353 = arith.select %5, %351, %352 : vector<1x64xi1>, vector<1x64xf32>
    %cst_150 = arith.constant dense<0xFF800000> : vector<1xf32>
    %354 = vector.multi_reduction <maximumf>, %353, %cst_150 [1] : vector<1x64xf32> to vector<1xf32>
    %355 = vector.shape_cast %354 : vector<1xf32> to vector<1x1xf32>
    %356 = vector.broadcast %355 : vector<1x1xf32> to vector<1x64xf32>
    %357 = arith.subf %353, %356 : vector<1x64xf32>
    %358 = math.exp %357 : vector<1x64xf32>
    %cst_151 = arith.constant dense<0.000000e+00> : vector<1xf32>
    %359 = vector.multi_reduction <add>, %358, %cst_151 [1] : vector<1x64xf32> to vector<1xf32>
    %360 = vector.shape_cast %359 : vector<1xf32> to vector<1x1xf32>
    %361 = tpu.reciprocal %360 {approx = true} : vector<1x1xf32> -> vector<1x1xf32>
    %362 = vector.broadcast %361 : vector<1x1xf32> to vector<1x64xf32>
    %363 = arith.mulf %358, %362 : vector<1x64xf32>
    %cst_152 = arith.constant dense<0.000000e+00> : vector<1x32xf32>
    %364 = tpu.matmul %363, %348, %cst_152 {dimension_numbers = #tpu.dot_dimension_numbers<[1], [0], [0], [1], [0, 0, 1, 1], [], []>} : vector<1x64xf32>, vector<64x32xf32>, vector<1x32xf32> -> vector<1x32xf32>
    %365 = vector.extract_strided_slice %283 {offsets = [0, 96], sizes = [1, 32], strides = [1, 1]} : vector<2x128xf32> to vector<1x32xf32>
    %366 = vector.extract_strided_slice %293 {offsets = [0, 96], sizes = [64, 32], strides = [1, 1]} : vector<64x128xf32> to vector<64x32xf32>
    %367 = vector.extract_strided_slice %301 {offsets = [0, 96], sizes = [64, 32], strides = [1, 1]} : vector<64x128xf32> to vector<64x32xf32>
    %cst_153 = arith.constant dense<0.000000e+00> : vector<1x64xf32>
    %368 = tpu.matmul %365, %366, %cst_153 {dimension_numbers = #tpu.dot_dimension_numbers<[1], [1], [0], [0], [0, 0, 1, 0], [], []>} : vector<1x32xf32>, vector<64x32xf32>, vector<1x64xf32> -> vector<1x64xf32>
    %cst_154 = arith.constant 0.176776692 : f32
    %369 = vector.broadcast %cst_154 : f32 to vector<1x64xf32>
    %370 = arith.mulf %368, %369 : vector<1x64xf32>
    %cst_155 = arith.constant -1.000000e+30 : f32
    %371 = vector.broadcast %cst_155 : f32 to vector<1x64xf32>
    %372 = arith.select %5, %370, %371 : vector<1x64xi1>, vector<1x64xf32>
    %cst_156 = arith.constant dense<0xFF800000> : vector<1xf32>
    %373 = vector.multi_reduction <maximumf>, %372, %cst_156 [1] : vector<1x64xf32> to vector<1xf32>
    %374 = vector.shape_cast %373 : vector<1xf32> to vector<1x1xf32>
    %375 = vector.broadcast %374 : vector<1x1xf32> to vector<1x64xf32>
    %376 = arith.subf %372, %375 : vector<1x64xf32>
    %377 = math.exp %376 : vector<1x64xf32>
    %cst_157 = arith.constant dense<0.000000e+00> : vector<1xf32>
    %378 = vector.multi_reduction <add>, %377, %cst_157 [1] : vector<1x64xf32> to vector<1xf32>
    %379 = vector.shape_cast %378 : vector<1xf32> to vector<1x1xf32>
    %380 = tpu.reciprocal %379 {approx = true} : vector<1x1xf32> -> vector<1x1xf32>
    %381 = vector.broadcast %380 : vector<1x1xf32> to vector<1x64xf32>
    %382 = arith.mulf %377, %381 : vector<1x64xf32>
    %cst_158 = arith.constant dense<0.000000e+00> : vector<1x32xf32>
    %383 = tpu.matmul %382, %367, %cst_158 {dimension_numbers = #tpu.dot_dimension_numbers<[1], [0], [0], [1], [0, 0, 1, 1], [], []>} : vector<1x64xf32>, vector<64x32xf32>, vector<1x32xf32> -> vector<1x32xf32>
    %384 = tpu.concatenate %326, %345, %364, %383 in 1 : vector<1x32xf32>, vector<1x32xf32>, vector<1x32xf32>, vector<1x32xf32> -> vector<1x128xf32>
    %385 = vector.extract_strided_slice %284 {offsets = [1, 0], sizes = [1, 128], strides = [1, 1]} : vector<2x128xf32> to vector<1x128xf32>
    %c1_159 = arith.constant 1 : index
    %c1_160 = arith.constant 1 : index
    %c0_161 = arith.constant 0 : index
    %c0_162 = arith.constant 0 : index
    %386 = vector.load %arg10[%c1_159, %c1_160, %c0_161, %c0_162] : memref<2x2x64x128xf32, #tpu.memory_space<vmem>>, vector<1x1x64x128xf32>
    %387 = vector.shape_cast %386 : vector<1x1x64x128xf32> to vector<64x128xf32>
    %388 = vector.shape_cast %7 : vector<64x1xi1> to vector<64x1xi1>
    %389 = vector.broadcast %388 : vector<64x1xi1> to vector<64x128xi1>
    %390 = vector.shape_cast %385 : vector<1x128xf32> to vector<1x128xf32>
    %391 = vector.broadcast %390 : vector<1x128xf32> to vector<64x128xf32>
    %392 = arith.select %389, %391, %387 : vector<64x128xi1>, vector<64x128xf32>
    %393 = vector.extract_strided_slice %285 {offsets = [1, 0], sizes = [1, 128], strides = [1, 1]} : vector<2x128xf32> to vector<1x128xf32>
    %c1_163 = arith.constant 1 : index
    %c1_164 = arith.constant 1 : index
    %c0_165 = arith.constant 0 : index
    %c0_166 = arith.constant 0 : index
    %394 = vector.load %arg11[%c1_163, %c1_164, %c0_165, %c0_166] : memref<2x2x64x128xf32, #tpu.memory_space<vmem>>, vector<1x1x64x128xf32>
    %395 = vector.shape_cast %394 : vector<1x1x64x128xf32> to vector<64x128xf32>
    %396 = vector.shape_cast %7 : vector<64x1xi1> to vector<64x1xi1>
    %397 = vector.broadcast %396 : vector<64x1xi1> to vector<64x128xi1>
    %398 = vector.shape_cast %393 : vector<1x128xf32> to vector<1x128xf32>
    %399 = vector.broadcast %398 : vector<1x128xf32> to vector<64x128xf32>
    %400 = arith.select %397, %399, %395 : vector<64x128xi1>, vector<64x128xf32>
    %c1_167 = arith.constant 1 : index
    %c1_168 = arith.constant 1 : index
    %c0_169 = arith.constant 0 : index
    %c0_170 = arith.constant 0 : index
    %401 = vector.load %arg13[%c1_167, %c1_168, %c0_169, %c0_170] : memref<2x2x64x128xf32, #tpu.memory_space<vmem>>, vector<1x1x64x128xf32>
    %402 = vector.shape_cast %401 : vector<1x1x64x128xf32> to vector<64x128xf32>
    %403 = vector.shape_cast %392 : vector<64x128xf32> to vector<1x1x64x128xf32>
    tpu.vector_store %arg13[%c1_167, %c1_168, %c0_169, %c0_170], %403 {strides = array<i32>} : memref<2x2x64x128xf32, #tpu.memory_space<vmem>>, vector<1x1x64x128xf32>,
    %c1_171 = arith.constant 1 : index
    %c1_172 = arith.constant 1 : index
    %c0_173 = arith.constant 0 : index
    %c0_174 = arith.constant 0 : index
    %404 = vector.load %arg14[%c1_171, %c1_172, %c0_173, %c0_174] : memref<2x2x64x128xf32, #tpu.memory_space<vmem>>, vector<1x1x64x128xf32>
    %405 = vector.shape_cast %404 : vector<1x1x64x128xf32> to vector<64x128xf32>
    %406 = vector.shape_cast %400 : vector<64x128xf32> to vector<1x1x64x128xf32>
    tpu.vector_store %arg14[%c1_171, %c1_172, %c0_173, %c0_174], %406 {strides = array<i32>} : memref<2x2x64x128xf32, #tpu.memory_space<vmem>>, vector<1x1x64x128xf32>,
    %407 = vector.extract_strided_slice %283 {offsets = [1, 0], sizes = [1, 32], strides = [1, 1]} : vector<2x128xf32> to vector<1x32xf32>
    %408 = vector.extract_strided_slice %392 {offsets = [0, 0], sizes = [64, 32], strides = [1, 1]} : vector<64x128xf32> to vector<64x32xf32>
    %409 = vector.extract_strided_slice %400 {offsets = [0, 0], sizes = [64, 32], strides = [1, 1]} : vector<64x128xf32> to vector<64x32xf32>
    %cst_175 = arith.constant dense<0.000000e+00> : vector<1x64xf32>
    %410 = tpu.matmul %407, %408, %cst_175 {dimension_numbers = #tpu.dot_dimension_numbers<[1], [1], [0], [0], [0, 0, 1, 0], [], []>} : vector<1x32xf32>, vector<64x32xf32>, vector<1x64xf32> -> vector<1x64xf32>
    %cst_176 = arith.constant 0.176776692 : f32
    %411 = vector.broadcast %cst_176 : f32 to vector<1x64xf32>
    %412 = arith.mulf %410, %411 : vector<1x64xf32>
    %cst_177 = arith.constant -1.000000e+30 : f32
    %413 = vector.broadcast %cst_177 : f32 to vector<1x64xf32>
    %414 = arith.select %5, %412, %413 : vector<1x64xi1>, vector<1x64xf32>
    %cst_178 = arith.constant dense<0xFF800000> : vector<1xf32>
    %415 = vector.multi_reduction <maximumf>, %414, %cst_178 [1] : vector<1x64xf32> to vector<1xf32>
    %416 = vector.shape_cast %415 : vector<1xf32> to vector<1x1xf32>
    %417 = vector.broadcast %416 : vector<1x1xf32> to vector<1x64xf32>
    %418 = arith.subf %414, %417 : vector<1x64xf32>
    %419 = math.exp %418 : vector<1x64xf32>
    %cst_179 = arith.constant dense<0.000000e+00> : vector<1xf32>
    %420 = vector.multi_reduction <add>, %419, %cst_179 [1] : vector<1x64xf32> to vector<1xf32>
    %421 = vector.shape_cast %420 : vector<1xf32> to vector<1x1xf32>
    %422 = tpu.reciprocal %421 {approx = true} : vector<1x1xf32> -> vector<1x1xf32>
    %423 = vector.broadcast %422 : vector<1x1xf32> to vector<1x64xf32>
    %424 = arith.mulf %419, %423 : vector<1x64xf32>
    %cst_180 = arith.constant dense<0.000000e+00> : vector<1x32xf32>
    %425 = tpu.matmul %424, %409, %cst_180 {dimension_numbers = #tpu.dot_dimension_numbers<[1], [0], [0], [1], [0, 0, 1, 1], [], []>} : vector<1x64xf32>, vector<64x32xf32>, vector<1x32xf32> -> vector<1x32xf32>
    %426 = vector.extract_strided_slice %283 {offsets = [1, 32], sizes = [1, 32], strides = [1, 1]} : vector<2x128xf32> to vector<1x32xf32>
    %427 = vector.extract_strided_slice %392 {offsets = [0, 32], sizes = [64, 32], strides = [1, 1]} : vector<64x128xf32> to vector<64x32xf32>
    %428 = vector.extract_strided_slice %400 {offsets = [0, 32], sizes = [64, 32], strides = [1, 1]} : vector<64x128xf32> to vector<64x32xf32>
    %cst_181 = arith.constant dense<0.000000e+00> : vector<1x64xf32>
    %429 = tpu.matmul %426, %427, %cst_181 {dimension_numbers = #tpu.dot_dimension_numbers<[1], [1], [0], [0], [0, 0, 1, 0], [], []>} : vector<1x32xf32>, vector<64x32xf32>, vector<1x64xf32> -> vector<1x64xf32>
    %cst_182 = arith.constant 0.176776692 : f32
    %430 = vector.broadcast %cst_182 : f32 to vector<1x64xf32>
    %431 = arith.mulf %429, %430 : vector<1x64xf32>
    %cst_183 = arith.constant -1.000000e+30 : f32
    %432 = vector.broadcast %cst_183 : f32 to vector<1x64xf32>
    %433 = arith.select %5, %431, %432 : vector<1x64xi1>, vector<1x64xf32>
    %cst_184 = arith.constant dense<0xFF800000> : vector<1xf32>
    %434 = vector.multi_reduction <maximumf>, %433, %cst_184 [1] : vector<1x64xf32> to vector<1xf32>
    %435 = vector.shape_cast %434 : vector<1xf32> to vector<1x1xf32>
    %436 = vector.broadcast %435 : vector<1x1xf32> to vector<1x64xf32>
    %437 = arith.subf %433, %436 : vector<1x64xf32>
    %438 = math.exp %437 : vector<1x64xf32>
    %cst_185 = arith.constant dense<0.000000e+00> : vector<1xf32>
    %439 = vector.multi_reduction <add>, %438, %cst_185 [1] : vector<1x64xf32> to vector<1xf32>
    %440 = vector.shape_cast %439 : vector<1xf32> to vector<1x1xf32>
    %441 = tpu.reciprocal %440 {approx = true} : vector<1x1xf32> -> vector<1x1xf32>
    %442 = vector.broadcast %441 : vector<1x1xf32> to vector<1x64xf32>
    %443 = arith.mulf %438, %442 : vector<1x64xf32>
    %cst_186 = arith.constant dense<0.000000e+00> : vector<1x32xf32>
    %444 = tpu.matmul %443, %428, %cst_186 {dimension_numbers = #tpu.dot_dimension_numbers<[1], [0], [0], [1], [0, 0, 1, 1], [], []>} : vector<1x64xf32>, vector<64x32xf32>, vector<1x32xf32> -> vector<1x32xf32>
    %445 = vector.extract_strided_slice %283 {offsets = [1, 64], sizes = [1, 32], strides = [1, 1]} : vector<2x128xf32> to vector<1x32xf32>
    %446 = vector.extract_strided_slice %392 {offsets = [0, 64], sizes = [64, 32], strides = [1, 1]} : vector<64x128xf32> to vector<64x32xf32>
    %447 = vector.extract_strided_slice %400 {offsets = [0, 64], sizes = [64, 32], strides = [1, 1]} : vector<64x128xf32> to vector<64x32xf32>
    %cst_187 = arith.constant dense<0.000000e+00> : vector<1x64xf32>
    %448 = tpu.matmul %445, %446, %cst_187 {dimension_numbers = #tpu.dot_dimension_numbers<[1], [1], [0], [0], [0, 0, 1, 0], [], []>} : vector<1x32xf32>, vector<64x32xf32>, vector<1x64xf32> -> vector<1x64xf32>
    %cst_188 = arith.constant 0.176776692 : f32
    %449 = vector.broadcast %cst_188 : f32 to vector<1x64xf32>
    %450 = arith.mulf %448, %449 : vector<1x64xf32>
    %cst_189 = arith.constant -1.000000e+30 : f32
    %451 = vector.broadcast %cst_189 : f32 to vector<1x64xf32>
    %452 = arith.select %5, %450, %451 : vector<1x64xi1>, vector<1x64xf32>
    %cst_190 = arith.constant dense<0xFF800000> : vector<1xf32>
    %453 = vector.multi_reduction <maximumf>, %452, %cst_190 [1] : vector<1x64xf32> to vector<1xf32>
    %454 = vector.shape_cast %453 : vector<1xf32> to vector<1x1xf32>
    %455 = vector.broadcast %454 : vector<1x1xf32> to vector<1x64xf32>
    %456 = arith.subf %452, %455 : vector<1x64xf32>
    %457 = math.exp %456 : vector<1x64xf32>
    %cst_191 = arith.constant dense<0.000000e+00> : vector<1xf32>
    %458 = vector.multi_reduction <add>, %457, %cst_191 [1] : vector<1x64xf32> to vector<1xf32>
    %459 = vector.shape_cast %458 : vector<1xf32> to vector<1x1xf32>
    %460 = tpu.reciprocal %459 {approx = true} : vector<1x1xf32> -> vector<1x1xf32>
    %461 = vector.broadcast %460 : vector<1x1xf32> to vector<1x64xf32>
    %462 = arith.mulf %457, %461 : vector<1x64xf32>
    %cst_192 = arith.constant dense<0.000000e+00> : vector<1x32xf32>
    %463 = tpu.matmul %462, %447, %cst_192 {dimension_numbers = #tpu.dot_dimension_numbers<[1], [0], [0], [1], [0, 0, 1, 1], [], []>} : vector<1x64xf32>, vector<64x32xf32>, vector<1x32xf32> -> vector<1x32xf32>
    %464 = vector.extract_strided_slice %283 {offsets = [1, 96], sizes = [1, 32], strides = [1, 1]} : vector<2x128xf32> to vector<1x32xf32>
    %465 = vector.extract_strided_slice %392 {offsets = [0, 96], sizes = [64, 32], strides = [1, 1]} : vector<64x128xf32> to vector<64x32xf32>
    %466 = vector.extract_strided_slice %400 {offsets = [0, 96], sizes = [64, 32], strides = [1, 1]} : vector<64x128xf32> to vector<64x32xf32>
    %cst_193 = arith.constant dense<0.000000e+00> : vector<1x64xf32>
    %467 = tpu.matmul %464, %465, %cst_193 {dimension_numbers = #tpu.dot_dimension_numbers<[1], [1], [0], [0], [0, 0, 1, 0], [], []>} : vector<1x32xf32>, vector<64x32xf32>, vector<1x64xf32> -> vector<1x64xf32>
    %cst_194 = arith.constant 0.176776692 : f32
    %468 = vector.broadcast %cst_194 : f32 to vector<1x64xf32>
    %469 = arith.mulf %467, %468 : vector<1x64xf32>
    %cst_195 = arith.constant -1.000000e+30 : f32
    %470 = vector.broadcast %cst_195 : f32 to vector<1x64xf32>
    %471 = arith.select %5, %469, %470 : vector<1x64xi1>, vector<1x64xf32>
    %cst_196 = arith.constant dense<0xFF800000> : vector<1xf32>
    %472 = vector.multi_reduction <maximumf>, %471, %cst_196 [1] : vector<1x64xf32> to vector<1xf32>
    %473 = vector.shape_cast %472 : vector<1xf32> to vector<1x1xf32>
    %474 = vector.broadcast %473 : vector<1x1xf32> to vector<1x64xf32>
    %475 = arith.subf %471, %474 : vector<1x64xf32>
    %476 = math.exp %475 : vector<1x64xf32>
    %cst_197 = arith.constant dense<0.000000e+00> : vector<1xf32>
    %477 = vector.multi_reduction <add>, %476, %cst_197 [1] : vector<1x64xf32> to vector<1xf32>
    %478 = vector.shape_cast %477 : vector<1xf32> to vector<1x1xf32>
    %479 = tpu.reciprocal %478 {approx = true} : vector<1x1xf32> -> vector<1x1xf32>
    %480 = vector.broadcast %479 : vector<1x1xf32> to vector<1x64xf32>
    %481 = arith.mulf %476, %480 : vector<1x64xf32>
    %cst_198 = arith.constant dense<0.000000e+00> : vector<1x32xf32>
    %482 = tpu.matmul %481, %466, %cst_198 {dimension_numbers = #tpu.dot_dimension_numbers<[1], [0], [0], [1], [0, 0, 1, 1], [], []>} : vector<1x64xf32>, vector<64x32xf32>, vector<1x32xf32> -> vector<1x32xf32>
    %483 = tpu.concatenate %425, %444, %463, %482 in 1 : vector<1x32xf32>, vector<1x32xf32>, vector<1x32xf32>, vector<1x32xf32> -> vector<1x128xf32>
    %484 = tpu.concatenate %384, %483 in 0 : vector<1x128xf32>, vector<1x128xf32> -> vector<2x128xf32>
    %c1_199 = arith.constant 1 : index
    %c0_200 = arith.constant 0 : index
    %c0_201 = arith.constant 0 : index
    %485 = vector.load %arg4[%c1_199, %c0_200, %c0_201] : memref<2x128x128xbf16, #tpu.memory_space<vmem>>, vector<1x128x128xbf16>
    %486 = vector.shape_cast %485 : vector<1x128x128xbf16> to vector<128x128xbf16>
    %487 = arith.truncf %484 : vector<2x128xf32> to vector<2x128xbf16>
    %cst_202 = arith.constant dense<0.000000e+00> : vector<2x128xf32>
    %488 = tpu.matmul %487, %486, %cst_202 {dimension_numbers = #tpu.dot_dimension_numbers<[1], [0], [0], [1], [0, 0, 1, 1], [], []>} : vector<2x128xbf16>, vector<128x128xbf16>, vector<2x128xf32> -> vector<2x128xf32>
    %489 = arith.addf %264, %488 : vector<2x128xf32>
    %c1_203 = arith.constant 1 : index
    %c0_204 = arith.constant 0 : index
    %c0_205 = arith.constant 0 : index
    %490 = vector.load %arg5[%c1_203, %c0_204, %c0_205] : memref<2x1x128xf32, #tpu.memory_space<vmem>>, vector<1x1x128xf32>
    %491 = vector.shape_cast %490 : vector<1x1x128xf32> to vector<1x128xf32>
    %492 = arith.mulf %489, %489 : vector<2x128xf32>
    %cst_206 = arith.constant dense<0.000000e+00> : vector<2xf32>
    %493 = vector.multi_reduction <add>, %492, %cst_206 [1] : vector<2x128xf32> to vector<2xf32>
    %494 = vector.shape_cast %493 : vector<2xf32> to vector<2x1xf32>
    %cst_207 = arith.constant 1.280000e+02 : f32
    %495 = vector.broadcast %cst_207 : f32 to vector<2x1xf32>
    %496 = arith.divf %494, %495 : vector<2x1xf32>
    %cst_208 = arith.constant 9.99999974E-6 : f32
    %497 = vector.broadcast %cst_208 : f32 to vector<2x1xf32>
    %498 = arith.addf %496, %497 : vector<2x1xf32>
    %499 = math.rsqrt %498 : vector<2x1xf32>
    %500 = vector.broadcast %499 : vector<2x1xf32> to vector<2x128xf32>
    %501 = arith.mulf %489, %500 : vector<2x128xf32>
    %502 = vector.broadcast %491 : vector<1x128xf32> to vector<2x128xf32>
    %503 = arith.mulf %501, %502 : vector<2x128xf32>
    %c1_209 = arith.constant 1 : index
    %c0_210 = arith.constant 0 : index
    %c0_211 = arith.constant 0 : index
    %504 = vector.load %arg6[%c1_209, %c0_210, %c0_211] : memref<2x128x512xbf16, #tpu.memory_space<vmem>>, vector<1x128x512xbf16>
    %505 = vector.shape_cast %504 : vector<1x128x512xbf16> to vector<128x512xbf16>
    %506 = arith.truncf %503 : vector<2x128xf32> to vector<2x128xbf16>
    %cst_212 = arith.constant dense<0.000000e+00> : vector<2x512xf32>
    %507 = tpu.matmul %506, %505, %cst_212 {dimension_numbers = #tpu.dot_dimension_numbers<[1], [0], [0], [1], [0, 0, 1, 1], [], []>} : vector<2x128xbf16>, vector<128x512xbf16>, vector<2x512xf32> -> vector<2x512xf32>
    %508 = vector.extract_strided_slice %507 {offsets = [0, 0], sizes = [2, 256], strides = [1, 1]} : vector<2x512xf32> to vector<2x256xf32>
    %509 = vector.extract_strided_slice %507 {offsets = [0, 256], sizes = [2, 256], strides = [1, 1]} : vector<2x512xf32> to vector<2x256xf32>
    %510 = arith.negf %508 : vector<2x256xf32>
    %511 = math.exp %510 : vector<2x256xf32>
    %cst_213 = arith.constant 1.000000e+00 : f32
    %512 = vector.broadcast %cst_213 : f32 to vector<2x256xf32>
    %513 = arith.addf %512, %511 : vector<2x256xf32>
    %514 = arith.divf %512, %513 : vector<2x256xf32>
    %515 = arith.mulf %508, %514 : vector<2x256xf32>
    %516 = arith.mulf %515, %509 : vector<2x256xf32>
    %c1_214 = arith.constant 1 : index
    %c0_215 = arith.constant 0 : index
    %c0_216 = arith.constant 0 : index
    %517 = vector.load %arg7[%c1_214, %c0_215, %c0_216] : memref<2x256x128xbf16, #tpu.memory_space<vmem>>, vector<1x256x128xbf16>
    %518 = vector.shape_cast %517 : vector<1x256x128xbf16> to vector<256x128xbf16>
    %519 = arith.truncf %516 : vector<2x256xf32> to vector<2x256xbf16>
    %cst_217 = arith.constant dense<0.000000e+00> : vector<2x128xf32>
    %520 = tpu.matmul %519, %518, %cst_217 {dimension_numbers = #tpu.dot_dimension_numbers<[1], [0], [0], [1], [0, 0, 1, 1], [], []>} : vector<2x256xbf16>, vector<256x128xbf16>, vector<2x128xf32> -> vector<2x128xf32>
    %521 = arith.addf %489, %520 : vector<2x128xf32>
    %c0_218 = arith.constant 0 : index
    %c0_219 = arith.constant 0 : index
    %522 = vector.load %arg8[%c0_218, %c0_219] : memref<1x128xf32, #tpu.memory_space<vmem>>, vector<1x128xf32>
    %523 = arith.mulf %521, %521 : vector<2x128xf32>
    %cst_220 = arith.constant dense<0.000000e+00> : vector<2xf32>
    %524 = vector.multi_reduction <add>, %523, %cst_220 [1] : vector<2x128xf32> to vector<2xf32>
    %525 = vector.shape_cast %524 : vector<2xf32> to vector<2x1xf32>
    %cst_221 = arith.constant 1.280000e+02 : f32
    %526 = vector.broadcast %cst_221 : f32 to vector<2x1xf32>
    %527 = arith.divf %525, %526 : vector<2x1xf32>
    %cst_222 = arith.constant 9.99999974E-6 : f32
    %528 = vector.broadcast %cst_222 : f32 to vector<2x1xf32>
    %529 = arith.addf %527, %528 : vector<2x1xf32>
    %530 = math.rsqrt %529 : vector<2x1xf32>
    %531 = vector.broadcast %530 : vector<2x1xf32> to vector<2x128xf32>
    %532 = arith.mulf %521, %531 : vector<2x128xf32>
    %533 = vector.broadcast %522 : vector<1x128xf32> to vector<2x128xf32>
    %534 = arith.mulf %532, %533 : vector<2x128xf32>
    %c0_223 = arith.constant 0 : index
    %c0_224 = arith.constant 0 : index
    %535 = vector.load %arg9[%c0_223, %c0_224] : memref<128x256xbf16, #tpu.memory_space<vmem>>, vector<128x256xbf16>
    %536 = arith.truncf %534 : vector<2x128xf32> to vector<2x128xbf16>
    %cst_225 = arith.constant dense<0.000000e+00> : vector<2x256xf32>
    %537 = tpu.matmul %536, %535, %cst_225 {dimension_numbers = #tpu.dot_dimension_numbers<[1], [0], [0], [1], [0, 0, 1, 1], [], []>} : vector<2x128xbf16>, vector<128x256xbf16>, vector<2x256xf32> -> vector<2x256xf32>
    %c0_226 = arith.constant 0 : index
    %c0_227 = arith.constant 0 : index
    %538 = vector.load %arg12[%c0_226, %c0_227] : memref<2x256xf32, #tpu.memory_space<vmem>>, vector<2x256xf32>
    tpu.vector_store %arg12[%c0_226, %c0_227], %537 {strides = array<i32>} : memref<2x256xf32, #tpu.memory_space<vmem>>, vector<2x256xf32>,
    return
  }
}

</mosaic_0001>

<llo_original>
// kernel: neg.47
$region0: #{neg.47}
  #allocation0 [shape = 's32[1]{0}', space=sflag, size = 0x4, scoped, tag = 'scoped memory for neg.47']
  %s0 = inlined_call_operand.vmem [shape: f32[2,256], index: 0, kind: input, shape index: {}]
  %s1 = inlined_call_operand.vmem [shape: f32[2,256], index: 1, kind: output, shape index: {}]
  %v2 = vld [vmem:[%s0] sm:$0x3]
  %3 = xla_tuple %v2
  %4 = xla_tuple %3
  %v5 = vxor.u32 %v2, 2147483648
  %6 = xla_tuple %v5
  %7 = vst [vmem:[%s1] sm:$0x3] %v5
  %s8 = scalar_lea.vmem %s0, 2
  %v9 = vld [vmem:[%s8] sm:$0x3]
  %10 = xla_tuple %v9
  %11 = xla_tuple %10
  %v12 = vxor.u32 %v9, 2147483648
  %13 = xla_tuple %v12
  %s14 = scalar_lea.vmem %s1, 2
  %15 = vst [vmem:[%s14] sm:$0x3] %v12

// kernel: closed_call.23
$region0: #{closed_call.23}
  #allocation0 [shape = 'u32[]', space=smem, size = 0x4, offset = 0x4, fixed_abs, tag = 'smem constant byte address 0x4 - core index']
  #allocation1 [shape = 'u32[144,128]{1,0:T(1,128)}', space=vmem, size = 0x12000, scoped, tag = 'internal scratch']
  #allocation2 [shape = 's32[1]{0:T(128)S(6)}', space=smem, size = 0x200, scoped, tag = 'scoped memory for closed_call.23']
  %s0 = inlined_call_operand.<no memory space> [shape: s32[1], index: 0, kind: input, shape index: {}]
  %s1 = inlined_call_operand.vmem [shape: f32[2,128], index: 1, kind: input, shape index: {}]
  %s2 = inlined_call_operand.vmem [shape: f32[2,1,128], index: 2, kind: input, shape index: {}]
  %s3 = inlined_call_operand.hbm [shape: bf16[2,128,384], index: 3, kind: input, shape index: {}]
  %s4 = inlined_call_operand.hbm [shape: bf16[2,128,128], index: 4, kind: input, shape index: {}]
  %s5 = inlined_call_operand.vmem [shape: f32[2,1,128], index: 5, kind: input, shape index: {}]
  %s6 = inlined_call_operand.vmem [shape: bf16[2,128,512], index: 6, kind: input, shape index: {}]
  %s7 = inlined_call_operand.hbm [shape: bf16[2,256,128], index: 7, kind: input, shape index: {}]
  %s8 = inlined_call_operand.vmem [shape: f32[1,128], index: 8, kind: input, shape index: {}]
  %s9 = inlined_call_operand.hbm [shape: bf16[128,256], index: 9, kind: input, shape index: {}]
  %s10 = inlined_call_operand.vmem [shape: f32[2,2,64,128], index: 10, kind: input, shape index: {}, may-alias: {10,13}]
  %s11 = inlined_call_operand.vmem [shape: f32[2,2,64,128], index: 11, kind: input, shape index: {}, may-alias: {11,14}]
  %s12 = inlined_call_operand.vmem [shape: f32[2,256], index: 12, kind: output, shape index: {0}]
  %s13 = inlined_call_operand.vmem [shape: f32[2,2,64,128], index: 13, kind: output, shape index: {1}, may-alias: {10,13}]
  %s14 = inlined_call_operand.vmem [shape: f32[2,2,64,128], index: 14, kind: output, shape index: {2}, may-alias: {11,14}]
  %15 = xla_tuple %s12, %s13, %s14
  %s16 = sld [smem:[#allocation0]]
  $region90: #{closed_call.23} parent=0
    _
  %s18 = ssub.s32 1, %s16
  %s19 = scalar_select 0, %s18, %s16
  %20 = sst [smem:[#allocation2]] %s0
  $region1: #{closed_call.23} parent=0
    #allocation3 [shape = 'u8[196608]{0}', space=vmem, size = 0x30000, scoped, tag = 'input window, operand 3, single buffered']
    #allocation4 [shape = 's32[1]{0}', space=sflag, size = 0x4, scoped, tag = 'scoped memory for closed_call.23']
    #allocation5 [shape = 'u8[65536]{0}', space=vmem, size = 0x10000, scoped, tag = 'input window, operand 4, single buffered']
    #allocation6 [shape = 's32[1]{0}', space=sflag, size = 0x4, scoped, tag = 'scoped memory for closed_call.23']
    #allocation7 [shape = 'u8[131072]{0}', space=vmem, size = 0x20000, scoped, tag = 'input window, operand 7, single buffered']
    #allocation8 [shape = 'u8[65536]{0}', space=vmem, size = 0x10000, scoped, tag = 'input window, operand 9, single buffered']
    #allocation9 [shape = 's32[1]{0}', space=sflag, size = 0x4, scoped, tag = 'scoped memory for closed_call.23']
    %21 = vsyncpa [#allocation4], 0
    %22 = vsyncpa [#allocation6], 0
    %23 = vsyncpa [#allocation9], 0
    // Predicated region
    $region2: #{closed_call.23} parent=1 // pred_check
      _
    $region3: #{closed_call.23} parent=1 // pred_check_branch
      %25 = sbr.rel (0) target = $region5
    $region4: #{closed_call.23} parent=1 // pred_region
      _
    $region5: #{closed_call.23} parent=1 // pred_fallthru
      _
    // Predicated region
    $region6: #{closed_call.23} parent=1 // pred_check
      _
    $region7: #{closed_call.23} parent=1 // pred_check_branch
      %27 = sbr.rel (0) target = $region9
    $region8: #{closed_call.23} parent=1 // pred_region
      _
    $region9: #{closed_call.23} parent=1 // pred_fallthru
      _
    // Predicated region
    $region10: #{closed_call.23} parent=1 // pred_check
      _
    $region11: #{closed_call.23} parent=1 // pred_check_branch
      %29 = sbr.rel (0) target = $region13
    $region12: #{closed_call.23} parent=1 // pred_region
      _
    $region13: #{closed_call.23} parent=1 // pred_fallthru
      _
    // Predicated region
    $region14: #{closed_call.23} parent=1 // pred_check
      _
    $region15: #{closed_call.23} parent=1 // pred_check_branch
      %31 = sbr.rel (0) target = $region17
    $region16: #{closed_call.23} parent=1 // pred_region
      %s33 = ssub.s32 6144, 6144
      %34 = vsyncadd [#allocation4], %s33
      %s35 = sshll.u32 [#allocation3], 4
      %s36 = int_to_ptr.vmem [resolvable:$true] %s35
      %41 = dma.hbm_to_vmem [thread:$0]  %s3, 6144, %s36, [#allocation4], 192, 192, 12
    $region17: #{closed_call.23} parent=1 // pred_fallthru
      _
    // Predicated region
    $region18: #{closed_call.23} parent=1 // pred_check
      _
    $region19: #{closed_call.23} parent=1 // pred_check_branch
      %43 = sbr.rel (0) target = $region21
    $region20: #{closed_call.23} parent=1 // pred_region
      %s45 = ssub.s32 2048, 2048
      %46 = vsyncadd [#allocation6], %s45
      %s47 = sshll.u32 [#allocation5], 4
      %s48 = int_to_ptr.vmem [resolvable:$true] %s47
      %53 = dma.hbm_to_vmem [thread:$0]  %s4, 2048, %s48, [#allocation6], 64, 64, 4
    $region21: #{closed_call.23} parent=1 // pred_fallthru
      _
    // Predicated region
    $region22: #{closed_call.23} parent=1 // pred_check
      _
    $region23: #{closed_call.23} parent=1 // pred_check_branch
      %55 = sbr.rel (0) target = $region25
    $region24: #{closed_call.23} parent=1 // pred_region
      _
    $region25: #{closed_call.23} parent=1 // pred_fallthru
      _
    // Predicated region
    $region26: #{closed_call.23} parent=1 // pred_check
      _
    $region27: #{closed_call.23} parent=1 // pred_check_branch
      %57 = sbr.rel (0) target = $region29
    $region28: #{closed_call.23} parent=1 // pred_region
      _
    $region29: #{closed_call.23} parent=1 // pred_fallthru
      _
    // Predicated region
    $region30: #{closed_call.23} parent=1 // pred_check
      _
    $region31: #{closed_call.23} parent=1 // pred_check_branch
      %59 = sbr.rel (0) target = $region33
    $region32: #{closed_call.23} parent=1 // pred_region
      %s61 = ssub.s32 4096, 4096
      %62 = vsyncadd [#allocation6], %s61
      %s63 = sshll.u32 [#allocation7], 4
      %s64 = int_to_ptr.vmem [resolvable:$true] %s63
      %69 = dma.hbm_to_vmem [thread:$0]  %s7, 4096, %s64, [#allocation6], 64, 64, 4
    $region33: #{closed_call.23} parent=1 // pred_fallthru
      _
    // Predicated region
    $region34: #{closed_call.23} parent=1 // pred_check
      _
    $region35: #{closed_call.23} parent=1 // pred_check_branch
      %71 = sbr.rel (0) target = $region37
    $region36: #{closed_call.23} parent=1 // pred_region
      _
    $region37: #{closed_call.23} parent=1 // pred_fallthru
      _
    // Predicated region
    $region38: #{closed_call.23} parent=1 // pred_check
      _
    $region39: #{closed_call.23} parent=1 // pred_check_branch
      %73 = sbr.rel (0) target = $region41
    $region40: #{closed_call.23} parent=1 // pred_region
      %s75 = ssub.s32 2048, 2048
      %76 = vsyncadd [#allocation9], %s75
      %s77 = sshll.u32 [#allocation8], 4
      %s78 = int_to_ptr.vmem [resolvable:$true] %s77
      %83 = dma.hbm_to_vmem [thread:$0]  %s9, 2048, %s78, [#allocation9], 128, 128, 8
    $region41: #{closed_call.23} parent=1 // pred_fallthru
      _
    // Predicated region
    $region42: #{closed_call.23} parent=1 // pred_check
      _
    $region43: #{closed_call.23} parent=1 // pred_check_branch
      %85 = sbr.rel (0) target = $region45
    $region44: #{closed_call.23} parent=1 // pred_region
      _
    $region45: #{closed_call.23} parent=1 // pred_fallthru
      _
    // Predicated region
    $region46: #{closed_call.23} parent=1 // pred_check
      _
    $region47: #{closed_call.23} parent=1 // pred_check_branch
      %87 = sbr.rel (0) target = $region49
    $region48: #{closed_call.23} parent=1 // pred_region
      _
    $region49: #{closed_call.23} parent=1 // pred_fallthru
      _
    // Predicated region
    $region50: #{closed_call.23} parent=1 // pred_check
      _
    $region51: #{closed_call.23} parent=1 // pred_check_branch
      %89 = sbr.rel (0) target = $region53
    $region52: #{closed_call.23} parent=1 // pred_region
      %90 = dma.done [#allocation4], 6144
    $region53: #{closed_call.23} parent=1 // pred_fallthru
      _
    // Predicated region
    $region54: #{closed_call.23} parent=1 // pred_check
      _
    $region55: #{closed_call.23} parent=1 // pred_check_branch
      %92 = sbr.rel (0) target = $region57
    $region56: #{closed_call.23} parent=1 // pred_region
      %93 = dma.done [#allocation6], 2048
    $region57: #{closed_call.23} parent=1 // pred_fallthru
      _
    // Predicated region
    $region58: #{closed_call.23} parent=1 // pred_check
      _
    $region59: #{closed_call.23} parent=1 // pred_check_branch
      %95 = sbr.rel (0) target = $region61
    $region60: #{closed_call.23} parent=1 // pred_region
      %96 = dma.done [#allocation6], 4096
    $region61: #{closed_call.23} parent=1 // pred_fallthru
      _
    // Predicated region
    $region62: #{closed_call.23} parent=1 // pred_check
      _
    $region63: #{closed_call.23} parent=1 // pred_check_branch
      %98 = sbr.rel (0) target = $region65
    $region64: #{closed_call.23} parent=1 // pred_region
      %99 = dma.done [#allocation9], 2048
    $region65: #{closed_call.23} parent=1 // pred_fallthru
      _
    %s101 = sld [smem:[#allocation2]]
    %v102 = vld [vmem:[%s1] sm:$0x3]
    %v103 = vlaneseq
    %v104 = vand.u32 %v103, 127
    %v105 = vlaneseq
    %v106 = vshrl.u32 %v105, 7
    %v107 = vadd.s32 %v106, 8
    %v108 = vadd.s32 %v106, 16
    %v109 = vadd.s32 %v106, 24
    %v110 = vadd.s32 %v106, 32
    %v111 = vadd.s32 %v106, 40
    %v112 = vadd.s32 %v106, 48
    %v113 = vadd.s32 %v106, 56
    %v114 = vstv %s101
    %vm115 = vcmp.le.s32.totalorder %v104, %v114
    %vm116 = vcmp.eq.s32.totalorder %v106, %v114
    %vm117 = vcmp.eq.s32.totalorder %v107, %v114
    %vm118 = vcmp.eq.s32.totalorder %v108, %v114
    %vm119 = vcmp.eq.s32.totalorder %v109, %v114
    %vm120 = vcmp.eq.s32.totalorder %v110, %v114
    %vm121 = vcmp.eq.s32.totalorder %v111, %v114
    %vm122 = vcmp.eq.s32.totalorder %v112, %v114
    %vm123 = vcmp.eq.s32.totalorder %v113, %v114
    %v124 = vld [vmem:[%s2] sm:$0x1]
    %v125 = vmul.f32 %v102, %v102
    %vm126 = vcmask 1041408
    %v127 = vsel %vm126, %v125, 0.0
    %128 = vadd.xlane.f32.xlu0 %v127
    %v129 = vpop.xlane.xlu0 %128
    %v130 = vrcp.pop 128.0
    %v131 = vmul.f32 %v129, %v130
    %v132 = vadd.f32 %v131, 1e-05
    %v133 = vrsqrt.pop %v132
    %v134 = vmul.f32 %v102, %v133
    %v136 = vlaneseq
    %v137 = vshrl.u32 %v136, 7
    %v138 = vsub.s32 0, %v137
    %v139 = vrot.slane %v124, %v138
    %v141 = vmul.f32 %v134, %v139
    %v142 = vld [vmem:[#allocation3] sm:$0xff]
    %v143 = vld [vmem:[#allocation3 + $0x8] sm:$0xf]
    %v144 = vld [vmem:[#allocation3 + $0xc] sm:$0xff]
    %v145 = vld [vmem:[#allocation3 + $0x14] sm:$0xf]
    %v146 = vld [vmem:[#allocation3 + $0x18] sm:$0xff]
    %v147 = vld [vmem:[#allocation3 + $0x20] sm:$0xf]
    %v148 = vld [vmem:[#allocation3 + $0x24] sm:$0xff]
    %v149 = vld [vmem:[#allocation3 + $0x2c] sm:$0xf]
    %v150 = vld [vmem:[#allocation3 + $0x30] sm:$0xff]
    %v151 = vld [vmem:[#allocation3 + $0x38] sm:$0xf]
    %v152 = vld [vmem:[#allocation3 + $0x3c] sm:$0xff]
    %v153 = vld [vmem:[#allocation3 + $0x44] sm:$0xf]
    %v154 = vld [vmem:[#allocation3 + $0x48] sm:$0xff]
    %v155 = vld [vmem:[#allocation3 + $0x50] sm:$0xf]
    %v156 = vld [vmem:[#allocation3 + $0x54] sm:$0xff]
    %v157 = vld [vmem:[#allocation3 + $0x5c] sm:$0xf]
    %v158 = vld [vmem:[#allocation3 + $0x60] sm:$0xff]
    %v159 = vld [vmem:[#allocation3 + $0x68] sm:$0xf]
    %v160 = vld [vmem:[#allocation3 + $0x6c] sm:$0xff]
    %v161 = vld [vmem:[#allocation3 + $0x74] sm:$0xf]
    %v162 = vld [vmem:[#allocation3 + $0x78] sm:$0xff]
    %v163 = vld [vmem:[#allocation3 + $0x80] sm:$0xf]
    %v164 = vld [vmem:[#allocation3 + $0x84] sm:$0xff]
    %v165 = vld [vmem:[#allocation3 + $0x8c] sm:$0xf]
    %v166 = vld [vmem:[#allocation3 + $0x90] sm:$0xff]
    %v167 = vld [vmem:[#allocation3 + $0x98] sm:$0xf]
    %v168 = vld [vmem:[#allocation3 + $0x9c] sm:$0xff]
    %v169 = vld [vmem:[#allocation3 + $0xa4] sm:$0xf]
    %v170 = vld [vmem:[#allocation3 + $0xa8] sm:$0xff]
    %v171 = vld [vmem:[#allocation3 + $0xb0] sm:$0xf]
    %v172 = vld [vmem:[#allocation3 + $0xb4] sm:$0xff]
    %v173 = vld [vmem:[#allocation3 + $0xbc] sm:$0xf]
    %v174 = vpack.c.bf16 %v141, %v141
    %v207 = vunpack.c.l.b16 %v142
    %v208 = vunpack.c.h.b16 %v142
    %v209 = vunpack.c.l.b16 %v143
    %v210 = vunpack.c.l.b16 %v144
    %v211 = vunpack.c.h.b16 %v144
    %v212 = vunpack.c.l.b16 %v145
    %v213 = vunpack.c.l.b16 %v146
    %v214 = vunpack.c.h.b16 %v146
    %v215 = vunpack.c.l.b16 %v147
    %v216 = vunpack.c.l.b16 %v148
    %v217 = vunpack.c.h.b16 %v148
    %v218 = vunpack.c.l.b16 %v149
    %v219 = vunpack.c.l.b16 %v150
    %v220 = vunpack.c.h.b16 %v150
    %v221 = vunpack.c.l.b16 %v151
    %v222 = vunpack.c.l.b16 %v152
    %v223 = vunpack.c.h.b16 %v152
    %v224 = vunpack.c.l.b16 %v153
    %v225 = vunpack.c.l.b16 %v154
    %v226 = vunpack.c.h.b16 %v154
    %v227 = vunpack.c.l.b16 %v155
    %v228 = vunpack.c.l.b16 %v156
    %v229 = vunpack.c.h.b16 %v156
    %v230 = vunpack.c.l.b16 %v157
    %v231 = vunpack.c.l.b16 %v158
    %v232 = vunpack.c.h.b16 %v158
    %v233 = vunpack.c.l.b16 %v159
    %v234 = vunpack.c.l.b16 %v160
    %v235 = vunpack.c.h.b16 %v160
    %v236 = vunpack.c.l.b16 %v161
    %v237 = vunpack.c.l.b16 %v162
    %v238 = vunpack.c.h.b16 %v162
    %v239 = vunpack.c.l.b16 %v163
    %v240 = vunpack.c.l.b16 %v164
    %v241 = vunpack.c.h.b16 %v164
    %v242 = vunpack.c.l.b16 %v165
    %v243 = vunpack.c.l.b16 %v166
    %v244 = vunpack.c.h.b16 %v166
    %v245 = vunpack.c.l.b16 %v167
    %v246 = vunpack.c.l.b16 %v168
    %v247 = vunpack.c.h.b16 %v168
    %v248 = vunpack.c.l.b16 %v169
    %v249 = vunpack.c.l.b16 %v170
    %v250 = vunpack.c.h.b16 %v170
    %v251 = vunpack.c.l.b16 %v171
    %v252 = vunpack.c.l.b16 %v172
    %v253 = vunpack.c.h.b16 %v172
    %v254 = vunpack.c.l.b16 %v173
    %v255 = vpack.c.b16 %v210, %v207
    %v256 = vpack.c.b16 %v211, %v208
    %v257 = vpack.c.b16 %v212, %v209
    %v258 = vpack.c.b16 %v216, %v213
    %v259 = vpack.c.b16 %v217, %v214
    %v260 = vpack.c.b16 %v218, %v215
    %v261 = vpack.c.b16 %v222, %v219
    %v262 = vpack.c.b16 %v223, %v220
    %v263 = vpack.c.b16 %v224, %v221
    %v264 = vpack.c.b16 %v228, %v225
    %v265 = vpack.c.b16 %v229, %v226
    %v266 = vpack.c.b16 %v230, %v227
    %v267 = vpack.c.b16 %v234, %v231
    %v268 = vpack.c.b16 %v235, %v232
    %v269 = vpack.c.b16 %v236, %v233
    %v270 = vpack.c.b16 %v240, %v237
    %v271 = vpack.c.b16 %v241, %v238
    %v272 = vpack.c.b16 %v242, %v239
    %v273 = vpack.c.b16 %v246, %v243
    %v274 = vpack.c.b16 %v247, %v244
    %v275 = vpack.c.b16 %v248, %v245
    %v276 = vpack.c.b16 %v252, %v249
    %v277 = vpack.c.b16 %v253, %v250
    %v278 = vpack.c.b16 %v254, %v251
    %303 = vmatprep.subr.bf16.mxu0 %v277
    %304 = vmatpush1.bf16.msra.mxu0 %v276
    %305 = vmatprep.subr.bf16.mxu0 %v274
    %306 = vmatpush1.bf16.msra.mxu0 %v273
    %307 = vmatprep.subr.bf16.mxu0 %v271
    %308 = vmatpush1.bf16.msra.mxu0 %v270
    %309 = vmatprep.subr.bf16.mxu0 %v268
    %310 = vmatpush1.bf16.msra.mxu0 %v267
    %311 = vmatprep.subr.bf16.mxu0 %v265
    %312 = vmatpush1.bf16.msra.mxu0 %v264
    %313 = vmatprep.subr.bf16.mxu0 %v262
    %314 = vmatpush1.bf16.msra.mxu0 %v261
    %315 = vmatprep.subr.bf16.mxu0 %v259
    %316 = vmatpush1.bf16.msra.mxu0 %v258
    %317 = vmatprep.subr.bf16.mxu0 %v256
    %318 = vmatpush1.bf16.msra.mxu0 %v255
    %319 = vmatprep.subr.bf16.mxu0 0
    %320 = vmatpush2.bf16.msra.mxu0 0
    %321 = vmatprep.subr.bf16.mxu0 0
    %322 = vmatpush2.bf16.msra.mxu0 0
    %323 = vmatprep.subr.bf16.mxu0 0
    %324 = vmatpush2.bf16.msra.mxu0 0
    %325 = vmatprep.subr.bf16.mxu0 0
    %326 = vmatpush2.bf16.msra.mxu0 0
    %327 = vmatprep.subr.bf16.mxu0 0
    %328 = vmatpush2.bf16.msra.mxu0 0
    %329 = vmatprep.subr.bf16.mxu0 0
    %330 = vmatpush2.bf16.msra.mxu0 0
    %331 = vmatprep.subr.bf16.mxu0 0
    %332 = vmatpush2.bf16.msra.mxu0 0
    %333 = vmatprep.subr.bf16.mxu0 0
    %334 = vmatpush2.bf16.msra.mxu0 0
    %335 = vmatprep.mubr.bf16.mxu0 0
    %336 = vmatmul.mubr.bf16.gmra.mxu0 %v174
    %v337 = vpop.f32.mrf.mxu0
    %v338 = vadd.f32 0.0, %v337
    %v339 = vpop.f32.mrf.mxu0
    %v340 = vadd.f32 0.0, %v339
    %v341 = vpop.f32.mrf.mxu0
    %v342 = vpop.f32.mrf.mxu0
    %343 = vdwg.mxu0
    %344 = vmatprep.subr.bf16.mxu0 0
    %345 = vmatpush1.bf16.msra.mxu0 %v278
    %346 = vmatprep.subr.bf16.mxu0 0
    %347 = vmatpush1.bf16.msra.mxu0 %v275
    %348 = vmatprep.subr.bf16.mxu0 0
    %349 = vmatpush1.bf16.msra.mxu0 %v272
    %350 = vmatprep.subr.bf16.mxu0 0
    %351 = vmatpush1.bf16.msra.mxu0 %v269
    %352 = vmatprep.subr.bf16.mxu0 0
    %353 = vmatpush1.bf16.msra.mxu0 %v266
    %354 = vmatprep.subr.bf16.mxu0 0
    %355 = vmatpush1.bf16.msra.mxu0 %v263
    %356 = vmatprep.subr.bf16.mxu0 0
    %357 = vmatpush1.bf16.msra.mxu0 %v260
    %358 = vmatprep.subr.bf16.mxu0 0
    %359 = vmatpush1.bf16.msra.mxu0 %v257
    %360 = vmatprep.subr.bf16.mxu0 0
    %361 = vmatpush2.bf16.msra.mxu0 0
    %362 = vmatprep.subr.bf16.mxu0 0
    %363 = vmatpush2.bf16.msra.mxu0 0
    %364 = vmatprep.subr.bf16.mxu0 0
    %365 = vmatpush2.bf16.msra.mxu0 0
    %366 = vmatprep.subr.bf16.mxu0 0
    %367 = vmatpush2.bf16.msra.mxu0 0
    %368 = vmatprep.subr.bf16.mxu0 0
    %369 = vmatpush2.bf16.msra.mxu0 0
    %370 = vmatprep.subr.bf16.mxu0 0
    %371 = vmatpush2.bf16.msra.mxu0 0
    %372 = vmatprep.subr.bf16.mxu0 0
    %373 = vmatpush2.bf16.msra.mxu0 0
    %374 = vmatprep.subr.bf16.mxu0 0
    %375 = vmatpush2.bf16.msra.mxu0 0
    %376 = vmatprep.mubr.bf16.mxu0 0
    %377 = vmatmul.mubr.bf16.gmra.mxu0 %v174
    %v378 = vpop.f32.mrf.mxu0
    %v379 = vadd.f32 0.0, %v378
    %v380 = vpop.f32.mrf.mxu0
    %v381 = vpop.f32.mrf.mxu0
    %v382 = vpop.f32.mrf.mxu0
    %383 = vdwg.mxu0
    %v384 = vld [vmem:[%s10] sm:$0xff]
    %v385 = vld [vmem:[%s10 + $0x8] sm:$0xff]
    %v386 = vld [vmem:[%s10 + $0x10] sm:$0xff]
    %v387 = vld [vmem:[%s10 + $0x18] sm:$0xff]
    %v388 = vld [vmem:[%s10 + $0x20] sm:$0xff]
    %v389 = vld [vmem:[%s10 + $0x28] sm:$0xff]
    %v390 = vld [vmem:[%s10 + $0x30] sm:$0xff]
    %v391 = vld [vmem:[%s10 + $0x38] sm:$0xff]
    %v392 = vsel %vm116, 1, 0
    %v393 = vsel %vm117, 1, 0
    %v394 = vsel %vm118, 1, 0
    %v395 = vsel %vm119, 1, 0
    %v396 = vsel %vm120, 1, 0
    %v397 = vsel %vm121, 1, 0
    %v398 = vsel %vm122, 1, 0
    %v399 = vsel %vm123, 1, 0
    %vm400 = vcmp.eq.s32.totalorder %v392, 1
    %vm401 = vcmp.eq.s32.totalorder %v393, 1
    %vm402 = vcmp.eq.s32.totalorder %v394, 1
    %vm403 = vcmp.eq.s32.totalorder %v395, 1
    %vm404 = vcmp.eq.s32.totalorder %v396, 1
    %vm405 = vcmp.eq.s32.totalorder %v397, 1
    %vm406 = vcmp.eq.s32.totalorder %v398, 1
    %vm407 = vcmp.eq.s32.totalorder %v399, 1
    %v408 = vlaneseq
    %v409 = vshrl.u32 %v408, 7
    %v410 = vsub.s32 0, %v409
    %v411 = vrot.slane %v340, %v410
    %v412 = vsel %vm400, %v411, %v384
    %v413 = vsel %vm401, %v411, %v385
    %v414 = vsel %vm402, %v411, %v386
    %v415 = vsel %vm403, %v411, %v387
    %v416 = vsel %vm404, %v411, %v388
    %v417 = vsel %vm405, %v411, %v389
    %v418 = vsel %vm406, %v411, %v390
    %v419 = vsel %vm407, %v411, %v391
    %v420 = vld [vmem:[%s11] sm:$0xff]
    %v421 = vld [vmem:[%s11 + $0x8] sm:$0xff]
    %v422 = vld [vmem:[%s11 + $0x10] sm:$0xff]
    %v423 = vld [vmem:[%s11 + $0x18] sm:$0xff]
    %v424 = vld [vmem:[%s11 + $0x20] sm:$0xff]
    %v425 = vld [vmem:[%s11 + $0x28] sm:$0xff]
    %v426 = vld [vmem:[%s11 + $0x30] sm:$0xff]
    %v427 = vld [vmem:[%s11 + $0x38] sm:$0xff]
    %v428 = vlaneseq
    %v429 = vshrl.u32 %v428, 7
    %v430 = vsub.s32 0, %v429
    %v431 = vrot.slane %v379, %v430
    %v432 = vsel %vm400, %v431, %v420
    %v433 = vsel %vm401, %v431, %v421
    %v434 = vsel %vm402, %v431, %v422
    %v435 = vsel %vm403, %v431, %v423
    %v436 = vsel %vm404, %v431, %v424
    %v437 = vsel %vm405, %v431, %v425
    %v438 = vsel %vm406, %v431, %v426
    %v439 = vsel %vm407, %v431, %v427
    %440 = vst [vmem:[%s13] sm:$0xff] %v412
    %441 = vst [vmem:[%s13 + $0x8] sm:$0xff] %v413
    %442 = vst [vmem:[%s13 + $0x10] sm:$0xff] %v414
    %443 = vst [vmem:[%s13 + $0x18] sm:$0xff] %v415
    %444 = vst [vmem:[%s13 + $0x20] sm:$0xff] %v416
    %445 = vst [vmem:[%s13 + $0x28] sm:$0xff] %v417
    %446 = vst [vmem:[%s13 + $0x30] sm:$0xff] %v418
    %447 = vst [vmem:[%s13 + $0x38] sm:$0xff] %v419
    %448 = vst [vmem:[%s14] sm:$0xff] %v432
    %449 = vst [vmem:[%s14 + $0x8] sm:$0xff] %v433
    %450 = vst [vmem:[%s14 + $0x10] sm:$0xff] %v434
    %451 = vst [vmem:[%s14 + $0x18] sm:$0xff] %v435
    %452 = vst [vmem:[%s14 + $0x20] sm:$0xff] %v436
    %453 = vst [vmem:[%s14 + $0x28] sm:$0xff] %v437
    %454 = vst [vmem:[%s14 + $0x30] sm:$0xff] %v438
    %455 = vst [vmem:[%s14 + $0x38] sm:$0xff] %v439
    %vm456 = vcmask 261120
    %v458 = vsel %vm456, %v338, 0
    %v461 = vsel %vm456, %v412, 0
    %v464 = vsel %vm456, %v413, 0
    %v467 = vsel %vm456, %v414, 0
    %v470 = vsel %vm456, %v415, 0
    %v473 = vsel %vm456, %v416, 0
    %v476 = vsel %vm456, %v417, 0
    %v479 = vsel %vm456, %v418, 0
    %v482 = vsel %vm456, %v419, 0
    %484 = vmatprep.subr.mxu0 0.0
    %485 = vmatpush1.xpose.msra.mxu0 0.0
    %486 = vmatprep.subr.mxu0 0.0
    %487 = vmatpush1.xpose.msra.mxu0 0.0
    %488 = vmatprep.subr.mxu0 0.0
    %489 = vmatpush1.xpose.msra.mxu0 0.0
    %490 = vmatprep.subr.mxu0 0.0
    %491 = vmatpush1.xpose.msra.mxu0 0.0
    %492 = vmatprep.subr.mxu0 0.0
    %493 = vmatpush1.xpose.msra.mxu0 0.0
    %494 = vmatprep.subr.mxu0 0.0
    %495 = vmatpush1.xpose.msra.mxu0 0.0
    %496 = vmatprep.subr.mxu0 0.0
    %497 = vmatpush1.xpose.msra.mxu0 0.0
    %498 = vmatprep.subr.mxu0 0.0
    %499 = vmatpush1.xpose.msra.mxu0 0.0
    %500 = vmatprep.subr.mxu0 0.0
    %501 = vmatpush1.xpose.msra.mxu0 %v482
    %502 = vmatprep.subr.mxu0 0.0
    %503 = vmatpush1.xpose.msra.mxu0 %v479
    %504 = vmatprep.subr.mxu0 0.0
    %505 = vmatpush1.xpose.msra.mxu0 %v476
    %506 = vmatprep.subr.mxu0 0.0
    %507 = vmatpush1.xpose.msra.mxu0 %v473
    %508 = vmatprep.subr.mxu0 0.0
    %509 = vmatpush1.xpose.msra.mxu0 %v470
    %510 = vmatprep.subr.mxu0 0.0
    %511 = vmatpush1.xpose.msra.mxu0 %v467
    %512 = vmatprep.subr.mxu0 0.0
    %513 = vmatpush1.xpose.msra.mxu0 %v464
    %514 = vmatprep.subr.mxu0 0.0
    %515 = vmatpush1.xpose.msra.mxu0 %v461
    %516 = vmatprep.subr.mxu0 0.0
    %517 = vmatpush2.xpose.msra.mxu0 0.0
    %518 = vmatprep.subr.mxu0 0.0
    %519 = vmatpush2.xpose.msra.mxu0 0.0
    %520 = vmatprep.subr.mxu0 0.0
    %521 = vmatpush2.xpose.msra.mxu0 0.0
    %522 = vmatprep.subr.mxu0 0.0
    %523 = vmatpush2.xpose.msra.mxu0 0.0
    %524 = vmatprep.subr.mxu0 0.0
    %525 = vmatpush2.xpose.msra.mxu0 0.0
    %526 = vmatprep.subr.mxu0 0.0
    %527 = vmatpush2.xpose.msra.mxu0 0.0
    %528 = vmatprep.subr.mxu0 0.0
    %529 = vmatpush2.xpose.msra.mxu0 0.0
    %530 = vmatprep.subr.mxu0 0.0
    %531 = vmatpush2.xpose.msra.mxu0 0.0
    %532 = vmatprep.subr.mxu0 0.0
    %533 = vmatpush2.xpose.msra.mxu0 0.0
    %534 = vmatprep.subr.mxu0 0.0
    %535 = vmatpush2.xpose.msra.mxu0 0.0
    %536 = vmatprep.subr.mxu0 0.0
    %537 = vmatpush2.xpose.msra.mxu0 0.0
    %538 = vmatprep.subr.mxu0 0.0
    %539 = vmatpush2.xpose.msra.mxu0 0.0
    %540 = vmatprep.subr.mxu0 0.0
    %541 = vmatpush2.xpose.msra.mxu0 0.0
    %542 = vmatprep.subr.mxu0 0.0
    %543 = vmatpush2.xpose.msra.mxu0 0.0
    %544 = vmatprep.subr.mxu0 0.0
    %545 = vmatpush2.xpose.msra.mxu0 0.0
    %546 = vmatprep.subr.mxu0 0.0
    %547 = vmatpush2.xpose.msra.mxu0 0.0
    %548 = vmatprep.mubr.f32.mxu0 0.0
    %549 = vmatmul.mubr.f32.gmra.mxu0 %v458
    %v550 = vpop.f32.mrf.mxu0
    %v551 = vadd.f32 0.0, %v550
    %v552 = vpop.f32.mrf.mxu0
    %553 = vdwg.mxu0
    %v554 = vmul.f32 %v551, 0.17677669
    %v555 = vsel %vm115, %v554, -1e+30
    %vm556 = vcmask 516096
    %v557 = vsel %vm556, %v555, -inf
    %558 = vmax.xlane.f32.xlu0 %v557
    %v559 = vpop.xlane.xlu0 %558
    %v560 = vsub.f32 %v555, %v559
    %v561 = vmul.f32 %v560, 1.442695
    %v562 = vpow.pop %v561
    %v563 = vsel %vm556, %v562, 0.0
    %564 = vadd.xlane.f32.xlu0 %v563
    %v565 = vpop.xlane.xlu0 %564
    %v566 = vrcp.pop %v565
    %v567 = vmul.f32 %v562, %v566
    %vm568 = vcmask 523264
    %v570 = vsel %vm568, %v567, 0
    %572 = vmatprep.subr.mxu0 0.0
    %573 = vmatpush1.msra.mxu0 0.0
    %574 = vmatprep.subr.mxu0 0.0
    %575 = vmatpush1.msra.mxu0 0.0
    %576 = vmatprep.subr.mxu0 0.0
    %577 = vmatpush1.msra.mxu0 0.0
    %578 = vmatprep.subr.mxu0 0.0
    %579 = vmatpush1.msra.mxu0 0.0
    %580 = vmatprep.subr.mxu0 0.0
    %581 = vmatpush1.msra.mxu0 0.0
    %582 = vmatprep.subr.mxu0 0.0
    %583 = vmatpush1.msra.mxu0 0.0
    %584 = vmatprep.subr.mxu0 0.0
    %585 = vmatpush1.msra.mxu0 0.0
    %586 = vmatprep.subr.mxu0 0.0
    %587 = vmatpush1.msra.mxu0 0.0
    %588 = vmatprep.subr.mxu0 0.0
    %589 = vmatpush1.msra.mxu0 %v439
    %590 = vmatprep.subr.mxu0 0.0
    %591 = vmatpush1.msra.mxu0 %v438
    %592 = vmatprep.subr.mxu0 0.0
    %593 = vmatpush1.msra.mxu0 %v437
    %594 = vmatprep.subr.mxu0 0.0
    %595 = vmatpush1.msra.mxu0 %v436
    %596 = vmatprep.subr.mxu0 0.0
    %597 = vmatpush1.msra.mxu0 %v435
    %598 = vmatprep.subr.mxu0 0.0
    %599 = vmatpush1.msra.mxu0 %v434
    %600 = vmatprep.subr.mxu0 0.0
    %601 = vmatpush1.msra.mxu0 %v433
    %602 = vmatprep.subr.mxu0 0.0
    %603 = vmatpush1.msra.mxu0 %v432
    %604 = vmatprep.subr.mxu0 0.0
    %605 = vmatpush2.msra.mxu0 0.0
    %606 = vmatprep.subr.mxu0 0.0
    %607 = vmatpush2.msra.mxu0 0.0
    %608 = vmatprep.subr.mxu0 0.0
    %609 = vmatpush2.msra.mxu0 0.0
    %610 = vmatprep.subr.mxu0 0.0
    %611 = vmatpush2.msra.mxu0 0.0
    %612 = vmatprep.subr.mxu0 0.0
    %613 = vmatpush2.msra.mxu0 0.0
    %614 = vmatprep.subr.mxu0 0.0
    %615 = vmatpush2.msra.mxu0 0.0
    %616 = vmatprep.subr.mxu0 0.0
    %617 = vmatpush2.msra.mxu0 0.0
    %618 = vmatprep.subr.mxu0 0.0
    %619 = vmatpush2.msra.mxu0 0.0
    %620 = vmatprep.subr.mxu0 0.0
    %621 = vmatpush2.msra.mxu0 0.0
    %622 = vmatprep.subr.mxu0 0.0
    %623 = vmatpush2.msra.mxu0 0.0
    %624 = vmatprep.subr.mxu0 0.0
    %625 = vmatpush2.msra.mxu0 0.0
    %626 = vmatprep.subr.mxu0 0.0
    %627 = vmatpush2.msra.mxu0 0.0
    %628 = vmatprep.subr.mxu0 0.0
    %629 = vmatpush2.msra.mxu0 0.0
    %630 = vmatprep.subr.mxu0 0.0
    %631 = vmatpush2.msra.mxu0 0.0
    %632 = vmatprep.subr.mxu0 0.0
    %633 = vmatpush2.msra.mxu0 0.0
    %634 = vmatprep.subr.mxu0 0.0
    %635 = vmatpush2.msra.mxu0 0.0
    %636 = vmatprep.mubr.f32.mxu0 0.0
    %637 = vmatmul.mubr.f32.gmra.mxu0 %v570
    %v638 = vpop.f32.mrf.mxu0
    %v639 = vadd.f32 0.0, %v638
    %v640 = vpop.f32.mrf.mxu0
    %641 = vdwg.mxu0
    %642 = vrot.lane.b32.xlu0 %v338, 96
    %v643 = vpop.permute.xlu0 %642
    %644 = vrot.lane.b32.xlu0 %v412, 96
    %v645 = vpop.permute.xlu0 %644
    %646 = vrot.lane.b32.xlu0 %v413, 96
    %v647 = vpop.permute.xlu0 %646
    %648 = vrot.lane.b32.xlu0 %v414, 96
    %v649 = vpop.permute.xlu0 %648
    %650 = vrot.lane.b32.xlu0 %v415, 96
    %v651 = vpop.permute.xlu0 %650
    %652 = vrot.lane.b32.xlu0 %v416, 96
    %v653 = vpop.permute.xlu0 %652
    %654 = vrot.lane.b32.xlu0 %v417, 96
    %v655 = vpop.permute.xlu0 %654
    %656 = vrot.lane.b32.xlu0 %v418, 96
    %v657 = vpop.permute.xlu0 %656
    %658 = vrot.lane.b32.xlu0 %v419, 96
    %v659 = vpop.permute.xlu0 %658
    %v660 = vsel %vm456, %v643, 0
    %v662 = vsel %vm456, %v645, 0
    %v664 = vsel %vm456, %v647, 0
    %v666 = vsel %vm456, %v649, 0
    %v668 = vsel %vm456, %v651, 0
    %v670 = vsel %vm456, %v653, 0
    %v672 = vsel %vm456, %v655, 0
    %v674 = vsel %vm456, %v657, 0
    %v676 = vsel %vm456, %v659, 0
    %678 = vmatprep.subr.mxu0 0.0
    %679 = vmatpush1.xpose.msra.mxu0 0.0
    %680 = vmatprep.subr.mxu0 0.0
    %681 = vmatpush1.xpose.msra.mxu0 0.0
    %682 = vmatprep.subr.mxu0 0.0
    %683 = vmatpush1.xpose.msra.mxu0 0.0
    %684 = vmatprep.subr.mxu0 0.0
    %685 = vmatpush1.xpose.msra.mxu0 0.0
    %686 = vmatprep.subr.mxu0 0.0
    %687 = vmatpush1.xpose.msra.mxu0 0.0
    %688 = vmatprep.subr.mxu0 0.0
    %689 = vmatpush1.xpose.msra.mxu0 0.0
    %690 = vmatprep.subr.mxu0 0.0
    %691 = vmatpush1.xpose.msra.mxu0 0.0
    %692 = vmatprep.subr.mxu0 0.0
    %693 = vmatpush1.xpose.msra.mxu0 0.0
    %694 = vmatprep.subr.mxu0 0.0
    %695 = vmatpush1.xpose.msra.mxu0 %v676
    %696 = vmatprep.subr.mxu0 0.0
    %697 = vmatpush1.xpose.msra.mxu0 %v674
    %698 = vmatprep.subr.mxu0 0.0
    %699 = vmatpush1.xpose.msra.mxu0 %v672
    %700 = vmatprep.subr.mxu0 0.0
    %701 = vmatpush1.xpose.msra.mxu0 %v670
    %702 = vmatprep.subr.mxu0 0.0
    %703 = vmatpush1.xpose.msra.mxu0 %v668
    %704 = vmatprep.subr.mxu0 0.0
    %705 = vmatpush1.xpose.msra.mxu0 %v666
    %706 = vmatprep.subr.mxu0 0.0
    %707 = vmatpush1.xpose.msra.mxu0 %v664
    %708 = vmatprep.subr.mxu0 0.0
    %709 = vmatpush1.xpose.msra.mxu0 %v662
    %710 = vmatprep.subr.mxu0 0.0
    %711 = vmatpush2.xpose.msra.mxu0 0.0
    %712 = vmatprep.subr.mxu0 0.0
    %713 = vmatpush2.xpose.msra.mxu0 0.0
    %714 = vmatprep.subr.mxu0 0.0
    %715 = vmatpush2.xpose.msra.mxu0 0.0
    %716 = vmatprep.subr.mxu0 0.0
    %717 = vmatpush2.xpose.msra.mxu0 0.0
    %718 = vmatprep.subr.mxu0 0.0
    %719 = vmatpush2.xpose.msra.mxu0 0.0
    %720 = vmatprep.subr.mxu0 0.0
    %721 = vmatpush2.xpose.msra.mxu0 0.0
    %722 = vmatprep.subr.mxu0 0.0
    %723 = vmatpush2.xpose.msra.mxu0 0.0
    %724 = vmatprep.subr.mxu0 0.0
    %725 = vmatpush2.xpose.msra.mxu0 0.0
    %726 = vmatprep.subr.mxu0 0.0
    %727 = vmatpush2.xpose.msra.mxu0 0.0
    %728 = vmatprep.subr.mxu0 0.0
    %729 = vmatpush2.xpose.msra.mxu0 0.0
    %730 = vmatprep.subr.mxu0 0.0
    %731 = vmatpush2.xpose.msra.mxu0 0.0
    %732 = vmatprep.subr.mxu0 0.0
    %733 = vmatpush2.xpose.msra.mxu0 0.0
    %734 = vmatprep.subr.mxu0 0.0
    %735 = vmatpush2.xpose.msra.mxu0 0.0
    %736 = vmatprep.subr.mxu0 0.0
    %737 = vmatpush2.xpose.msra.mxu0 0.0
    %738 = vmatprep.subr.mxu0 0.0
    %739 = vmatpush2.xpose.msra.mxu0 0.0
    %740 = vmatprep.subr.mxu0 0.0
    %741 = vmatpush2.xpose.msra.mxu0 0.0
    %742 = vmatprep.mubr.f32.mxu0 0.0
    %743 = vmatmul.mubr.f32.gmra.mxu0 %v660
    %v744 = vpop.f32.mrf.mxu0
    %v745 = vadd.f32 0.0, %v744
    %v746 = vpop.f32.mrf.mxu0
    %747 = vdwg.mxu0
    %v748 = vmul.f32 %v745, 0.17677669
    %v749 = vsel %vm115, %v748, -1e+30
    %v750 = vsel %vm556, %v749, -inf
    %751 = vmax.xlane.f32.xlu0 %v750
    %v752 = vpop.xlane.xlu0 %751
    %v753 = vsub.f32 %v749, %v752
    %v754 = vmul.f32 %v753, 1.442695
    %v755 = vpow.pop %v754
    %v756 = vsel %vm556, %v755, 0.0
    %757 = vadd.xlane.f32.xlu0 %v756
    %v758 = vpop.xlane.xlu0 %757
    %v759 = vrcp.pop %v758
    %v760 = vmul.f32 %v755, %v759
    %769 = vrot.lane.b32.xlu0 %v432, 96
    %v770 = vpop.permute.xlu0 %769
    %771 = vrot.lane.b32.xlu0 %v433, 96
    %v772 = vpop.permute.xlu0 %771
    %773 = vrot.lane.b32.xlu0 %v434, 96
    %v774 = vpop.permute.xlu0 %773
    %775 = vrot.lane.b32.xlu0 %v435, 96
    %v776 = vpop.permute.xlu0 %775
    %777 = vrot.lane.b32.xlu0 %v436, 96
    %v778 = vpop.permute.xlu0 %777
    %779 = vrot.lane.b32.xlu0 %v437, 96
    %v780 = vpop.permute.xlu0 %779
    %781 = vrot.lane.b32.xlu0 %v438, 96
    %v782 = vpop.permute.xlu0 %781
    %783 = vrot.lane.b32.xlu0 %v439, 96
    %v784 = vpop.permute.xlu0 %783
    %v794 = vsel %vm568, %v760, 0
    %796 = vmatprep.subr.mxu0 0.0
    %797 = vmatpush1.msra.mxu0 0.0
    %798 = vmatprep.subr.mxu0 0.0
    %799 = vmatpush1.msra.mxu0 0.0
    %800 = vmatprep.subr.mxu0 0.0
    %801 = vmatpush1.msra.mxu0 0.0
    %802 = vmatprep.subr.mxu0 0.0
    %803 = vmatpush1.msra.mxu0 0.0
    %804 = vmatprep.subr.mxu0 0.0
    %805 = vmatpush1.msra.mxu0 0.0
    %806 = vmatprep.subr.mxu0 0.0
    %807 = vmatpush1.msra.mxu0 0.0
    %808 = vmatprep.subr.mxu0 0.0
    %809 = vmatpush1.msra.mxu0 0.0
    %810 = vmatprep.subr.mxu0 0.0
    %811 = vmatpush1.msra.mxu0 0.0
    %812 = vmatprep.subr.mxu0 0.0
    %813 = vmatpush1.msra.mxu0 %v784
    %814 = vmatprep.subr.mxu0 0.0
    %815 = vmatpush1.msra.mxu0 %v782
    %816 = vmatprep.subr.mxu0 0.0
    %817 = vmatpush1.msra.mxu0 %v780
    %818 = vmatprep.subr.mxu0 0.0
    %819 = vmatpush1.msra.mxu0 %v778
    %820 = vmatprep.subr.mxu0 0.0
    %821 = vmatpush1.msra.mxu0 %v776
    %822 = vmatprep.subr.mxu0 0.0
    %823 = vmatpush1.msra.mxu0 %v774
    %824 = vmatprep.subr.mxu0 0.0
    %825 = vmatpush1.msra.mxu0 %v772
    %826 = vmatprep.subr.mxu0 0.0
    %827 = vmatpush1.msra.mxu0 %v770
    %828 = vmatprep.subr.mxu0 0.0
    %829 = vmatpush2.msra.mxu0 0.0
    %830 = vmatprep.subr.mxu0 0.0
    %831 = vmatpush2.msra.mxu0 0.0
    %832 = vmatprep.subr.mxu0 0.0
    %833 = vmatpush2.msra.mxu0 0.0
    %834 = vmatprep.subr.mxu0 0.0
    %835 = vmatpush2.msra.mxu0 0.0
    %836 = vmatprep.subr.mxu0 0.0
    %837 = vmatpush2.msra.mxu0 0.0
    %838 = vmatprep.subr.mxu0 0.0
    %839 = vmatpush2.msra.mxu0 0.0
    %840 = vmatprep.subr.mxu0 0.0
    %841 = vmatpush2.msra.mxu0 0.0
    %842 = vmatprep.subr.mxu0 0.0
    %843 = vmatpush2.msra.mxu0 0.0
    %844 = vmatprep.subr.mxu0 0.0
    %845 = vmatpush2.msra.mxu0 0.0
    %846 = vmatprep.subr.mxu0 0.0
    %847 = vmatpush2.msra.mxu0 0.0
    %848 = vmatprep.subr.mxu0 0.0
    %849 = vmatpush2.msra.mxu0 0.0
    %850 = vmatprep.subr.mxu0 0.0
    %851 = vmatpush2.msra.mxu0 0.0
    %852 = vmatprep.subr.mxu0 0.0
    %853 = vmatpush2.msra.mxu0 0.0
    %854 = vmatprep.subr.mxu0 0.0
    %855 = vmatpush2.msra.mxu0 0.0
    %856 = vmatprep.subr.mxu0 0.0
    %857 = vmatpush2.msra.mxu0 0.0
    %858 = vmatprep.subr.mxu0 0.0
    %859 = vmatpush2.msra.mxu0 0.0
    %860 = vmatprep.mubr.f32.mxu0 0.0
    %861 = vmatmul.mubr.f32.gmra.mxu0 %v794
    %v862 = vpop.f32.mrf.mxu0
    %v863 = vadd.f32 0.0, %v862
    %v864 = vpop.f32.mrf.mxu0
    %865 = vdwg.mxu0
    %866 = vrot.lane.b32.xlu0 %v338, 64
    %v867 = vpop.permute.xlu0 %866
    %868 = vrot.lane.b32.xlu0 %v412, 64
    %v869 = vpop.permute.xlu0 %868
    %870 = vrot.lane.b32.xlu0 %v413, 64
    %v871 = vpop.permute.xlu0 %870
    %872 = vrot.lane.b32.xlu0 %v414, 64
    %v873 = vpop.permute.xlu0 %872
    %874 = vrot.lane.b32.xlu0 %v415, 64
    %v875 = vpop.permute.xlu0 %874
    %876 = vrot.lane.b32.xlu0 %v416, 64
    %v877 = vpop.permute.xlu0 %876
    %878 = vrot.lane.b32.xlu0 %v417, 64
    %v879 = vpop.permute.xlu0 %878
    %880 = vrot.lane.b32.xlu0 %v418, 64
    %v881 = vpop.permute.xlu0 %880
    %882 = vrot.lane.b32.xlu0 %v419, 64
    %v883 = vpop.permute.xlu0 %882
    %v884 = vsel %vm456, %v867, 0
    %v886 = vsel %vm456, %v869, 0
    %v888 = vsel %vm456, %v871, 0
    %v890 = vsel %vm456, %v873, 0
    %v892 = vsel %vm456, %v875, 0
    %v894 = vsel %vm456, %v877, 0
    %v896 = vsel %vm456, %v879, 0
    %v898 = vsel %vm456, %v881, 0
    %v900 = vsel %vm456, %v883, 0
    %902 = vmatprep.subr.mxu0 0.0
    %903 = vmatpush1.xpose.msra.mxu0 0.0
    %904 = vmatprep.subr.mxu0 0.0
    %905 = vmatpush1.xpose.msra.mxu0 0.0
    %906 = vmatprep.subr.mxu0 0.0
    %907 = vmatpush1.xpose.msra.mxu0 0.0
    %908 = vmatprep.subr.mxu0 0.0
    %909 = vmatpush1.xpose.msra.mxu0 0.0
    %910 = vmatprep.subr.mxu0 0.0
    %911 = vmatpush1.xpose.msra.mxu0 0.0
    %912 = vmatprep.subr.mxu0 0.0
    %913 = vmatpush1.xpose.msra.mxu0 0.0
    %914 = vmatprep.subr.mxu0 0.0
    %915 = vmatpush1.xpose.msra.mxu0 0.0
    %916 = vmatprep.subr.mxu0 0.0
    %917 = vmatpush1.xpose.msra.mxu0 0.0
    %918 = vmatprep.subr.mxu0 0.0
    %919 = vmatpush1.xpose.msra.mxu0 %v900
    %920 = vmatprep.subr.mxu0 0.0
    %921 = vmatpush1.xpose.msra.mxu0 %v898
    %922 = vmatprep.subr.mxu0 0.0
    %923 = vmatpush1.xpose.msra.mxu0 %v896
    %924 = vmatprep.subr.mxu0 0.0
    %925 = vmatpush1.xpose.msra.mxu0 %v894
    %926 = vmatprep.subr.mxu0 0.0
    %927 = vmatpush1.xpose.msra.mxu0 %v892
    %928 = vmatprep.subr.mxu0 0.0
    %929 = vmatpush1.xpose.msra.mxu0 %v890
    %930 = vmatprep.subr.mxu0 0.0
    %931 = vmatpush1.xpose.msra.mxu0 %v888
    %932 = vmatprep.subr.mxu0 0.0
    %933 = vmatpush1.xpose.msra.mxu0 %v886
    %934 = vmatprep.subr.mxu0 0.0
    %935 = vmatpush2.xpose.msra.mxu0 0.0
    %936 = vmatprep.subr.mxu0 0.0
    %937 = vmatpush2.xpose.msra.mxu0 0.0
    %938 = vmatprep.subr.mxu0 0.0
    %939 = vmatpush2.xpose.msra.mxu0 0.0
    %940 = vmatprep.subr.mxu0 0.0
    %941 = vmatpush2.xpose.msra.mxu0 0.0
    %942 = vmatprep.subr.mxu0 0.0
    %943 = vmatpush2.xpose.msra.mxu0 0.0
    %944 = vmatprep.subr.mxu0 0.0
    %945 = vmatpush2.xpose.msra.mxu0 0.0
    %946 = vmatprep.subr.mxu0 0.0
    %947 = vmatpush2.xpose.msra.mxu0 0.0
    %948 = vmatprep.subr.mxu0 0.0
    %949 = vmatpush2.xpose.msra.mxu0 0.0
    %950 = vmatprep.subr.mxu0 0.0
    %951 = vmatpush2.xpose.msra.mxu0 0.0
    %952 = vmatprep.subr.mxu0 0.0
    %953 = vmatpush2.xpose.msra.mxu0 0.0
    %954 = vmatprep.subr.mxu0 0.0
    %955 = vmatpush2.xpose.msra.mxu0 0.0
    %956 = vmatprep.subr.mxu0 0.0
    %957 = vmatpush2.xpose.msra.mxu0 0.0
    %958 = vmatprep.subr.mxu0 0.0
    %959 = vmatpush2.xpose.msra.mxu0 0.0
    %960 = vmatprep.subr.mxu0 0.0
    %961 = vmatpush2.xpose.msra.mxu0 0.0
    %962 = vmatprep.subr.mxu0 0.0
    %963 = vmatpush2.xpose.msra.mxu0 0.0
    %964 = vmatprep.subr.mxu0 0.0
    %965 = vmatpush2.xpose.msra.mxu0 0.0
    %966 = vmatprep.mubr.f32.mxu0 0.0
    %967 = vmatmul.mubr.f32.gmra.mxu0 %v884
    %v968 = vpop.f32.mrf.mxu0
    %v969 = vadd.f32 0.0, %v968
    %v970 = vpop.f32.mrf.mxu0
    %971 = vdwg.mxu0
    %v972 = vmul.f32 %v969, 0.17677669
    %v973 = vsel %vm115, %v972, -1e+30
    %v974 = vsel %vm556, %v973, -inf
    %975 = vmax.xlane.f32.xlu0 %v974
    %v976 = vpop.xlane.xlu0 %975
    %v977 = vsub.f32 %v973, %v976
    %v978 = vmul.f32 %v977, 1.442695
    %v979 = vpow.pop %v978
    %v980 = vsel %vm556, %v979, 0.0
    %981 = vadd.xlane.f32.xlu0 %v980
    %v982 = vpop.xlane.xlu0 %981
    %v983 = vrcp.pop %v982
    %v984 = vmul.f32 %v979, %v983
    %985 = vrot.lane.b32.xlu0 %v432, 64
    %v986 = vpop.permute.xlu0 %985
    %987 = vrot.lane.b32.xlu0 %v433, 64
    %v988 = vpop.permute.xlu0 %987
    %989 = vrot.lane.b32.xlu0 %v434, 64
    %v990 = vpop.permute.xlu0 %989
    %991 = vrot.lane.b32.xlu0 %v435, 64
    %v992 = vpop.permute.xlu0 %991
    %993 = vrot.lane.b32.xlu0 %v436, 64
    %v994 = vpop.permute.xlu0 %993
    %995 = vrot.lane.b32.xlu0 %v437, 64
    %v996 = vpop.permute.xlu0 %995
    %997 = vrot.lane.b32.xlu0 %v438, 64
    %v998 = vpop.permute.xlu0 %997
    %999 = vrot.lane.b32.xlu0 %v439, 64
    %v1000 = vpop.permute.xlu0 %999
    %v1010 = vsel %vm568, %v984, 0
    %1012 = vmatprep.subr.mxu0 0.0
    %1013 = vmatpush1.msra.mxu0 0.0
    %1014 = vmatprep.subr.mxu0 0.0
    %1015 = vmatpush1.msra.mxu0 0.0
    %1016 = vmatprep.subr.mxu0 0.0
    %1017 = vmatpush1.msra.mxu0 0.0
    %1018 = vmatprep.subr.mxu0 0.0
    %1019 = vmatpush1.msra.mxu0 0.0
    %1020 = vmatprep.subr.mxu0 0.0
    %1021 = vmatpush1.msra.mxu0 0.0
    %1022 = vmatprep.subr.mxu0 0.0
    %1023 = vmatpush1.msra.mxu0 0.0
    %1024 = vmatprep.subr.mxu0 0.0
    %1025 = vmatpush1.msra.mxu0 0.0
    %1026 = vmatprep.subr.mxu0 0.0
    %1027 = vmatpush1.msra.mxu0 0.0
    %1028 = vmatprep.subr.mxu0 0.0
    %1029 = vmatpush1.msra.mxu0 %v1000
    %1030 = vmatprep.subr.mxu0 0.0
    %1031 = vmatpush1.msra.mxu0 %v998
    %1032 = vmatprep.subr.mxu0 0.0
    %1033 = vmatpush1.msra.mxu0 %v996
    %1034 = vmatprep.subr.mxu0 0.0
    %1035 = vmatpush1.msra.mxu0 %v994
    %1036 = vmatprep.subr.mxu0 0.0
    %1037 = vmatpush1.msra.mxu0 %v992
    %1038 = vmatprep.subr.mxu0 0.0
    %1039 = vmatpush1.msra.mxu0 %v990
    %1040 = vmatprep.subr.mxu0 0.0
    %1041 = vmatpush1.msra.mxu0 %v988
    %1042 = vmatprep.subr.mxu0 0.0
    %1043 = vmatpush1.msra.mxu0 %v986
    %1044 = vmatprep.subr.mxu0 0.0
    %1045 = vmatpush2.msra.mxu0 0.0
    %1046 = vmatprep.subr.mxu0 0.0
    %1047 = vmatpush2.msra.mxu0 0.0
    %1048 = vmatprep.subr.mxu0 0.0
    %1049 = vmatpush2.msra.mxu0 0.0
    %1050 = vmatprep.subr.mxu0 0.0
    %1051 = vmatpush2.msra.mxu0 0.0
    %1052 = vmatprep.subr.mxu0 0.0
    %1053 = vmatpush2.msra.mxu0 0.0
    %1054 = vmatprep.subr.mxu0 0.0
    %1055 = vmatpush2.msra.mxu0 0.0
    %1056 = vmatprep.subr.mxu0 0.0
    %1057 = vmatpush2.msra.mxu0 0.0
    %1058 = vmatprep.subr.mxu0 0.0
    %1059 = vmatpush2.msra.mxu0 0.0
    %1060 = vmatprep.subr.mxu0 0.0
    %1061 = vmatpush2.msra.mxu0 0.0
    %1062 = vmatprep.subr.mxu0 0.0
    %1063 = vmatpush2.msra.mxu0 0.0
    %1064 = vmatprep.subr.mxu0 0.0
    %1065 = vmatpush2.msra.mxu0 0.0
    %1066 = vmatprep.subr.mxu0 0.0
    %1067 = vmatpush2.msra.mxu0 0.0
    %1068 = vmatprep.subr.mxu0 0.0
    %1069 = vmatpush2.msra.mxu0 0.0
    %1070 = vmatprep.subr.mxu0 0.0
    %1071 = vmatpush2.msra.mxu0 0.0
    %1072 = vmatprep.subr.mxu0 0.0
    %1073 = vmatpush2.msra.mxu0 0.0
    %1074 = vmatprep.subr.mxu0 0.0
    %1075 = vmatpush2.msra.mxu0 0.0
    %1076 = vmatprep.mubr.f32.mxu0 0.0
    %1077 = vmatmul.mubr.f32.gmra.mxu0 %v1010
    %v1078 = vpop.f32.mrf.mxu0
    %v1079 = vadd.f32 0.0, %v1078
    %v1080 = vpop.f32.mrf.mxu0
    %1081 = vdwg.mxu0
    %1082 = vrot.lane.b32.xlu0 %v338, 32
    %v1083 = vpop.permute.xlu0 %1082
    %1084 = vrot.lane.b32.xlu0 %v412, 32
    %v1085 = vpop.permute.xlu0 %1084
    %1086 = vrot.lane.b32.xlu0 %v413, 32
    %v1087 = vpop.permute.xlu0 %1086
    %1088 = vrot.lane.b32.xlu0 %v414, 32
    %v1089 = vpop.permute.xlu0 %1088
    %1090 = vrot.lane.b32.xlu0 %v415, 32
    %v1091 = vpop.permute.xlu0 %1090
    %1092 = vrot.lane.b32.xlu0 %v416, 32
    %v1093 = vpop.permute.xlu0 %1092
    %1094 = vrot.lane.b32.xlu0 %v417, 32
    %v1095 = vpop.permute.xlu0 %1094
    %1096 = vrot.lane.b32.xlu0 %v418, 32
    %v1097 = vpop.permute.xlu0 %1096
    %1098 = vrot.lane.b32.xlu0 %v419, 32
    %v1099 = vpop.permute.xlu0 %1098
    %v1100 = vsel %vm456, %v1083, 0
    %v1102 = vsel %vm456, %v1085, 0
    %v1104 = vsel %vm456, %v1087, 0
    %v1106 = vsel %vm456, %v1089, 0
    %v1108 = vsel %vm456, %v1091, 0
    %v1110 = vsel %vm456, %v1093, 0
    %v1112 = vsel %vm456, %v1095, 0
    %v1114 = vsel %vm456, %v1097, 0
    %v1116 = vsel %vm456, %v1099, 0
    %1118 = vmatprep.subr.mxu0 0.0
    %1119 = vmatpush1.xpose.msra.mxu0 0.0
    %1120 = vmatprep.subr.mxu0 0.0
    %1121 = vmatpush1.xpose.msra.mxu0 0.0
    %1122 = vmatprep.subr.mxu0 0.0
    %1123 = vmatpush1.xpose.msra.mxu0 0.0
    %1124 = vmatprep.subr.mxu0 0.0
    %1125 = vmatpush1.xpose.msra.mxu0 0.0
    %1126 = vmatprep.subr.mxu0 0.0
    %1127 = vmatpush1.xpose.msra.mxu0 0.0
    %1128 = vmatprep.subr.mxu0 0.0
    %1129 = vmatpush1.xpose.msra.mxu0 0.0
    %1130 = vmatprep.subr.mxu0 0.0
    %1131 = vmatpush1.xpose.msra.mxu0 0.0
    %1132 = vmatprep.subr.mxu0 0.0
    %1133 = vmatpush1.xpose.msra.mxu0 0.0
    %1134 = vmatprep.subr.mxu0 0.0
    %1135 = vmatpush1.xpose.msra.mxu0 %v1116
    %1136 = vmatprep.subr.mxu0 0.0
    %1137 = vmatpush1.xpose.msra.mxu0 %v1114
    %1138 = vmatprep.subr.mxu0 0.0
    %1139 = vmatpush1.xpose.msra.mxu0 %v1112
    %1140 = vmatprep.subr.mxu0 0.0
    %1141 = vmatpush1.xpose.msra.mxu0 %v1110
    %1142 = vmatprep.subr.mxu0 0.0
    %1143 = vmatpush1.xpose.msra.mxu0 %v1108
    %1144 = vmatprep.subr.mxu0 0.0
    %1145 = vmatpush1.xpose.msra.mxu0 %v1106
    %1146 = vmatprep.subr.mxu0 0.0
    %1147 = vmatpush1.xpose.msra.mxu0 %v1104
    %1148 = vmatprep.subr.mxu0 0.0
    %1149 = vmatpush1.xpose.msra.mxu0 %v1102
    %1150 = vmatprep.subr.mxu0 0.0
    %1151 = vmatpush2.xpose.msra.mxu0 0.0
    %1152 = vmatprep.subr.mxu0 0.0
    %1153 = vmatpush2.xpose.msra.mxu0 0.0
    %1154 = vmatprep.subr.mxu0 0.0
    %1155 = vmatpush2.xpose.msra.mxu0 0.0
    %1156 = vmatprep.subr.mxu0 0.0
    %1157 = vmatpush2.xpose.msra.mxu0 0.0
    %1158 = vmatprep.subr.mxu0 0.0
    %1159 = vmatpush2.xpose.msra.mxu0 0.0
    %1160 = vmatprep.subr.mxu0 0.0
    %1161 = vmatpush2.xpose.msra.mxu0 0.0
    %1162 = vmatprep.subr.mxu0 0.0
    %1163 = vmatpush2.xpose.msra.mxu0 0.0
    %1164 = vmatprep.subr.mxu0 0.0
    %1165 = vmatpush2.xpose.msra.mxu0 0.0
    %1166 = vmatprep.subr.mxu0 0.0
    %1167 = vmatpush2.xpose.msra.mxu0 0.0
    %1168 = vmatprep.subr.mxu0 0.0
    %1169 = vmatpush2.xpose.msra.mxu0 0.0
    %1170 = vmatprep.subr.mxu0 0.0
    %1171 = vmatpush2.xpose.msra.mxu0 0.0
    %1172 = vmatprep.subr.mxu0 0.0
    %1173 = vmatpush2.xpose.msra.mxu0 0.0
    %1174 = vmatprep.subr.mxu0 0.0
    %1175 = vmatpush2.xpose.msra.mxu0 0.0
    %1176 = vmatprep.subr.mxu0 0.0
    %1177 = vmatpush2.xpose.msra.mxu0 0.0
    %1178 = vmatprep.subr.mxu0 0.0
    %1179 = vmatpush2.xpose.msra.mxu0 0.0
    %1180 = vmatprep.subr.mxu0 0.0
    %1181 = vmatpush2.xpose.msra.mxu0 0.0
    %1182 = vmatprep.mubr.f32.mxu0 0.0
    %1183 = vmatmul.mubr.f32.gmra.mxu0 %v1100
    %v1184 = vpop.f32.mrf.mxu0
    %v1185 = vadd.f32 0.0, %v1184
    %v1186 = vpop.f32.mrf.mxu0
    %1187 = vdwg.mxu0
    %v1188 = vmul.f32 %v1185, 0.17677669
    %v1189 = vsel %vm115, %v1188, -1e+30
    %v1190 = vsel %vm556, %v1189, -inf
    %1191 = vmax.xlane.f32.xlu0 %v1190
    %v1192 = vpop.xlane.xlu0 %1191
    %v1193 = vsub.f32 %v1189, %v1192
    %v1194 = vmul.f32 %v1193, 1.442695
    %v1195 = vpow.pop %v1194
    %v1196 = vsel %vm556, %v1195, 0.0
    %1197 = vadd.xlane.f32.xlu0 %v1196
    %v1198 = vpop.xlane.xlu0 %1197
    %v1199 = vrcp.pop %v1198
    %v1200 = vmul.f32 %v1195, %v1199
    %1201 = vrot.lane.b32.xlu0 %v432, 32
    %v1202 = vpop.permute.xlu0 %1201
    %1203 = vrot.lane.b32.xlu0 %v433, 32
    %v1204 = vpop.permute.xlu0 %1203
    %1205 = vrot.lane.b32.xlu0 %v434, 32
    %v1206 = vpop.permute.xlu0 %1205
    %1207 = vrot.lane.b32.xlu0 %v435, 32
    %v1208 = vpop.permute.xlu0 %1207
    %1209 = vrot.lane.b32.xlu0 %v436, 32
    %v1210 = vpop.permute.xlu0 %1209
    %1211 = vrot.lane.b32.xlu0 %v437, 32
    %v1212 = vpop.permute.xlu0 %1211
    %1213 = vrot.lane.b32.xlu0 %v438, 32
    %v1214 = vpop.permute.xlu0 %1213
    %1215 = vrot.lane.b32.xlu0 %v439, 32
    %v1216 = vpop.permute.xlu0 %1215
    %v1226 = vsel %vm568, %v1200, 0
    %1228 = vmatprep.subr.mxu0 0.0
    %1229 = vmatpush1.msra.mxu0 0.0
    %1230 = vmatprep.subr.mxu0 0.0
    %1231 = vmatpush1.msra.mxu0 0.0
    %1232 = vmatprep.subr.mxu0 0.0
    %1233 = vmatpush1.msra.mxu0 0.0
    %1234 = vmatprep.subr.mxu0 0.0
    %1235 = vmatpush1.msra.mxu0 0.0
    %1236 = vmatprep.subr.mxu0 0.0
    %1237 = vmatpush1.msra.mxu0 0.0
    %1238 = vmatprep.subr.mxu0 0.0
    %1239 = vmatpush1.msra.mxu0 0.0
    %1240 = vmatprep.subr.mxu0 0.0
    %1241 = vmatpush1.msra.mxu0 0.0
    %1242 = vmatprep.subr.mxu0 0.0
    %1243 = vmatpush1.msra.mxu0 0.0
    %1244 = vmatprep.subr.mxu0 0.0
    %1245 = vmatpush1.msra.mxu0 %v1216
    %1246 = vmatprep.subr.mxu0 0.0
    %1247 = vmatpush1.msra.mxu0 %v1214
    %1248 = vmatprep.subr.mxu0 0.0
    %1249 = vmatpush1.msra.mxu0 %v1212
    %1250 = vmatprep.subr.mxu0 0.0
    %1251 = vmatpush1.msra.mxu0 %v1210
    %1252 = vmatprep.subr.mxu0 0.0
    %1253 = vmatpush1.msra.mxu0 %v1208
    %1254 = vmatprep.subr.mxu0 0.0
    %1255 = vmatpush1.msra.mxu0 %v1206
    %1256 = vmatprep.subr.mxu0 0.0
    %1257 = vmatpush1.msra.mxu0 %v1204
    %1258 = vmatprep.subr.mxu0 0.0
    %1259 = vmatpush1.msra.mxu0 %v1202
    %1260 = vmatprep.subr.mxu0 0.0
    %1261 = vmatpush2.msra.mxu0 0.0
    %1262 = vmatprep.subr.mxu0 0.0
    %1263 = vmatpush2.msra.mxu0 0.0
    %1264 = vmatprep.subr.mxu0 0.0
    %1265 = vmatpush2.msra.mxu0 0.0
    %1266 = vmatprep.subr.mxu0 0.0
    %1267 = vmatpush2.msra.mxu0 0.0
    %1268 = vmatprep.subr.mxu0 0.0
    %1269 = vmatpush2.msra.mxu0 0.0
    %1270 = vmatprep.subr.mxu0 0.0
    %1271 = vmatpush2.msra.mxu0 0.0
    %1272 = vmatprep.subr.mxu0 0.0
    %1273 = vmatpush2.msra.mxu0 0.0
    %1274 = vmatprep.subr.mxu0 0.0
    %1275 = vmatpush2.msra.mxu0 0.0
    %1276 = vmatprep.subr.mxu0 0.0
    %1277 = vmatpush2.msra.mxu0 0.0
    %1278 = vmatprep.subr.mxu0 0.0
    %1279 = vmatpush2.msra.mxu0 0.0
    %1280 = vmatprep.subr.mxu0 0.0
    %1281 = vmatpush2.msra.mxu0 0.0
    %1282 = vmatprep.subr.mxu0 0.0
    %1283 = vmatpush2.msra.mxu0 0.0
    %1284 = vmatprep.subr.mxu0 0.0
    %1285 = vmatpush2.msra.mxu0 0.0
    %1286 = vmatprep.subr.mxu0 0.0
    %1287 = vmatpush2.msra.mxu0 0.0
    %1288 = vmatprep.subr.mxu0 0.0
    %1289 = vmatpush2.msra.mxu0 0.0
    %1290 = vmatprep.subr.mxu0 0.0
    %1291 = vmatpush2.msra.mxu0 0.0
    %1292 = vmatprep.mubr.f32.mxu0 0.0
    %1293 = vmatmul.mubr.f32.gmra.mxu0 %v1226
    %v1294 = vpop.f32.mrf.mxu0
    %v1295 = vadd.f32 0.0, %v1294
    %v1296 = vpop.f32.mrf.mxu0
    %1297 = vdwg.mxu0
    %1299 = vrot.lane.b32.xlu0 %v863, 32
    %v1300 = vpop.permute.xlu0 %1299
    %1303 = vrot.lane.b32.xlu0 %v1079, 64
    %v1304 = vpop.permute.xlu0 %1303
    %1307 = vrot.lane.b32.xlu0 %v1295, 96
    %v1308 = vpop.permute.xlu0 %1307
    %v1310 = vsel %vm456, %v639, %v1300
    %v1311 = vsel %vm568, %v1310, %v1304
    %vm1312 = vcmask 785408
    %v1313 = vsel %vm1312, %v1311, %v1308
    %s1314 = scalar_lea.vmem %s10, 64
    %v1315 = vld [vmem:[%s1314] sm:$0xff]
    %v1316 = vld [vmem:[%s1314 + $0x8] sm:$0xff]
    %v1317 = vld [vmem:[%s1314 + $0x10] sm:$0xff]
    %v1318 = vld [vmem:[%s1314 + $0x18] sm:$0xff]
    %v1319 = vld [vmem:[%s1314 + $0x20] sm:$0xff]
    %v1320 = vld [vmem:[%s1314 + $0x28] sm:$0xff]
    %v1321 = vld [vmem:[%s1314 + $0x30] sm:$0xff]
    %v1322 = vld [vmem:[%s1314 + $0x38] sm:$0xff]
    %v1323 = vlaneseq
    %v1324 = vshrl.u32 %v1323, 7
    %v1325 = vsub.s32 1, %v1324
    %v1326 = vrot.slane %v340, %v1325
    %v1327 = vsel %vm400, %v1326, %v1315
    %v1328 = vsel %vm401, %v1326, %v1316
    %v1329 = vsel %vm402, %v1326, %v1317
    %v1330 = vsel %vm403, %v1326, %v1318
    %v1331 = vsel %vm404, %v1326, %v1319
    %v1332 = vsel %vm405, %v1326, %v1320
    %v1333 = vsel %vm406, %v1326, %v1321
    %v1334 = vsel %vm407, %v1326, %v1322
    %s1335 = scalar_lea.vmem %s11, 64
    %v1336 = vld [vmem:[%s1335] sm:$0xff]
    %v1337 = vld [vmem:[%s1335 + $0x8] sm:$0xff]
    %v1338 = vld [vmem:[%s1335 + $0x10] sm:$0xff]
    %v1339 = vld [vmem:[%s1335 + $0x18] sm:$0xff]
    %v1340 = vld [vmem:[%s1335 + $0x20] sm:$0xff]
    %v1341 = vld [vmem:[%s1335 + $0x28] sm:$0xff]
    %v1342 = vld [vmem:[%s1335 + $0x30] sm:$0xff]
    %v1343 = vld [vmem:[%s1335 + $0x38] sm:$0xff]
    %v1344 = vlaneseq
    %v1345 = vshrl.u32 %v1344, 7
    %v1346 = vsub.s32 1, %v1345
    %v1347 = vrot.slane %v379, %v1346
    %v1348 = vsel %vm400, %v1347, %v1336
    %v1349 = vsel %vm401, %v1347, %v1337
    %v1350 = vsel %vm402, %v1347, %v1338
    %v1351 = vsel %vm403, %v1347, %v1339
    %v1352 = vsel %vm404, %v1347, %v1340
    %v1353 = vsel %vm405, %v1347, %v1341
    %v1354 = vsel %vm406, %v1347, %v1342
    %v1355 = vsel %vm407, %v1347, %v1343
    %s1356 = scalar_lea.vmem %s13, 64
    %1357 = vst [vmem:[%s1356] sm:$0xff] %v1327
    %1358 = vst [vmem:[%s1356 + $0x8] sm:$0xff] %v1328
    %1359 = vst [vmem:[%s1356 + $0x10] sm:$0xff] %v1329
    %1360 = vst [vmem:[%s1356 + $0x18] sm:$0xff] %v1330
    %1361 = vst [vmem:[%s1356 + $0x20] sm:$0xff] %v1331
    %1362 = vst [vmem:[%s1356 + $0x28] sm:$0xff] %v1332
    %1363 = vst [vmem:[%s1356 + $0x30] sm:$0xff] %v1333
    %1364 = vst [vmem:[%s1356 + $0x38] sm:$0xff] %v1334
    %s1365 = scalar_lea.vmem %s14, 64
    %1366 = vst [vmem:[%s1365] sm:$0xff] %v1348
    %1367 = vst [vmem:[%s1365 + $0x8] sm:$0xff] %v1349
    %1368 = vst [vmem:[%s1365 + $0x10] sm:$0xff] %v1350
    %1369 = vst [vmem:[%s1365 + $0x18] sm:$0xff] %v1351
    %1370 = vst [vmem:[%s1365 + $0x20] sm:$0xff] %v1352
    %1371 = vst [vmem:[%s1365 + $0x28] sm:$0xff] %v1353
    %1372 = vst [vmem:[%s1365 + $0x30] sm:$0xff] %v1354
    %1373 = vst [vmem:[%s1365 + $0x38] sm:$0xff] %v1355
    %v1374 = vrot.slane %v338, 1
    %v1375 = vsel %vm456, %v1374, 0
    %v1378 = vsel %vm456, %v1327, 0
    %v1381 = vsel %vm456, %v1328, 0
    %v1384 = vsel %vm456, %v1329, 0
    %v1387 = vsel %vm456, %v1330, 0
    %v1390 = vsel %vm456, %v1331, 0
    %v1393 = vsel %vm456, %v1332, 0
    %v1396 = vsel %vm456, %v1333, 0
    %v1399 = vsel %vm456, %v1334, 0
    %1401 = vmatprep.subr.mxu0 0.0
    %1402 = vmatpush1.xpose.msra.mxu0 0.0
    %1403 = vmatprep.subr.mxu0 0.0
    %1404 = vmatpush1.xpose.msra.mxu0 0.0
    %1405 = vmatprep.subr.mxu0 0.0
    %1406 = vmatpush1.xpose.msra.mxu0 0.0
    %1407 = vmatprep.subr.mxu0 0.0
    %1408 = vmatpush1.xpose.msra.mxu0 0.0
    %1409 = vmatprep.subr.mxu0 0.0
    %1410 = vmatpush1.xpose.msra.mxu0 0.0
    %1411 = vmatprep.subr.mxu0 0.0
    %1412 = vmatpush1.xpose.msra.mxu0 0.0
    %1413 = vmatprep.subr.mxu0 0.0
    %1414 = vmatpush1.xpose.msra.mxu0 0.0
    %1415 = vmatprep.subr.mxu0 0.0
    %1416 = vmatpush1.xpose.msra.mxu0 0.0
    %1417 = vmatprep.subr.mxu0 0.0
    %1418 = vmatpush1.xpose.msra.mxu0 %v1399
    %1419 = vmatprep.subr.mxu0 0.0
    %1420 = vmatpush1.xpose.msra.mxu0 %v1396
    %1421 = vmatprep.subr.mxu0 0.0
    %1422 = vmatpush1.xpose.msra.mxu0 %v1393
    %1423 = vmatprep.subr.mxu0 0.0
    %1424 = vmatpush1.xpose.msra.mxu0 %v1390
    %1425 = vmatprep.subr.mxu0 0.0
    %1426 = vmatpush1.xpose.msra.mxu0 %v1387
    %1427 = vmatprep.subr.mxu0 0.0
    %1428 = vmatpush1.xpose.msra.mxu0 %v1384
    %1429 = vmatprep.subr.mxu0 0.0
    %1430 = vmatpush1.xpose.msra.mxu0 %v1381
    %1431 = vmatprep.subr.mxu0 0.0
    %1432 = vmatpush1.xpose.msra.mxu0 %v1378
    %1433 = vmatprep.subr.mxu0 0.0
    %1434 = vmatpush2.xpose.msra.mxu0 0.0
    %1435 = vmatprep.subr.mxu0 0.0
    %1436 = vmatpush2.xpose.msra.mxu0 0.0
    %1437 = vmatprep.subr.mxu0 0.0
    %1438 = vmatpush2.xpose.msra.mxu0 0.0
    %1439 = vmatprep.subr.mxu0 0.0
    %1440 = vmatpush2.xpose.msra.mxu0 0.0
    %1441 = vmatprep.subr.mxu0 0.0
    %1442 = vmatpush2.xpose.msra.mxu0 0.0
    %1443 = vmatprep.subr.mxu0 0.0
    %1444 = vmatpush2.xpose.msra.mxu0 0.0
    %1445 = vmatprep.subr.mxu0 0.0
    %1446 = vmatpush2.xpose.msra.mxu0 0.0
    %1447 = vmatprep.subr.mxu0 0.0
    %1448 = vmatpush2.xpose.msra.mxu0 0.0
    %1449 = vmatprep.subr.mxu0 0.0
    %1450 = vmatpush2.xpose.msra.mxu0 0.0
    %1451 = vmatprep.subr.mxu0 0.0
    %1452 = vmatpush2.xpose.msra.mxu0 0.0
    %1453 = vmatprep.subr.mxu0 0.0
    %1454 = vmatpush2.xpose.msra.mxu0 0.0
    %1455 = vmatprep.subr.mxu0 0.0
    %1456 = vmatpush2.xpose.msra.mxu0 0.0
    %1457 = vmatprep.subr.mxu0 0.0
    %1458 = vmatpush2.xpose.msra.mxu0 0.0
    %1459 = vmatprep.subr.mxu0 0.0
    %1460 = vmatpush2.xpose.msra.mxu0 0.0
    %1461 = vmatprep.subr.mxu0 0.0
    %1462 = vmatpush2.xpose.msra.mxu0 0.0
    %1463 = vmatprep.subr.mxu0 0.0
    %1464 = vmatpush2.xpose.msra.mxu0 0.0
    %1465 = vmatprep.mubr.f32.mxu0 0.0
    %1466 = vmatmul.mubr.f32.gmra.mxu0 %v1375
    %v1467 = vpop.f32.mrf.mxu0
    %v1468 = vadd.f32 0.0, %v1467
    %v1469 = vpop.f32.mrf.mxu0
    %1470 = vdwg.mxu0
    %v1471 = vmul.f32 %v1468, 0.17677669
    %v1472 = vsel %vm115, %v1471, -1e+30
    %v1473 = vsel %vm556, %v1472, -inf
    %1474 = vmax.xlane.f32.xlu0 %v1473
    %v1475 = vpop.xlane.xlu0 %1474
    %v1476 = vsub.f32 %v1472, %v1475
    %v1477 = vmul.f32 %v1476, 1.442695
    %v1478 = vpow.pop %v1477
    %v1479 = vsel %vm556, %v1478, 0.0
    %1480 = vadd.xlane.f32.xlu0 %v1479
    %v1481 = vpop.xlane.xlu0 %1480
    %v1482 = vrcp.pop %v1481
    %v1483 = vmul.f32 %v1478, %v1482
    %v1485 = vsel %vm568, %v1483, 0
    %1487 = vmatprep.subr.mxu0 0.0
    %1488 = vmatpush1.msra.mxu0 0.0
    %1489 = vmatprep.subr.mxu0 0.0
    %1490 = vmatpush1.msra.mxu0 0.0
    %1491 = vmatprep.subr.mxu0 0.0
    %1492 = vmatpush1.msra.mxu0 0.0
    %1493 = vmatprep.subr.mxu0 0.0
    %1494 = vmatpush1.msra.mxu0 0.0
    %1495 = vmatprep.subr.mxu0 0.0
    %1496 = vmatpush1.msra.mxu0 0.0
    %1497 = vmatprep.subr.mxu0 0.0
    %1498 = vmatpush1.msra.mxu0 0.0
    %1499 = vmatprep.subr.mxu0 0.0
    %1500 = vmatpush1.msra.mxu0 0.0
    %1501 = vmatprep.subr.mxu0 0.0
    %1502 = vmatpush1.msra.mxu0 0.0
    %1503 = vmatprep.subr.mxu0 0.0
    %1504 = vmatpush1.msra.mxu0 %v1355
    %1505 = vmatprep.subr.mxu0 0.0
    %1506 = vmatpush1.msra.mxu0 %v1354
    %1507 = vmatprep.subr.mxu0 0.0
    %1508 = vmatpush1.msra.mxu0 %v1353
    %1509 = vmatprep.subr.mxu0 0.0
    %1510 = vmatpush1.msra.mxu0 %v1352
    %1511 = vmatprep.subr.mxu0 0.0
    %1512 = vmatpush1.msra.mxu0 %v1351
    %1513 = vmatprep.subr.mxu0 0.0
    %1514 = vmatpush1.msra.mxu0 %v1350
    %1515 = vmatprep.subr.mxu0 0.0
    %1516 = vmatpush1.msra.mxu0 %v1349
    %1517 = vmatprep.subr.mxu0 0.0
    %1518 = vmatpush1.msra.mxu0 %v1348
    %1519 = vmatprep.subr.mxu0 0.0
    %1520 = vmatpush2.msra.mxu0 0.0
    %1521 = vmatprep.subr.mxu0 0.0
    %1522 = vmatpush2.msra.mxu0 0.0
    %1523 = vmatprep.subr.mxu0 0.0
    %1524 = vmatpush2.msra.mxu0 0.0
    %1525 = vmatprep.subr.mxu0 0.0
    %1526 = vmatpush2.msra.mxu0 0.0
    %1527 = vmatprep.subr.mxu0 0.0
    %1528 = vmatpush2.msra.mxu0 0.0
    %1529 = vmatprep.subr.mxu0 0.0
    %1530 = vmatpush2.msra.mxu0 0.0
    %1531 = vmatprep.subr.mxu0 0.0
    %1532 = vmatpush2.msra.mxu0 0.0
    %1533 = vmatprep.subr.mxu0 0.0
    %1534 = vmatpush2.msra.mxu0 0.0
    %1535 = vmatprep.subr.mxu0 0.0
    %1536 = vmatpush2.msra.mxu0 0.0
    %1537 = vmatprep.subr.mxu0 0.0
    %1538 = vmatpush2.msra.mxu0 0.0
    %1539 = vmatprep.subr.mxu0 0.0
    %1540 = vmatpush2.msra.mxu0 0.0
    %1541 = vmatprep.subr.mxu0 0.0
    %1542 = vmatpush2.msra.mxu0 0.0
    %1543 = vmatprep.subr.mxu0 0.0
    %1544 = vmatpush2.msra.mxu0 0.0
    %1545 = vmatprep.subr.mxu0 0.0
    %1546 = vmatpush2.msra.mxu0 0.0
    %1547 = vmatprep.subr.mxu0 0.0
    %1548 = vmatpush2.msra.mxu0 0.0
    %1549 = vmatprep.subr.mxu0 0.0
    %1550 = vmatpush2.msra.mxu0 0.0
    %1551 = vmatprep.mubr.f32.mxu0 0.0
    %1552 = vmatmul.mubr.f32.gmra.mxu0 %v1485
    %v1553 = vpop.f32.mrf.mxu0
    %v1554 = vadd.f32 0.0, %v1553
    %v1555 = vpop.f32.mrf.mxu0
    %1556 = vdwg.mxu0
    %1557 = vrot.lane.b32.xlu0 %v1374, 96
    %v1558 = vpop.permute.xlu0 %1557
    %1559 = vrot.lane.b32.xlu0 %v1327, 96
    %v1560 = vpop.permute.xlu0 %1559
    %1561 = vrot.lane.b32.xlu0 %v1328, 96
    %v1562 = vpop.permute.xlu0 %1561
    %1563 = vrot.lane.b32.xlu0 %v1329, 96
    %v1564 = vpop.permute.xlu0 %1563
    %1565 = vrot.lane.b32.xlu0 %v1330, 96
    %v1566 = vpop.permute.xlu0 %1565
    %1567 = vrot.lane.b32.xlu0 %v1331, 96
    %v1568 = vpop.permute.xlu0 %1567
    %1569 = vrot.lane.b32.xlu0 %v1332, 96
    %v1570 = vpop.permute.xlu0 %1569
    %1571 = vrot.lane.b32.xlu0 %v1333, 96
    %v1572 = vpop.permute.xlu0 %1571
    %1573 = vrot.lane.b32.xlu0 %v1334, 96
    %v1574 = vpop.permute.xlu0 %1573
    %v1575 = vsel %vm456, %v1558, 0
    %v1577 = vsel %vm456, %v1560, 0
    %v1579 = vsel %vm456, %v1562, 0
    %v1581 = vsel %vm456, %v1564, 0
    %v1583 = vsel %vm456, %v1566, 0
    %v1585 = vsel %vm456, %v1568, 0
    %v1587 = vsel %vm456, %v1570, 0
    %v1589 = vsel %vm456, %v1572, 0
    %v1591 = vsel %vm456, %v1574, 0
    %1593 = vmatprep.subr.mxu0 0.0
    %1594 = vmatpush1.xpose.msra.mxu0 0.0
    %1595 = vmatprep.subr.mxu0 0.0
    %1596 = vmatpush1.xpose.msra.mxu0 0.0
    %1597 = vmatprep.subr.mxu0 0.0
    %1598 = vmatpush1.xpose.msra.mxu0 0.0
    %1599 = vmatprep.subr.mxu0 0.0
    %1600 = vmatpush1.xpose.msra.mxu0 0.0
    %1601 = vmatprep.subr.mxu0 0.0
    %1602 = vmatpush1.xpose.msra.mxu0 0.0
    %1603 = vmatprep.subr.mxu0 0.0
    %1604 = vmatpush1.xpose.msra.mxu0 0.0
    %1605 = vmatprep.subr.mxu0 0.0
    %1606 = vmatpush1.xpose.msra.mxu0 0.0
    %1607 = vmatprep.subr.mxu0 0.0
    %1608 = vmatpush1.xpose.msra.mxu0 0.0
    %1609 = vmatprep.subr.mxu0 0.0
    %1610 = vmatpush1.xpose.msra.mxu0 %v1591
    %1611 = vmatprep.subr.mxu0 0.0
    %1612 = vmatpush1.xpose.msra.mxu0 %v1589
    %1613 = vmatprep.subr.mxu0 0.0
    %1614 = vmatpush1.xpose.msra.mxu0 %v1587
    %1615 = vmatprep.subr.mxu0 0.0
    %1616 = vmatpush1.xpose.msra.mxu0 %v1585
    %1617 = vmatprep.subr.mxu0 0.0
    %1618 = vmatpush1.xpose.msra.mxu0 %v1583
    %1619 = vmatprep.subr.mxu0 0.0
    %1620 = vmatpush1.xpose.msra.mxu0 %v1581
    %1621 = vmatprep.subr.mxu0 0.0
    %1622 = vmatpush1.xpose.msra.mxu0 %v1579
    %1623 = vmatprep.subr.mxu0 0.0
    %1624 = vmatpush1.xpose.msra.mxu0 %v1577
    %1625 = vmatprep.subr.mxu0 0.0
    %1626 = vmatpush2.xpose.msra.mxu0 0.0
    %1627 = vmatprep.subr.mxu0 0.0
    %1628 = vmatpush2.xpose.msra.mxu0 0.0
    %1629 = vmatprep.subr.mxu0 0.0
    %1630 = vmatpush2.xpose.msra.mxu0 0.0
    %1631 = vmatprep.subr.mxu0 0.0
    %1632 = vmatpush2.xpose.msra.mxu0 0.0
    %1633 = vmatprep.subr.mxu0 0.0
    %1634 = vmatpush2.xpose.msra.mxu0 0.0
    %1635 = vmatprep.subr.mxu0 0.0
    %1636 = vmatpush2.xpose.msra.mxu0 0.0
    %1637 = vmatprep.subr.mxu0 0.0
    %1638 = vmatpush2.xpose.msra.mxu0 0.0
    %1639 = vmatprep.subr.mxu0 0.0
    %1640 = vmatpush2.xpose.msra.mxu0 0.0
    %1641 = vmatprep.subr.mxu0 0.0
    %1642 = vmatpush2.xpose.msra.mxu0 0.0
    %1643 = vmatprep.subr.mxu0 0.0
    %1644 = vmatpush2.xpose.msra.mxu0 0.0
    %1645 = vmatprep.subr.mxu0 0.0
    %1646 = vmatpush2.xpose.msra.mxu0 0.0
    %1647 = vmatprep.subr.mxu0 0.0
    %1648 = vmatpush2.xpose.msra.mxu0 0.0
    %1649 = vmatprep.subr.mxu0 0.0
    %1650 = vmatpush2.xpose.msra.mxu0 0.0
    %1651 = vmatprep.subr.mxu0 0.0
    %1652 = vmatpush2.xpose.msra.mxu0 0.0
    %1653 = vmatprep.subr.mxu0 0.0
    %1654 = vmatpush2.xpose.msra.mxu0 0.0
    %1655 = vmatprep.subr.mxu0 0.0
    %1656 = vmatpush2.xpose.msra.mxu0 0.0
    %1657 = vmatprep.mubr.f32.mxu0 0.0
    %1658 = vmatmul.mubr.f32.gmra.mxu0 %v1575
    %v1659 = vpop.f32.mrf.mxu0
    %v1660 = vadd.f32 0.0, %v1659
    %v1661 = vpop.f32.mrf.mxu0
    %1662 = vdwg.mxu0
    %v1663 = vmul.f32 %v1660, 0.17677669
    %v1664 = vsel %vm115, %v1663, -1e+30
    %v1665 = vsel %vm556, %v1664, -inf
    %1666 = vmax.xlane.f32.xlu0 %v1665
    %v1667 = vpop.xlane.xlu0 %1666
    %v1668 = vsub.f32 %v1664, %v1667
    %v1669 = vmul.f32 %v1668, 1.442695
    %v1670 = vpow.pop %v1669
    %v1671 = vsel %vm556, %v1670, 0.0
    %1672 = vadd.xlane.f32.xlu0 %v1671
    %v1673 = vpop.xlane.xlu0 %1672
    %v1674 = vrcp.pop %v1673
    %v1675 = vmul.f32 %v1670, %v1674
    %1684 = vrot.lane.b32.xlu0 %v1348, 96
    %v1685 = vpop.permute.xlu0 %1684
    %1686 = vrot.lane.b32.xlu0 %v1349, 96
    %v1687 = vpop.permute.xlu0 %1686
    %1688 = vrot.lane.b32.xlu0 %v1350, 96
    %v1689 = vpop.permute.xlu0 %1688
    %1690 = vrot.lane.b32.xlu0 %v1351, 96
    %v1691 = vpop.permute.xlu0 %1690
    %1692 = vrot.lane.b32.xlu0 %v1352, 96
    %v1693 = vpop.permute.xlu0 %1692
    %1694 = vrot.lane.b32.xlu0 %v1353, 96
    %v1695 = vpop.permute.xlu0 %1694
    %1696 = vrot.lane.b32.xlu0 %v1354, 96
    %v1697 = vpop.permute.xlu0 %1696
    %1698 = vrot.lane.b32.xlu0 %v1355, 96
    %v1699 = vpop.permute.xlu0 %1698
    %v1709 = vsel %vm568, %v1675, 0
    %1711 = vmatprep.subr.mxu0 0.0
    %1712 = vmatpush1.msra.mxu0 0.0
    %1713 = vmatprep.subr.mxu0 0.0
    %1714 = vmatpush1.msra.mxu0 0.0
    %1715 = vmatprep.subr.mxu0 0.0
    %1716 = vmatpush1.msra.mxu0 0.0
    %1717 = vmatprep.subr.mxu0 0.0
    %1718 = vmatpush1.msra.mxu0 0.0
    %1719 = vmatprep.subr.mxu0 0.0
    %1720 = vmatpush1.msra.mxu0 0.0
    %1721 = vmatprep.subr.mxu0 0.0
    %1722 = vmatpush1.msra.mxu0 0.0
    %1723 = vmatprep.subr.mxu0 0.0
    %1724 = vmatpush1.msra.mxu0 0.0
    %1725 = vmatprep.subr.mxu0 0.0
    %1726 = vmatpush1.msra.mxu0 0.0
    %1727 = vmatprep.subr.mxu0 0.0
    %1728 = vmatpush1.msra.mxu0 %v1699
    %1729 = vmatprep.subr.mxu0 0.0
    %1730 = vmatpush1.msra.mxu0 %v1697
    %1731 = vmatprep.subr.mxu0 0.0
    %1732 = vmatpush1.msra.mxu0 %v1695
    %1733 = vmatprep.subr.mxu0 0.0
    %1734 = vmatpush1.msra.mxu0 %v1693
    %1735 = vmatprep.subr.mxu0 0.0
    %1736 = vmatpush1.msra.mxu0 %v1691
    %1737 = vmatprep.subr.mxu0 0.0
    %1738 = vmatpush1.msra.mxu0 %v1689
    %1739 = vmatprep.subr.mxu0 0.0
    %1740 = vmatpush1.msra.mxu0 %v1687
    %1741 = vmatprep.subr.mxu0 0.0
    %1742 = vmatpush1.msra.mxu0 %v1685
    %1743 = vmatprep.subr.mxu0 0.0
    %1744 = vmatpush2.msra.mxu0 0.0
    %1745 = vmatprep.subr.mxu0 0.0
    %1746 = vmatpush2.msra.mxu0 0.0
    %1747 = vmatprep.subr.mxu0 0.0
    %1748 = vmatpush2.msra.mxu0 0.0
    %1749 = vmatprep.subr.mxu0 0.0
    %1750 = vmatpush2.msra.mxu0 0.0
    %1751 = vmatprep.subr.mxu0 0.0
    %1752 = vmatpush2.msra.mxu0 0.0
    %1753 = vmatprep.subr.mxu0 0.0
    %1754 = vmatpush2.msra.mxu0 0.0
    %1755 = vmatprep.subr.mxu0 0.0
    %1756 = vmatpush2.msra.mxu0 0.0
    %1757 = vmatprep.subr.mxu0 0.0
    %1758 = vmatpush2.msra.mxu0 0.0
    %1759 = vmatprep.subr.mxu0 0.0
    %1760 = vmatpush2.msra.mxu0 0.0
    %1761 = vmatprep.subr.mxu0 0.0
    %1762 = vmatpush2.msra.mxu0 0.0
    %1763 = vmatprep.subr.mxu0 0.0
    %1764 = vmatpush2.msra.mxu0 0.0
    %1765 = vmatprep.subr.mxu0 0.0
    %1766 = vmatpush2.msra.mxu0 0.0
    %1767 = vmatprep.subr.mxu0 0.0
    %1768 = vmatpush2.msra.mxu0 0.0
    %1769 = vmatprep.subr.mxu0 0.0
    %1770 = vmatpush2.msra.mxu0 0.0
    %1771 = vmatprep.subr.mxu0 0.0
    %1772 = vmatpush2.msra.mxu0 0.0
    %1773 = vmatprep.subr.mxu0 0.0
    %1774 = vmatpush2.msra.mxu0 0.0
    %1775 = vmatprep.mubr.f32.mxu0 0.0
    %1776 = vmatmul.mubr.f32.gmra.mxu0 %v1709
    %v1777 = vpop.f32.mrf.mxu0
    %v1778 = vadd.f32 0.0, %v1777
    %v1779 = vpop.f32.mrf.mxu0
    %1780 = vdwg.mxu0
    %1781 = vrot.lane.b32.xlu0 %v1374, 64
    %v1782 = vpop.permute.xlu0 %1781
    %1783 = vrot.lane.b32.xlu0 %v1327, 64
    %v1784 = vpop.permute.xlu0 %1783
    %1785 = vrot.lane.b32.xlu0 %v1328, 64
    %v1786 = vpop.permute.xlu0 %1785
    %1787 = vrot.lane.b32.xlu0 %v1329, 64
    %v1788 = vpop.permute.xlu0 %1787
    %1789 = vrot.lane.b32.xlu0 %v1330, 64
    %v1790 = vpop.permute.xlu0 %1789
    %1791 = vrot.lane.b32.xlu0 %v1331, 64
    %v1792 = vpop.permute.xlu0 %1791
    %1793 = vrot.lane.b32.xlu0 %v1332, 64
    %v1794 = vpop.permute.xlu0 %1793
    %1795 = vrot.lane.b32.xlu0 %v1333, 64
    %v1796 = vpop.permute.xlu0 %1795
    %1797 = vrot.lane.b32.xlu0 %v1334, 64
    %v1798 = vpop.permute.xlu0 %1797
    %v1799 = vsel %vm456, %v1782, 0
    %v1801 = vsel %vm456, %v1784, 0
    %v1803 = vsel %vm456, %v1786, 0
    %v1805 = vsel %vm456, %v1788, 0
    %v1807 = vsel %vm456, %v1790, 0
    %v1809 = vsel %vm456, %v1792, 0
    %v1811 = vsel %vm456, %v1794, 0
    %v1813 = vsel %vm456, %v1796, 0
    %v1815 = vsel %vm456, %v1798, 0
    %1817 = vmatprep.subr.mxu0 0.0
    %1818 = vmatpush1.xpose.msra.mxu0 0.0
    %1819 = vmatprep.subr.mxu0 0.0
    %1820 = vmatpush1.xpose.msra.mxu0 0.0
    %1821 = vmatprep.subr.mxu0 0.0
    %1822 = vmatpush1.xpose.msra.mxu0 0.0
    %1823 = vmatprep.subr.mxu0 0.0
    %1824 = vmatpush1.xpose.msra.mxu0 0.0
    %1825 = vmatprep.subr.mxu0 0.0
    %1826 = vmatpush1.xpose.msra.mxu0 0.0
    %1827 = vmatprep.subr.mxu0 0.0
    %1828 = vmatpush1.xpose.msra.mxu0 0.0
    %1829 = vmatprep.subr.mxu0 0.0
    %1830 = vmatpush1.xpose.msra.mxu0 0.0
    %1831 = vmatprep.subr.mxu0 0.0
    %1832 = vmatpush1.xpose.msra.mxu0 0.0
    %1833 = vmatprep.subr.mxu0 0.0
    %1834 = vmatpush1.xpose.msra.mxu0 %v1815
    %1835 = vmatprep.subr.mxu0 0.0
    %1836 = vmatpush1.xpose.msra.mxu0 %v1813
    %1837 = vmatprep.subr.mxu0 0.0
    %1838 = vmatpush1.xpose.msra.mxu0 %v1811
    %1839 = vmatprep.subr.mxu0 0.0
    %1840 = vmatpush1.xpose.msra.mxu0 %v1809
    %1841 = vmatprep.subr.mxu0 0.0
    %1842 = vmatpush1.xpose.msra.mxu0 %v1807
    %1843 = vmatprep.subr.mxu0 0.0
    %1844 = vmatpush1.xpose.msra.mxu0 %v1805
    %1845 = vmatprep.subr.mxu0 0.0
    %1846 = vmatpush1.xpose.msra.mxu0 %v1803
    %1847 = vmatprep.subr.mxu0 0.0
    %1848 = vmatpush1.xpose.msra.mxu0 %v1801
    %1849 = vmatprep.subr.mxu0 0.0
    %1850 = vmatpush2.xpose.msra.mxu0 0.0
    %1851 = vmatprep.subr.mxu0 0.0
    %1852 = vmatpush2.xpose.msra.mxu0 0.0
    %1853 = vmatprep.subr.mxu0 0.0
    %1854 = vmatpush2.xpose.msra.mxu0 0.0
    %1855 = vmatprep.subr.mxu0 0.0
    %1856 = vmatpush2.xpose.msra.mxu0 0.0
    %1857 = vmatprep.subr.mxu0 0.0
    %1858 = vmatpush2.xpose.msra.mxu0 0.0
    %1859 = vmatprep.subr.mxu0 0.0
    %1860 = vmatpush2.xpose.msra.mxu0 0.0
    %1861 = vmatprep.subr.mxu0 0.0
    %1862 = vmatpush2.xpose.msra.mxu0 0.0
    %1863 = vmatprep.subr.mxu0 0.0
    %1864 = vmatpush2.xpose.msra.mxu0 0.0
    %1865 = vmatprep.subr.mxu0 0.0
    %1866 = vmatpush2.xpose.msra.mxu0 0.0
    %1867 = vmatprep.subr.mxu0 0.0
    %1868 = vmatpush2.xpose.msra.mxu0 0.0
    %1869 = vmatprep.subr.mxu0 0.0
    %1870 = vmatpush2.xpose.msra.mxu0 0.0
    %1871 = vmatprep.subr.mxu0 0.0
    %1872 = vmatpush2.xpose.msra.mxu0 0.0
    %1873 = vmatprep.subr.mxu0 0.0
    %1874 = vmatpush2.xpose.msra.mxu0 0.0
    %1875 = vmatprep.subr.mxu0 0.0
    %1876 = vmatpush2.xpose.msra.mxu0 0.0
    %1877 = vmatprep.subr.mxu0 0.0
    %1878 = vmatpush2.xpose.msra.mxu0 0.0
    %1879 = vmatprep.subr.mxu0 0.0
    %1880 = vmatpush2.xpose.msra.mxu0 0.0
    %1881 = vmatprep.mubr.f32.mxu0 0.0
    %1882 = vmatmul.mubr.f32.gmra.mxu0 %v1799
    %v1883 = vpop.f32.mrf.mxu0
    %v1884 = vadd.f32 0.0, %v1883
    %v1885 = vpop.f32.mrf.mxu0
    %1886 = vdwg.mxu0
    %v1887 = vmul.f32 %v1884, 0.17677669
    %v1888 = vsel %vm115, %v1887, -1e+30
    %v1889 = vsel %vm556, %v1888, -inf
    %1890 = vmax.xlane.f32.xlu0 %v1889
    %v1891 = vpop.xlane.xlu0 %1890
    %v1892 = vsub.f32 %v1888, %v1891
    %v1893 = vmul.f32 %v1892, 1.442695
    %v1894 = vpow.pop %v1893
    %v1895 = vsel %vm556, %v1894, 0.0
    %1896 = vadd.xlane.f32.xlu0 %v1895
    %v1897 = vpop.xlane.xlu0 %1896
    %v1898 = vrcp.pop %v1897
    %v1899 = vmul.f32 %v1894, %v1898
    %1900 = vrot.lane.b32.xlu0 %v1348, 64
    %v1901 = vpop.permute.xlu0 %1900
    %1902 = vrot.lane.b32.xlu0 %v1349, 64
    %v1903 = vpop.permute.xlu0 %1902
    %1904 = vrot.lane.b32.xlu0 %v1350, 64
    %v1905 = vpop.permute.xlu0 %1904
    %1906 = vrot.lane.b32.xlu0 %v1351, 64
    %v1907 = vpop.permute.xlu0 %1906
    %1908 = vrot.lane.b32.xlu0 %v1352, 64
    %v1909 = vpop.permute.xlu0 %1908
    %1910 = vrot.lane.b32.xlu0 %v1353, 64
    %v1911 = vpop.permute.xlu0 %1910
    %1912 = vrot.lane.b32.xlu0 %v1354, 64
    %v1913 = vpop.permute.xlu0 %1912
    %1914 = vrot.lane.b32.xlu0 %v1355, 64
    %v1915 = vpop.permute.xlu0 %1914
    %v1925 = vsel %vm568, %v1899, 0
    %1927 = vmatprep.subr.mxu0 0.0
    %1928 = vmatpush1.msra.mxu0 0.0
    %1929 = vmatprep.subr.mxu0 0.0
    %1930 = vmatpush1.msra.mxu0 0.0
    %1931 = vmatprep.subr.mxu0 0.0
    %1932 = vmatpush1.msra.mxu0 0.0
    %1933 = vmatprep.subr.mxu0 0.0
    %1934 = vmatpush1.msra.mxu0 0.0
    %1935 = vmatprep.subr.mxu0 0.0
    %1936 = vmatpush1.msra.mxu0 0.0
    %1937 = vmatprep.subr.mxu0 0.0
    %1938 = vmatpush1.msra.mxu0 0.0
    %1939 = vmatprep.subr.mxu0 0.0
    %1940 = vmatpush1.msra.mxu0 0.0
    %1941 = vmatprep.subr.mxu0 0.0
    %1942 = vmatpush1.msra.mxu0 0.0
    %1943 = vmatprep.subr.mxu0 0.0
    %1944 = vmatpush1.msra.mxu0 %v1915
    %1945 = vmatprep.subr.mxu0 0.0
    %1946 = vmatpush1.msra.mxu0 %v1913
    %1947 = vmatprep.subr.mxu0 0.0
    %1948 = vmatpush1.msra.mxu0 %v1911
    %1949 = vmatprep.subr.mxu0 0.0
    %1950 = vmatpush1.msra.mxu0 %v1909
    %1951 = vmatprep.subr.mxu0 0.0
    %1952 = vmatpush1.msra.mxu0 %v1907
    %1953 = vmatprep.subr.mxu0 0.0
    %1954 = vmatpush1.msra.mxu0 %v1905
    %1955 = vmatprep.subr.mxu0 0.0
    %1956 = vmatpush1.msra.mxu0 %v1903
    %1957 = vmatprep.subr.mxu0 0.0
    %1958 = vmatpush1.msra.mxu0 %v1901
    %1959 = vmatprep.subr.mxu0 0.0
    %1960 = vmatpush2.msra.mxu0 0.0
    %1961 = vmatprep.subr.mxu0 0.0
    %1962 = vmatpush2.msra.mxu0 0.0
    %1963 = vmatprep.subr.mxu0 0.0
    %1964 = vmatpush2.msra.mxu0 0.0
    %1965 = vmatprep.subr.mxu0 0.0
    %1966 = vmatpush2.msra.mxu0 0.0
    %1967 = vmatprep.subr.mxu0 0.0
    %1968 = vmatpush2.msra.mxu0 0.0
    %1969 = vmatprep.subr.mxu0 0.0
    %1970 = vmatpush2.msra.mxu0 0.0
    %1971 = vmatprep.subr.mxu0 0.0
    %1972 = vmatpush2.msra.mxu0 0.0
    %1973 = vmatprep.subr.mxu0 0.0
    %1974 = vmatpush2.msra.mxu0 0.0
    %1975 = vmatprep.subr.mxu0 0.0
    %1976 = vmatpush2.msra.mxu0 0.0
    %1977 = vmatprep.subr.mxu0 0.0
    %1978 = vmatpush2.msra.mxu0 0.0
    %1979 = vmatprep.subr.mxu0 0.0
    %1980 = vmatpush2.msra.mxu0 0.0
    %1981 = vmatprep.subr.mxu0 0.0
    %1982 = vmatpush2.msra.mxu0 0.0
    %1983 = vmatprep.subr.mxu0 0.0
    %1984 = vmatpush2.msra.mxu0 0.0
    %1985 = vmatprep.subr.mxu0 0.0
    %1986 = vmatpush2.msra.mxu0 0.0
    %1987 = vmatprep.subr.mxu0 0.0
    %1988 = vmatpush2.msra.mxu0 0.0
    %1989 = vmatprep.subr.mxu0 0.0
    %1990 = vmatpush2.msra.mxu0 0.0
    %1991 = vmatprep.mubr.f32.mxu0 0.0
    %1992 = vmatmul.mubr.f32.gmra.mxu0 %v1925
    %v1993 = vpop.f32.mrf.mxu0
    %v1994 = vadd.f32 0.0, %v1993
    %v1995 = vpop.f32.mrf.mxu0
    %1996 = vdwg.mxu0
    %1997 = vrot.lane.b32.xlu0 %v1374, 32
    %v1998 = vpop.permute.xlu0 %1997
    %1999 = vrot.lane.b32.xlu0 %v1327, 32
    %v2000 = vpop.permute.xlu0 %1999
    %2001 = vrot.lane.b32.xlu0 %v1328, 32
    %v2002 = vpop.permute.xlu0 %2001
    %2003 = vrot.lane.b32.xlu0 %v1329, 32
    %v2004 = vpop.permute.xlu0 %2003
    %2005 = vrot.lane.b32.xlu0 %v1330, 32
    %v2006 = vpop.permute.xlu0 %2005
    %2007 = vrot.lane.b32.xlu0 %v1331, 32
    %v2008 = vpop.permute.xlu0 %2007
    %2009 = vrot.lane.b32.xlu0 %v1332, 32
    %v2010 = vpop.permute.xlu0 %2009
    %2011 = vrot.lane.b32.xlu0 %v1333, 32
    %v2012 = vpop.permute.xlu0 %2011
    %2013 = vrot.lane.b32.xlu0 %v1334, 32
    %v2014 = vpop.permute.xlu0 %2013
    %v2015 = vsel %vm456, %v1998, 0
    %v2017 = vsel %vm456, %v2000, 0
    %v2019 = vsel %vm456, %v2002, 0
    %v2021 = vsel %vm456, %v2004, 0
    %v2023 = vsel %vm456, %v2006, 0
    %v2025 = vsel %vm456, %v2008, 0
    %v2027 = vsel %vm456, %v2010, 0
    %v2029 = vsel %vm456, %v2012, 0
    %v2031 = vsel %vm456, %v2014, 0
    %2033 = vmatprep.subr.mxu0 0.0
    %2034 = vmatpush1.xpose.msra.mxu0 0.0
    %2035 = vmatprep.subr.mxu0 0.0
    %2036 = vmatpush1.xpose.msra.mxu0 0.0
    %2037 = vmatprep.subr.mxu0 0.0
    %2038 = vmatpush1.xpose.msra.mxu0 0.0
    %2039 = vmatprep.subr.mxu0 0.0
    %2040 = vmatpush1.xpose.msra.mxu0 0.0
    %2041 = vmatprep.subr.mxu0 0.0
    %2042 = vmatpush1.xpose.msra.mxu0 0.0
    %2043 = vmatprep.subr.mxu0 0.0
    %2044 = vmatpush1.xpose.msra.mxu0 0.0
    %2045 = vmatprep.subr.mxu0 0.0
    %2046 = vmatpush1.xpose.msra.mxu0 0.0
    %2047 = vmatprep.subr.mxu0 0.0
    %2048 = vmatpush1.xpose.msra.mxu0 0.0
    %2049 = vmatprep.subr.mxu0 0.0
    %2050 = vmatpush1.xpose.msra.mxu0 %v2031
    %2051 = vmatprep.subr.mxu0 0.0
    %2052 = vmatpush1.xpose.msra.mxu0 %v2029
    %2053 = vmatprep.subr.mxu0 0.0
    %2054 = vmatpush1.xpose.msra.mxu0 %v2027
    %2055 = vmatprep.subr.mxu0 0.0
    %2056 = vmatpush1.xpose.msra.mxu0 %v2025
    %2057 = vmatprep.subr.mxu0 0.0
    %2058 = vmatpush1.xpose.msra.mxu0 %v2023
    %2059 = vmatprep.subr.mxu0 0.0
    %2060 = vmatpush1.xpose.msra.mxu0 %v2021
    %2061 = vmatprep.subr.mxu0 0.0
    %2062 = vmatpush1.xpose.msra.mxu0 %v2019
    %2063 = vmatprep.subr.mxu0 0.0
    %2064 = vmatpush1.xpose.msra.mxu0 %v2017
    %2065 = vmatprep.subr.mxu0 0.0
    %2066 = vmatpush2.xpose.msra.mxu0 0.0
    %2067 = vmatprep.subr.mxu0 0.0
    %2068 = vmatpush2.xpose.msra.mxu0 0.0
    %2069 = vmatprep.subr.mxu0 0.0
    %2070 = vmatpush2.xpose.msra.mxu0 0.0
    %2071 = vmatprep.subr.mxu0 0.0
    %2072 = vmatpush2.xpose.msra.mxu0 0.0
    %2073 = vmatprep.subr.mxu0 0.0
    %2074 = vmatpush2.xpose.msra.mxu0 0.0
    %2075 = vmatprep.subr.mxu0 0.0
    %2076 = vmatpush2.xpose.msra.mxu0 0.0
    %2077 = vmatprep.subr.mxu0 0.0
    %2078 = vmatpush2.xpose.msra.mxu0 0.0
    %2079 = vmatprep.subr.mxu0 0.0
    %2080 = vmatpush2.xpose.msra.mxu0 0.0
    %2081 = vmatprep.subr.mxu0 0.0
    %2082 = vmatpush2.xpose.msra.mxu0 0.0
    %2083 = vmatprep.subr.mxu0 0.0
    %2084 = vmatpush2.xpose.msra.mxu0 0.0
    %2085 = vmatprep.subr.mxu0 0.0
    %2086 = vmatpush2.xpose.msra.mxu0 0.0
    %2087 = vmatprep.subr.mxu0 0.0
    %2088 = vmatpush2.xpose.msra.mxu0 0.0
    %2089 = vmatprep.subr.mxu0 0.0
    %2090 = vmatpush2.xpose.msra.mxu0 0.0
    %2091 = vmatprep.subr.mxu0 0.0
    %2092 = vmatpush2.xpose.msra.mxu0 0.0
    %2093 = vmatprep.subr.mxu0 0.0
    %2094 = vmatpush2.xpose.msra.mxu0 0.0
    %2095 = vmatprep.subr.mxu0 0.0
    %2096 = vmatpush2.xpose.msra.mxu0 0.0
    %2097 = vmatprep.mubr.f32.mxu0 0.0
    %2098 = vmatmul.mubr.f32.gmra.mxu0 %v2015
    %v2099 = vpop.f32.mrf.mxu0
    %v2100 = vadd.f32 0.0, %v2099
    %v2101 = vpop.f32.mrf.mxu0
    %2102 = vdwg.mxu0
    %v2103 = vmul.f32 %v2100, 0.17677669
    %v2104 = vsel %vm115, %v2103, -1e+30
    %v2105 = vsel %vm556, %v2104, -inf
    %2106 = vmax.xlane.f32.xlu0 %v2105
    %v2107 = vpop.xlane.xlu0 %2106
    %v2108 = vsub.f32 %v2104, %v2107
    %v2109 = vmul.f32 %v2108, 1.442695
    %v2110 = vpow.pop %v2109
    %v2111 = vsel %vm556, %v2110, 0.0
    %2112 = vadd.xlane.f32.xlu0 %v2111
    %v2113 = vpop.xlane.xlu0 %2112
    %v2114 = vrcp.pop %v2113
    %v2115 = vmul.f32 %v2110, %v2114
    %2116 = vrot.lane.b32.xlu0 %v1348, 32
    %v2117 = vpop.permute.xlu0 %2116
    %2118 = vrot.lane.b32.xlu0 %v1349, 32
    %v2119 = vpop.permute.xlu0 %2118
    %2120 = vrot.lane.b32.xlu0 %v1350, 32
    %v2121 = vpop.permute.xlu0 %2120
    %2122 = vrot.lane.b32.xlu0 %v1351, 32
    %v2123 = vpop.permute.xlu0 %2122
    %2124 = vrot.lane.b32.xlu0 %v1352, 32
    %v2125 = vpop.permute.xlu0 %2124
    %2126 = vrot.lane.b32.xlu0 %v1353, 32
    %v2127 = vpop.permute.xlu0 %2126
    %2128 = vrot.lane.b32.xlu0 %v1354, 32
    %v2129 = vpop.permute.xlu0 %2128
    %2130 = vrot.lane.b32.xlu0 %v1355, 32
    %v2131 = vpop.permute.xlu0 %2130
    %v2141 = vsel %vm568, %v2115, 0
    %2143 = vmatprep.subr.mxu0 0.0
    %2144 = vmatpush1.msra.mxu0 0.0
    %2145 = vmatprep.subr.mxu0 0.0
    %2146 = vmatpush1.msra.mxu0 0.0
    %2147 = vmatprep.subr.mxu0 0.0
    %2148 = vmatpush1.msra.mxu0 0.0
    %2149 = vmatprep.subr.mxu0 0.0
    %2150 = vmatpush1.msra.mxu0 0.0
    %2151 = vmatprep.subr.mxu0 0.0
    %2152 = vmatpush1.msra.mxu0 0.0
    %2153 = vmatprep.subr.mxu0 0.0
    %2154 = vmatpush1.msra.mxu0 0.0
    %2155 = vmatprep.subr.mxu0 0.0
    %2156 = vmatpush1.msra.mxu0 0.0
    %2157 = vmatprep.subr.mxu0 0.0
    %2158 = vmatpush1.msra.mxu0 0.0
    %2159 = vmatprep.subr.mxu0 0.0
    %2160 = vmatpush1.msra.mxu0 %v2131
    %2161 = vmatprep.subr.mxu0 0.0
    %2162 = vmatpush1.msra.mxu0 %v2129
    %2163 = vmatprep.subr.mxu0 0.0
    %2164 = vmatpush1.msra.mxu0 %v2127
    %2165 = vmatprep.subr.mxu0 0.0
    %2166 = vmatpush1.msra.mxu0 %v2125
    %2167 = vmatprep.subr.mxu0 0.0
    %2168 = vmatpush1.msra.mxu0 %v2123
    %2169 = vmatprep.subr.mxu0 0.0
    %2170 = vmatpush1.msra.mxu0 %v2121
    %2171 = vmatprep.subr.mxu0 0.0
    %2172 = vmatpush1.msra.mxu0 %v2119
    %2173 = vmatprep.subr.mxu0 0.0
    %2174 = vmatpush1.msra.mxu0 %v2117
    %2175 = vmatprep.subr.mxu0 0.0
    %2176 = vmatpush2.msra.mxu0 0.0
    %2177 = vmatprep.subr.mxu0 0.0
    %2178 = vmatpush2.msra.mxu0 0.0
    %2179 = vmatprep.subr.mxu0 0.0
    %2180 = vmatpush2.msra.mxu0 0.0
    %2181 = vmatprep.subr.mxu0 0.0
    %2182 = vmatpush2.msra.mxu0 0.0
    %2183 = vmatprep.subr.mxu0 0.0
    %2184 = vmatpush2.msra.mxu0 0.0
    %2185 = vmatprep.subr.mxu0 0.0
    %2186 = vmatpush2.msra.mxu0 0.0
    %2187 = vmatprep.subr.mxu0 0.0
    %2188 = vmatpush2.msra.mxu0 0.0
    %2189 = vmatprep.subr.mxu0 0.0
    %2190 = vmatpush2.msra.mxu0 0.0
    %2191 = vmatprep.subr.mxu0 0.0
    %2192 = vmatpush2.msra.mxu0 0.0
    %2193 = vmatprep.subr.mxu0 0.0
    %2194 = vmatpush2.msra.mxu0 0.0
    %2195 = vmatprep.subr.mxu0 0.0
    %2196 = vmatpush2.msra.mxu0 0.0
    %2197 = vmatprep.subr.mxu0 0.0
    %2198 = vmatpush2.msra.mxu0 0.0
    %2199 = vmatprep.subr.mxu0 0.0
    %2200 = vmatpush2.msra.mxu0 0.0
    %2201 = vmatprep.subr.mxu0 0.0
    %2202 = vmatpush2.msra.mxu0 0.0
    %2203 = vmatprep.subr.mxu0 0.0
    %2204 = vmatpush2.msra.mxu0 0.0
    %2205 = vmatprep.subr.mxu0 0.0
    %2206 = vmatpush2.msra.mxu0 0.0
    %2207 = vmatprep.mubr.f32.mxu0 0.0
    %2208 = vmatmul.mubr.f32.gmra.mxu0 %v2141
    %v2209 = vpop.f32.mrf.mxu0
    %v2210 = vadd.f32 0.0, %v2209
    %v2211 = vpop.f32.mrf.mxu0
    %2212 = vdwg.mxu0
    %2214 = vrot.lane.b32.xlu0 %v1778, 32
    %v2215 = vpop.permute.xlu0 %2214
    %2218 = vrot.lane.b32.xlu0 %v1994, 64
    %v2219 = vpop.permute.xlu0 %2218
    %2222 = vrot.lane.b32.xlu0 %v2210, 96
    %v2223 = vpop.permute.xlu0 %2222
    %v2225 = vsel %vm456, %v1554, %v2215
    %v2226 = vsel %vm568, %v2225, %v2219
    %v2227 = vsel %vm1312, %v2226, %v2223
    %v2229 = vrot.slane %v2227, 7
    %vm2231 = vcmask 1040384
    %v2232 = vsel %vm2231, %v1313, %v2229
    %v2233 = vld [vmem:[#allocation5] sm:$0xf]
    %v2234 = vld [vmem:[#allocation5 + $0x4] sm:$0xf]
    %v2235 = vld [vmem:[#allocation5 + $0x8] sm:$0xf]
    %v2236 = vld [vmem:[#allocation5 + $0xc] sm:$0xf]
    %v2237 = vld [vmem:[#allocation5 + $0x10] sm:$0xf]
    %v2238 = vld [vmem:[#allocation5 + $0x14] sm:$0xf]
    %v2239 = vld [vmem:[#allocation5 + $0x18] sm:$0xf]
    %v2240 = vld [vmem:[#allocation5 + $0x1c] sm:$0xf]
    %v2241 = vld [vmem:[#allocation5 + $0x20] sm:$0xf]
    %v2242 = vld [vmem:[#allocation5 + $0x24] sm:$0xf]
    %v2243 = vld [vmem:[#allocation5 + $0x28] sm:$0xf]
    %v2244 = vld [vmem:[#allocation5 + $0x2c] sm:$0xf]
    %v2245 = vld [vmem:[#allocation5 + $0x30] sm:$0xf]
    %v2246 = vld [vmem:[#allocation5 + $0x34] sm:$0xf]
    %v2247 = vld [vmem:[#allocation5 + $0x38] sm:$0xf]
    %v2248 = vld [vmem:[#allocation5 + $0x3c] sm:$0xf]
    %v2249 = vpack.c.bf16 %v2232, %v2232
    %v2266 = vunpack.c.l.b16 %v2233
    %v2267 = vunpack.c.l.b16 %v2234
    %v2268 = vunpack.c.l.b16 %v2235
    %v2269 = vunpack.c.l.b16 %v2236
    %v2270 = vunpack.c.l.b16 %v2237
    %v2271 = vunpack.c.l.b16 %v2238
    %v2272 = vunpack.c.l.b16 %v2239
    %v2273 = vunpack.c.l.b16 %v2240
    %v2274 = vunpack.c.l.b16 %v2241
    %v2275 = vunpack.c.l.b16 %v2242
    %v2276 = vunpack.c.l.b16 %v2243
    %v2277 = vunpack.c.l.b16 %v2244
    %v2278 = vunpack.c.l.b16 %v2245
    %v2279 = vunpack.c.l.b16 %v2246
    %v2280 = vunpack.c.l.b16 %v2247
    %v2281 = vunpack.c.l.b16 %v2248
    %v2282 = vpack.c.b16 %v2267, %v2266
    %v2283 = vpack.c.b16 %v2269, %v2268
    %v2284 = vpack.c.b16 %v2271, %v2270
    %v2285 = vpack.c.b16 %v2273, %v2272
    %v2286 = vpack.c.b16 %v2275, %v2274
    %v2287 = vpack.c.b16 %v2277, %v2276
    %v2288 = vpack.c.b16 %v2279, %v2278
    %v2289 = vpack.c.b16 %v2281, %v2280
    %2298 = vmatprep.subr.bf16.mxu0 0
    %2299 = vmatpush1.bf16.msra.mxu0 %v2289
    %2300 = vmatprep.subr.bf16.mxu0 0
    %2301 = vmatpush1.bf16.msra.mxu0 %v2288
    %2302 = vmatprep.subr.bf16.mxu0 0
    %2303 = vmatpush1.bf16.msra.mxu0 %v2287
    %2304 = vmatprep.subr.bf16.mxu0 0
    %2305 = vmatpush1.bf16.msra.mxu0 %v2286
    %2306 = vmatprep.subr.bf16.mxu0 0
    %2307 = vmatpush1.bf16.msra.mxu0 %v2285
    %2308 = vmatprep.subr.bf16.mxu0 0
    %2309 = vmatpush1.bf16.msra.mxu0 %v2284
    %2310 = vmatprep.subr.bf16.mxu0 0
    %2311 = vmatpush1.bf16.msra.mxu0 %v2283
    %2312 = vmatprep.subr.bf16.mxu0 0
    %2313 = vmatpush1.bf16.msra.mxu0 %v2282
    %2314 = vmatprep.subr.bf16.mxu0 0
    %2315 = vmatpush2.bf16.msra.mxu0 0
    %2316 = vmatprep.subr.bf16.mxu0 0
    %2317 = vmatpush2.bf16.msra.mxu0 0
    %2318 = vmatprep.subr.bf16.mxu0 0
    %2319 = vmatpush2.bf16.msra.mxu0 0
    %2320 = vmatprep.subr.bf16.mxu0 0
    %2321 = vmatpush2.bf16.msra.mxu0 0
    %2322 = vmatprep.subr.bf16.mxu0 0
    %2323 = vmatpush2.bf16.msra.mxu0 0
    %2324 = vmatprep.subr.bf16.mxu0 0
    %2325 = vmatpush2.bf16.msra.mxu0 0
    %2326 = vmatprep.subr.bf16.mxu0 0
    %2327 = vmatpush2.bf16.msra.mxu0 0
    %2328 = vmatprep.subr.bf16.mxu0 0
    %2329 = vmatpush2.bf16.msra.mxu0 0
    %2330 = vmatprep.mubr.bf16.mxu0 0
    %2331 = vmatmul.mubr.bf16.gmra.mxu0 %v2249
    %v2332 = vpop.f32.mrf.mxu0
    %v2333 = vadd.f32 0.0, %v2332
    %v2334 = vpop.f32.mrf.mxu0
    %v2335 = vpop.f32.mrf.mxu0
    %v2336 = vpop.f32.mrf.mxu0
    %2337 = vdwg.mxu0
    %v2338 = vadd.f32 %v102, %v2333
    %v2339 = vld [vmem:[%s5] sm:$0x1]
    %v2340 = vmul.f32 %v2338, %v2338
    %v2341 = vsel %vm126, %v2340, 0.0
    %2342 = vadd.xlane.f32.xlu0 %v2341
    %v2343 = vpop.xlane.xlu0 %2342
    %v2344 = vmul.f32 %v2343, %v130
    %v2345 = vadd.f32 %v2344, 1e-05
    %v2346 = vrsqrt.pop %v2345
    %v2347 = vmul.f32 %v2338, %v2346
    %v2349 = vlaneseq
    %v2350 = vshrl.u32 %v2349, 7
    %v2351 = vsub.s32 0, %v2350
    %v2352 = vrot.slane %v2339, %v2351
    %v2354 = vmul.f32 %v2347, %v2352
    %v2355 = vld [vmem:[%s6] sm:$0xff]
    %v2356 = vld [vmem:[%s6 + $0x8] sm:$0xff]
    %v2357 = vld [vmem:[%s6 + $0x10] sm:$0xff]
    %v2358 = vld [vmem:[%s6 + $0x18] sm:$0xff]
    %v2359 = vld [vmem:[%s6 + $0x20] sm:$0xff]
    %v2360 = vld [vmem:[%s6 + $0x28] sm:$0xff]
    %v2361 = vld [vmem:[%s6 + $0x30] sm:$0xff]
    %v2362 = vld [vmem:[%s6 + $0x38] sm:$0xff]
    %v2363 = vld [vmem:[%s6 + $0x40] sm:$0xff]
    %v2364 = vld [vmem:[%s6 + $0x48] sm:$0xff]
    %v2365 = vld [vmem:[%s6 + $0x50] sm:$0xff]
    %v2366 = vld [vmem:[%s6 + $0x58] sm:$0xff]
    %v2367 = vld [vmem:[%s6 + $0x60] sm:$0xff]
    %v2368 = vld [vmem:[%s6 + $0x68] sm:$0xff]
    %v2369 = vld [vmem:[%s6 + $0x70] sm:$0xff]
    %v2370 = vld [vmem:[%s6 + $0x78] sm:$0xff]
    %v2371 = vld [vmem:[%s6 + $0x80] sm:$0xff]
    %v2372 = vld [vmem:[%s6 + $0x88] sm:$0xff]
    %v2373 = vld [vmem:[%s6 + $0x90] sm:$0xff]
    %v2374 = vld [vmem:[%s6 + $0x98] sm:$0xff]
    %v2375 = vld [vmem:[%s6 + $0xa0] sm:$0xff]
    %v2376 = vld [vmem:[%s6 + $0xa8] sm:$0xff]
    %v2377 = vld [vmem:[%s6 + $0xb0] sm:$0xff]
    %v2378 = vld [vmem:[%s6 + $0xb8] sm:$0xff]
    %v2379 = vld [vmem:[%s6 + $0xc0] sm:$0xff]
    %v2380 = vld [vmem:[%s6 + $0xc8] sm:$0xff]
    %v2381 = vld [vmem:[%s6 + $0xd0] sm:$0xff]
    %v2382 = vld [vmem:[%s6 + $0xd8] sm:$0xff]
    %v2383 = vld [vmem:[%s6 + $0xe0] sm:$0xff]
    %v2384 = vld [vmem:[%s6 + $0xe8] sm:$0xff]
    %v2385 = vld [vmem:[%s6 + $0xf0] sm:$0xff]
    %v2386 = vld [vmem:[%s6 + $0xf8] sm:$0xff]
    %v2387 = vpack.c.bf16 %v2354, %v2354
    %v2420 = vunpack.c.l.b16 %v2355
    %v2421 = vunpack.c.h.b16 %v2355
    %v2422 = vunpack.c.l.b16 %v2356
    %v2423 = vunpack.c.h.b16 %v2356
    %v2424 = vunpack.c.l.b16 %v2357
    %v2425 = vunpack.c.h.b16 %v2357
    %v2426 = vunpack.c.l.b16 %v2358
    %v2427 = vunpack.c.h.b16 %v2358
    %v2428 = vunpack.c.l.b16 %v2359
    %v2429 = vunpack.c.h.b16 %v2359
    %v2430 = vunpack.c.l.b16 %v2360
    %v2431 = vunpack.c.h.b16 %v2360
    %v2432 = vunpack.c.l.b16 %v2361
    %v2433 = vunpack.c.h.b16 %v2361
    %v2434 = vunpack.c.l.b16 %v2362
    %v2435 = vunpack.c.h.b16 %v2362
    %v2436 = vunpack.c.l.b16 %v2363
    %v2437 = vunpack.c.h.b16 %v2363
    %v2438 = vunpack.c.l.b16 %v2364
    %v2439 = vunpack.c.h.b16 %v2364
    %v2440 = vunpack.c.l.b16 %v2365
    %v2441 = vunpack.c.h.b16 %v2365
    %v2442 = vunpack.c.l.b16 %v2366
    %v2443 = vunpack.c.h.b16 %v2366
    %v2444 = vunpack.c.l.b16 %v2367
    %v2445 = vunpack.c.h.b16 %v2367
    %v2446 = vunpack.c.l.b16 %v2368
    %v2447 = vunpack.c.h.b16 %v2368
    %v2448 = vunpack.c.l.b16 %v2369
    %v2449 = vunpack.c.h.b16 %v2369
    %v2450 = vunpack.c.l.b16 %v2370
    %v2451 = vunpack.c.h.b16 %v2370
    %v2452 = vunpack.c.l.b16 %v2371
    %v2453 = vunpack.c.h.b16 %v2371
    %v2454 = vunpack.c.l.b16 %v2372
    %v2455 = vunpack.c.h.b16 %v2372
    %v2456 = vunpack.c.l.b16 %v2373
    %v2457 = vunpack.c.h.b16 %v2373
    %v2458 = vunpack.c.l.b16 %v2374
    %v2459 = vunpack.c.h.b16 %v2374
    %v2460 = vunpack.c.l.b16 %v2375
    %v2461 = vunpack.c.h.b16 %v2375
    %v2462 = vunpack.c.l.b16 %v2376
    %v2463 = vunpack.c.h.b16 %v2376
    %v2464 = vunpack.c.l.b16 %v2377
    %v2465 = vunpack.c.h.b16 %v2377
    %v2466 = vunpack.c.l.b16 %v2378
    %v2467 = vunpack.c.h.b16 %v2378
    %v2468 = vunpack.c.l.b16 %v2379
    %v2469 = vunpack.c.h.b16 %v2379
    %v2470 = vunpack.c.l.b16 %v2380
    %v2471 = vunpack.c.h.b16 %v2380
    %v2472 = vunpack.c.l.b16 %v2381
    %v2473 = vunpack.c.h.b16 %v2381
    %v2474 = vunpack.c.l.b16 %v2382
    %v2475 = vunpack.c.h.b16 %v2382
    %v2476 = vunpack.c.l.b16 %v2383
    %v2477 = vunpack.c.h.b16 %v2383
    %v2478 = vunpack.c.l.b16 %v2384
    %v2479 = vunpack.c.h.b16 %v2384
    %v2480 = vunpack.c.l.b16 %v2385
    %v2481 = vunpack.c.h.b16 %v2385
    %v2482 = vunpack.c.l.b16 %v2386
    %v2483 = vunpack.c.h.b16 %v2386
    %v2484 = vpack.c.b16 %v2424, %v2420
    %v2485 = vpack.c.b16 %v2425, %v2421
    %v2486 = vpack.c.b16 %v2426, %v2422
    %v2487 = vpack.c.b16 %v2427, %v2423
    %v2488 = vpack.c.b16 %v2432, %v2428
    %v2489 = vpack.c.b16 %v2433, %v2429
    %v2490 = vpack.c.b16 %v2434, %v2430
    %v2491 = vpack.c.b16 %v2435, %v2431
    %v2492 = vpack.c.b16 %v2440, %v2436
    %v2493 = vpack.c.b16 %v2441, %v2437
    %v2494 = vpack.c.b16 %v2442, %v2438
    %v2495 = vpack.c.b16 %v2443, %v2439
    %v2496 = vpack.c.b16 %v2448, %v2444
    %v2497 = vpack.c.b16 %v2449, %v2445
    %v2498 = vpack.c.b16 %v2450, %v2446
    %v2499 = vpack.c.b16 %v2451, %v2447
    %v2500 = vpack.c.b16 %v2456, %v2452
    %v2501 = vpack.c.b16 %v2457, %v2453
    %v2502 = vpack.c.b16 %v2458, %v2454
    %v2503 = vpack.c.b16 %v2459, %v2455
    %v2504 = vpack.c.b16 %v2464, %v2460
    %v2505 = vpack.c.b16 %v2465, %v2461
    %v2506 = vpack.c.b16 %v2466, %v2462
    %v2507 = vpack.c.b16 %v2467, %v2463
    %v2508 = vpack.c.b16 %v2472, %v2468
    %v2509 = vpack.c.b16 %v2473, %v2469
    %v2510 = vpack.c.b16 %v2474, %v2470
    %v2511 = vpack.c.b16 %v2475, %v2471
    %v2512 = vpack.c.b16 %v2480, %v2476
    %v2513 = vpack.c.b16 %v2481, %v2477
    %v2514 = vpack.c.b16 %v2482, %v2478
    %v2515 = vpack.c.b16 %v2483, %v2479
    %2548 = vmatprep.subr.bf16.mxu0 %v2513
    %2549 = vmatpush1.bf16.msra.mxu0 %v2512
    %2550 = vmatprep.subr.bf16.mxu0 %v2509
    %2551 = vmatpush1.bf16.msra.mxu0 %v2508
    %2552 = vmatprep.subr.bf16.mxu0 %v2505
    %2553 = vmatpush1.bf16.msra.mxu0 %v2504
    %2554 = vmatprep.subr.bf16.mxu0 %v2501
    %2555 = vmatpush1.bf16.msra.mxu0 %v2500
    %2556 = vmatprep.subr.bf16.mxu0 %v2497
    %2557 = vmatpush1.bf16.msra.mxu0 %v2496
    %2558 = vmatprep.subr.bf16.mxu0 %v2493
    %2559 = vmatpush1.bf16.msra.mxu0 %v2492
    %2560 = vmatprep.subr.bf16.mxu0 %v2489
    %2561 = vmatpush1.bf16.msra.mxu0 %v2488
    %2562 = vmatprep.subr.bf16.mxu0 %v2485
    %2563 = vmatpush1.bf16.msra.mxu0 %v2484
    %2564 = vmatprep.subr.bf16.mxu0 0
    %2565 = vmatpush2.bf16.msra.mxu0 0
    %2566 = vmatprep.subr.bf16.mxu0 0
    %2567 = vmatpush2.bf16.msra.mxu0 0
    %2568 = vmatprep.subr.bf16.mxu0 0
    %2569 = vmatpush2.bf16.msra.mxu0 0
    %2570 = vmatprep.subr.bf16.mxu0 0
    %2571 = vmatpush2.bf16.msra.mxu0 0
    %2572 = vmatprep.subr.bf16.mxu0 0
    %2573 = vmatpush2.bf16.msra.mxu0 0
    %2574 = vmatprep.subr.bf16.mxu0 0
    %2575 = vmatpush2.bf16.msra.mxu0 0
    %2576 = vmatprep.subr.bf16.mxu0 0
    %2577 = vmatpush2.bf16.msra.mxu0 0
    %2578 = vmatprep.subr.bf16.mxu0 0
    %2579 = vmatpush2.bf16.msra.mxu0 0
    %2580 = vmatprep.mubr.bf16.mxu0 0
    %2581 = vmatmul.mubr.bf16.gmra.mxu0 %v2387
    %v2582 = vpop.f32.mrf.mxu0
    %v2583 = vadd.f32 0.0, %v2582
    %v2584 = vpop.f32.mrf.mxu0
    %v2585 = vadd.f32 0.0, %v2584
    %v2586 = vpop.f32.mrf.mxu0
    %v2587 = vpop.f32.mrf.mxu0
    %2588 = vdwg.mxu0
    %2589 = vmatprep.subr.bf16.mxu0 %v2515
    %2590 = vmatpush1.bf16.msra.mxu0 %v2514
    %2591 = vmatprep.subr.bf16.mxu0 %v2511
    %2592 = vmatpush1.bf16.msra.mxu0 %v2510
    %2593 = vmatprep.subr.bf16.mxu0 %v2507
    %2594 = vmatpush1.bf16.msra.mxu0 %v2506
    %2595 = vmatprep.subr.bf16.mxu0 %v2503
    %2596 = vmatpush1.bf16.msra.mxu0 %v2502
    %2597 = vmatprep.subr.bf16.mxu0 %v2499
    %2598 = vmatpush1.bf16.msra.mxu0 %v2498
    %2599 = vmatprep.subr.bf16.mxu0 %v2495
    %2600 = vmatpush1.bf16.msra.mxu0 %v2494
    %2601 = vmatprep.subr.bf16.mxu0 %v2491
    %2602 = vmatpush1.bf16.msra.mxu0 %v2490
    %2603 = vmatprep.subr.bf16.mxu0 %v2487
    %2604 = vmatpush1.bf16.msra.mxu0 %v2486
    %2605 = vmatprep.subr.bf16.mxu0 0
    %2606 = vmatpush2.bf16.msra.mxu0 0
    %2607 = vmatprep.subr.bf16.mxu0 0
    %2608 = vmatpush2.bf16.msra.mxu0 0
    %2609 = vmatprep.subr.bf16.mxu0 0
    %2610 = vmatpush2.bf16.msra.mxu0 0
    %2611 = vmatprep.subr.bf16.mxu0 0
    %2612 = vmatpush2.bf16.msra.mxu0 0
    %2613 = vmatprep.subr.bf16.mxu0 0
    %2614 = vmatpush2.bf16.msra.mxu0 0
    %2615 = vmatprep.subr.bf16.mxu0 0
    %2616 = vmatpush2.bf16.msra.mxu0 0
    %2617 = vmatprep.subr.bf16.mxu0 0
    %2618 = vmatpush2.bf16.msra.mxu0 0
    %2619 = vmatprep.subr.bf16.mxu0 0
    %2620 = vmatpush2.bf16.msra.mxu0 0
    %2621 = vmatprep.mubr.bf16.mxu0 0
    %2622 = vmatmul.mubr.bf16.gmra.mxu0 %v2387
    %v2623 = vpop.f32.mrf.mxu0
    %v2624 = vadd.f32 0.0, %v2623
    %v2625 = vpop.f32.mrf.mxu0
    %v2626 = vadd.f32 0.0, %v2625
    %v2627 = vpop.f32.mrf.mxu0
    %v2628 = vpop.f32.mrf.mxu0
    %2629 = vdwg.mxu0
    %v2630 = vxor.u32 %v2583, 2147483648
    %v2631 = vxor.u32 %v2585, 2147483648
    %v2632 = vmul.f32 %v2630, 1.442695
    %v2633 = vpow.pop %v2632
    %v2634 = vmul.f32 %v2631, 1.442695
    %v2635 = vpow.pop %v2634
    %v2636 = vadd.f32 %v2633, 1.0
    %v2637 = vadd.f32 %v2635, 1.0
    %v2638 = vrcp.pop %v2636
    %v2639 = vmul.f32 1.0, %v2638
    %v2640 = vrcp.pop %v2637
    %v2641 = vmul.f32 1.0, %v2640
    %v2642 = vmul.f32 %v2583, %v2639
    %v2643 = vmul.f32 %v2585, %v2641
    %v2644 = vmul.f32 %v2642, %v2624
    %v2645 = vmul.f32 %v2643, %v2626
    %v2646 = vld [vmem:[#allocation7] sm:$0xf]
    %v2647 = vld [vmem:[#allocation7 + $0x4] sm:$0xf]
    %v2648 = vld [vmem:[#allocation7 + $0x8] sm:$0xf]
    %v2649 = vld [vmem:[#allocation7 + $0xc] sm:$0xf]
    %v2650 = vld [vmem:[#allocation7 + $0x10] sm:$0xf]
    %v2651 = vld [vmem:[#allocation7 + $0x14] sm:$0xf]
    %v2652 = vld [vmem:[#allocation7 + $0x18] sm:$0xf]
    %v2653 = vld [vmem:[#allocation7 + $0x1c] sm:$0xf]
    %v2654 = vld [vmem:[#allocation7 + $0x20] sm:$0xf]
    %v2655 = vld [vmem:[#allocation7 + $0x24] sm:$0xf]
    %v2656 = vld [vmem:[#allocation7 + $0x28] sm:$0xf]
    %v2657 = vld [vmem:[#allocation7 + $0x2c] sm:$0xf]
    %v2658 = vld [vmem:[#allocation7 + $0x30] sm:$0xf]
    %v2659 = vld [vmem:[#allocation7 + $0x34] sm:$0xf]
    %v2660 = vld [vmem:[#allocation7 + $0x38] sm:$0xf]
    %v2661 = vld [vmem:[#allocation7 + $0x3c] sm:$0xf]
    %v2662 = vld [vmem:[#allocation7 + $0x40] sm:$0xf]
    %v2663 = vld [vmem:[#allocation7 + $0x44] sm:$0xf]
    %v2664 = vld [vmem:[#allocation7 + $0x48] sm:$0xf]
    %v2665 = vld [vmem:[#allocation7 + $0x4c] sm:$0xf]
    %v2666 = vld [vmem:[#allocation7 + $0x50] sm:$0xf]
    %v2667 = vld [vmem:[#allocation7 + $0x54] sm:$0xf]
    %v2668 = vld [vmem:[#allocation7 + $0x58] sm:$0xf]
    %v2669 = vld [vmem:[#allocation7 + $0x5c] sm:$0xf]
    %v2670 = vld [vmem:[#allocation7 + $0x60] sm:$0xf]
    %v2671 = vld [vmem:[#allocation7 + $0x64] sm:$0xf]
    %v2672 = vld [vmem:[#allocation7 + $0x68] sm:$0xf]
    %v2673 = vld [vmem:[#allocation7 + $0x6c] sm:$0xf]
    %v2674 = vld [vmem:[#allocation7 + $0x70] sm:$0xf]
    %v2675 = vld [vmem:[#allocation7 + $0x74] sm:$0xf]
    %v2676 = vld [vmem:[#allocation7 + $0x78] sm:$0xf]
    %v2677 = vld [vmem:[#allocation7 + $0x7c] sm:$0xf]
    %v2678 = vpack.c.bf16 %v2644, %v2644
    %v2679 = vpack.c.bf16 %v2645, %v2645
    %v2712 = vunpack.c.l.b16 %v2646
    %v2713 = vunpack.c.l.b16 %v2647
    %v2714 = vunpack.c.l.b16 %v2648
    %v2715 = vunpack.c.l.b16 %v2649
    %v2716 = vunpack.c.l.b16 %v2650
    %v2717 = vunpack.c.l.b16 %v2651
    %v2718 = vunpack.c.l.b16 %v2652
    %v2719 = vunpack.c.l.b16 %v2653
    %v2720 = vunpack.c.l.b16 %v2654
    %v2721 = vunpack.c.l.b16 %v2655
    %v2722 = vunpack.c.l.b16 %v2656
    %v2723 = vunpack.c.l.b16 %v2657
    %v2724 = vunpack.c.l.b16 %v2658
    %v2725 = vunpack.c.l.b16 %v2659
    %v2726 = vunpack.c.l.b16 %v2660
    %v2727 = vunpack.c.l.b16 %v2661
    %v2728 = vunpack.c.l.b16 %v2662
    %v2729 = vunpack.c.l.b16 %v2663
    %v2730 = vunpack.c.l.b16 %v2664
    %v2731 = vunpack.c.l.b16 %v2665
    %v2732 = vunpack.c.l.b16 %v2666
    %v2733 = vunpack.c.l.b16 %v2667
    %v2734 = vunpack.c.l.b16 %v2668
    %v2735 = vunpack.c.l.b16 %v2669
    %v2736 = vunpack.c.l.b16 %v2670
    %v2737 = vunpack.c.l.b16 %v2671
    %v2738 = vunpack.c.l.b16 %v2672
    %v2739 = vunpack.c.l.b16 %v2673
    %v2740 = vunpack.c.l.b16 %v2674
    %v2741 = vunpack.c.l.b16 %v2675
    %v2742 = vunpack.c.l.b16 %v2676
    %v2743 = vunpack.c.l.b16 %v2677
    %v2744 = vpack.c.b16 %v2713, %v2712
    %v2745 = vpack.c.b16 %v2715, %v2714
    %v2746 = vpack.c.b16 %v2717, %v2716
    %v2747 = vpack.c.b16 %v2719, %v2718
    %v2748 = vpack.c.b16 %v2721, %v2720
    %v2749 = vpack.c.b16 %v2723, %v2722
    %v2750 = vpack.c.b16 %v2725, %v2724
    %v2751 = vpack.c.b16 %v2727, %v2726
    %v2752 = vpack.c.b16 %v2729, %v2728
    %v2753 = vpack.c.b16 %v2731, %v2730
    %v2754 = vpack.c.b16 %v2733, %v2732
    %v2755 = vpack.c.b16 %v2735, %v2734
    %v2756 = vpack.c.b16 %v2737, %v2736
    %v2757 = vpack.c.b16 %v2739, %v2738
    %v2758 = vpack.c.b16 %v2741, %v2740
    %v2759 = vpack.c.b16 %v2743, %v2742
    %2776 = vmatprep.subr.bf16.mxu0 0
    %2777 = vmatpush1.bf16.msra.mxu0 %v2751
    %2778 = vmatprep.subr.bf16.mxu0 0
    %2779 = vmatpush1.bf16.msra.mxu0 %v2750
    %2780 = vmatprep.subr.bf16.mxu0 0
    %2781 = vmatpush1.bf16.msra.mxu0 %v2749
    %2782 = vmatprep.subr.bf16.mxu0 0
    %2783 = vmatpush1.bf16.msra.mxu0 %v2748
    %2784 = vmatprep.subr.bf16.mxu0 0
    %2785 = vmatpush1.bf16.msra.mxu0 %v2747
    %2786 = vmatprep.subr.bf16.mxu0 0
    %2787 = vmatpush1.bf16.msra.mxu0 %v2746
    %2788 = vmatprep.subr.bf16.mxu0 0
    %2789 = vmatpush1.bf16.msra.mxu0 %v2745
    %2790 = vmatprep.subr.bf16.mxu0 0
    %2791 = vmatpush1.bf16.msra.mxu0 %v2744
    %2792 = vmatprep.subr.bf16.mxu0 0
    %2793 = vmatpush2.bf16.msra.mxu0 %v2759
    %2794 = vmatprep.subr.bf16.mxu0 0
    %2795 = vmatpush2.bf16.msra.mxu0 %v2758
    %2796 = vmatprep.subr.bf16.mxu0 0
    %2797 = vmatpush2.bf16.msra.mxu0 %v2757
    %2798 = vmatprep.subr.bf16.mxu0 0
    %2799 = vmatpush2.bf16.msra.mxu0 %v2756
    %2800 = vmatprep.subr.bf16.mxu0 0
    %2801 = vmatpush2.bf16.msra.mxu0 %v2755
    %2802 = vmatprep.subr.bf16.mxu0 0
    %2803 = vmatpush2.bf16.msra.mxu0 %v2754
    %2804 = vmatprep.subr.bf16.mxu0 0
    %2805 = vmatpush2.bf16.msra.mxu0 %v2753
    %2806 = vmatprep.subr.bf16.mxu0 0
    %2807 = vmatpush2.bf16.msra.mxu0 %v2752
    %2808 = vmatprep.mubr.bf16.mxu0 %v2679
    %2809 = vmatmul.mubr.bf16.gmra.mxu0 %v2678
    %v2810 = vpop.f32.mrf.mxu0
    %v2811 = vadd.f32 0.0, %v2810
    %v2812 = vpop.f32.mrf.mxu0
    %v2813 = vpop.f32.mrf.mxu0
    %v2814 = vpop.f32.mrf.mxu0
    %2815 = vdwg.mxu0
    %v2816 = vadd.f32 %v2338, %v2811
    %s2817 = scalar_lea.vmem %s2, 1
    %v2818 = vld [vmem:[%s2817] sm:$0x1]
    %v2819 = vmul.f32 %v2816, %v2816
    %v2820 = vsel %vm126, %v2819, 0.0
    %2821 = vadd.xlane.f32.xlu0 %v2820
    %v2822 = vpop.xlane.xlu0 %2821
    %v2823 = vmul.f32 %v2822, %v130
    %v2824 = vadd.f32 %v2823, 1e-05
    %v2825 = vrsqrt.pop %v2824
    %v2826 = vmul.f32 %v2816, %v2825
    %v2828 = vlaneseq
    %v2829 = vshrl.u32 %v2828, 7
    %v2830 = vsub.s32 0, %v2829
    %v2831 = vrot.slane %v2818, %v2830
    %v2833 = vmul.f32 %v2826, %v2831
    %s2834 = scalar_lea.vmem [#allocation3], 192
    %v2835 = vld [vmem:[%s2834] sm:$0xff]
    %v2836 = vld [vmem:[%s2834 + $0x8] sm:$0xf]
    %v2837 = vld [vmem:[%s2834 + $0xc] sm:$0xff]
    %v2838 = vld [vmem:[%s2834 + $0x14] sm:$0xf]
    %v2839 = vld [vmem:[%s2834 + $0x18] sm:$0xff]
    %v2840 = vld [vmem:[%s2834 + $0x20] sm:$0xf]
    %v2841 = vld [vmem:[%s2834 + $0x24] sm:$0xff]
    %v2842 = vld [vmem:[%s2834 + $0x2c] sm:$0xf]
    %v2843 = vld [vmem:[%s2834 + $0x30] sm:$0xff]
    %v2844 = vld [vmem:[%s2834 + $0x38] sm:$0xf]
    %v2845 = vld [vmem:[%s2834 + $0x3c] sm:$0xff]
    %v2846 = vld [vmem:[%s2834 + $0x44] sm:$0xf]
    %v2847 = vld [vmem:[%s2834 + $0x48] sm:$0xff]
    %v2848 = vld [vmem:[%s2834 + $0x50] sm:$0xf]
    %v2849 = vld [vmem:[%s2834 + $0x54] sm:$0xff]
    %v2850 = vld [vmem:[%s2834 + $0x5c] sm:$0xf]
    %v2851 = vld [vmem:[%s2834 + $0x60] sm:$0xff]
    %v2852 = vld [vmem:[%s2834 + $0x68] sm:$0xf]
    %v2853 = vld [vmem:[%s2834 + $0x6c] sm:$0xff]
    %v2854 = vld [vmem:[%s2834 + $0x74] sm:$0xf]
    %v2855 = vld [vmem:[%s2834 + $0x78] sm:$0xff]
    %v2856 = vld [vmem:[%s2834 + $0x80] sm:$0xf]
    %v2857 = vld [vmem:[%s2834 + $0x84] sm:$0xff]
    %v2858 = vld [vmem:[%s2834 + $0x8c] sm:$0xf]
    %v2859 = vld [vmem:[%s2834 + $0x90] sm:$0xff]
    %v2860 = vld [vmem:[%s2834 + $0x98] sm:$0xf]
    %v2861 = vld [vmem:[%s2834 + $0x9c] sm:$0xff]
    %v2862 = vld [vmem:[%s2834 + $0xa4] sm:$0xf]
    %v2863 = vld [vmem:[%s2834 + $0xa8] sm:$0xff]
    %v2864 = vld [vmem:[%s2834 + $0xb0] sm:$0xf]
    %v2865 = vld [vmem:[%s2834 + $0xb4] sm:$0xff]
    %v2866 = vld [vmem:[%s2834 + $0xbc] sm:$0xf]
    %v2867 = vpack.c.bf16 %v2833, %v2833
    %v2900 = vunpack.c.l.b16 %v2835
    %v2901 = vunpack.c.h.b16 %v2835
    %v2902 = vunpack.c.l.b16 %v2836
    %v2903 = vunpack.c.l.b16 %v2837
    %v2904 = vunpack.c.h.b16 %v2837
    %v2905 = vunpack.c.l.b16 %v2838
    %v2906 = vunpack.c.l.b16 %v2839
    %v2907 = vunpack.c.h.b16 %v2839
    %v2908 = vunpack.c.l.b16 %v2840
    %v2909 = vunpack.c.l.b16 %v2841
    %v2910 = vunpack.c.h.b16 %v2841
    %v2911 = vunpack.c.l.b16 %v2842
    %v2912 = vunpack.c.l.b16 %v2843
    %v2913 = vunpack.c.h.b16 %v2843
    %v2914 = vunpack.c.l.b16 %v2844
    %v2915 = vunpack.c.l.b16 %v2845
    %v2916 = vunpack.c.h.b16 %v2845
    %v2917 = vunpack.c.l.b16 %v2846
    %v2918 = vunpack.c.l.b16 %v2847
    %v2919 = vunpack.c.h.b16 %v2847
    %v2920 = vunpack.c.l.b16 %v2848
    %v2921 = vunpack.c.l.b16 %v2849
    %v2922 = vunpack.c.h.b16 %v2849
    %v2923 = vunpack.c.l.b16 %v2850
    %v2924 = vunpack.c.l.b16 %v2851
    %v2925 = vunpack.c.h.b16 %v2851
    %v2926 = vunpack.c.l.b16 %v2852
    %v2927 = vunpack.c.l.b16 %v2853
    %v2928 = vunpack.c.h.b16 %v2853
    %v2929 = vunpack.c.l.b16 %v2854
    %v2930 = vunpack.c.l.b16 %v2855
    %v2931 = vunpack.c.h.b16 %v2855
    %v2932 = vunpack.c.l.b16 %v2856
    %v2933 = vunpack.c.l.b16 %v2857
    %v2934 = vunpack.c.h.b16 %v2857
    %v2935 = vunpack.c.l.b16 %v2858
    %v2936 = vunpack.c.l.b16 %v2859
    %v2937 = vunpack.c.h.b16 %v2859
    %v2938 = vunpack.c.l.b16 %v2860
    %v2939 = vunpack.c.l.b16 %v2861
    %v2940 = vunpack.c.h.b16 %v2861
    %v2941 = vunpack.c.l.b16 %v2862
    %v2942 = vunpack.c.l.b16 %v2863
    %v2943 = vunpack.c.h.b16 %v2863
    %v2944 = vunpack.c.l.b16 %v2864
    %v2945 = vunpack.c.l.b16 %v2865
    %v2946 = vunpack.c.h.b16 %v2865
    %v2947 = vunpack.c.l.b16 %v2866
    %v2948 = vpack.c.b16 %v2903, %v2900
    %v2949 = vpack.c.b16 %v2904, %v2901
    %v2950 = vpack.c.b16 %v2905, %v2902
    %v2951 = vpack.c.b16 %v2909, %v2906
    %v2952 = vpack.c.b16 %v2910, %v2907
    %v2953 = vpack.c.b16 %v2911, %v2908
    %v2954 = vpack.c.b16 %v2915, %v2912
    %v2955 = vpack.c.b16 %v2916, %v2913
    %v2956 = vpack.c.b16 %v2917, %v2914
    %v2957 = vpack.c.b16 %v2921, %v2918
    %v2958 = vpack.c.b16 %v2922, %v2919
    %v2959 = vpack.c.b16 %v2923, %v2920
    %v2960 = vpack.c.b16 %v2927, %v2924
    %v2961 = vpack.c.b16 %v2928, %v2925
    %v2962 = vpack.c.b16 %v2929, %v2926
    %v2963 = vpack.c.b16 %v2933, %v2930
    %v2964 = vpack.c.b16 %v2934, %v2931
    %v2965 = vpack.c.b16 %v2935, %v2932
    %v2966 = vpack.c.b16 %v2939, %v2936
    %v2967 = vpack.c.b16 %v2940, %v2937
    %v2968 = vpack.c.b16 %v2941, %v2938
    %v2969 = vpack.c.b16 %v2945, %v2942
    %v2970 = vpack.c.b16 %v2946, %v2943
    %v2971 = vpack.c.b16 %v2947, %v2944
    %2996 = vmatprep.subr.bf16.mxu0 %v2970
    %2997 = vmatpush1.bf16.msra.mxu0 %v2969
    %2998 = vmatprep.subr.bf16.mxu0 %v2967
    %2999 = vmatpush1.bf16.msra.mxu0 %v2966
    %3000 = vmatprep.subr.bf16.mxu0 %v2964
    %3001 = vmatpush1.bf16.msra.mxu0 %v2963
    %3002 = vmatprep.subr.bf16.mxu0 %v2961
    %3003 = vmatpush1.bf16.msra.mxu0 %v2960
    %3004 = vmatprep.subr.bf16.mxu0 %v2958
    %3005 = vmatpush1.bf16.msra.mxu0 %v2957
    %3006 = vmatprep.subr.bf16.mxu0 %v2955
    %3007 = vmatpush1.bf16.msra.mxu0 %v2954
    %3008 = vmatprep.subr.bf16.mxu0 %v2952
    %3009 = vmatpush1.bf16.msra.mxu0 %v2951
    %3010 = vmatprep.subr.bf16.mxu0 %v2949
    %3011 = vmatpush1.bf16.msra.mxu0 %v2948
    %3012 = vmatprep.subr.bf16.mxu0 0
    %3013 = vmatpush2.bf16.msra.mxu0 0
    %3014 = vmatprep.subr.bf16.mxu0 0
    %3015 = vmatpush2.bf16.msra.mxu0 0
    %3016 = vmatprep.subr.bf16.mxu0 0
    %3017 = vmatpush2.bf16.msra.mxu0 0
    %3018 = vmatprep.subr.bf16.mxu0 0
    %3019 = vmatpush2.bf16.msra.mxu0 0
    %3020 = vmatprep.subr.bf16.mxu0 0
    %3021 = vmatpush2.bf16.msra.mxu0 0
    %3022 = vmatprep.subr.bf16.mxu0 0
    %3023 = vmatpush2.bf16.msra.mxu0 0
    %3024 = vmatprep.subr.bf16.mxu0 0
    %3025 = vmatpush2.bf16.msra.mxu0 0
    %3026 = vmatprep.subr.bf16.mxu0 0
    %3027 = vmatpush2.bf16.msra.mxu0 0
    %3028 = vmatprep.mubr.bf16.mxu0 0
    %3029 = vmatmul.mubr.bf16.gmra.mxu0 %v2867
    %v3030 = vpop.f32.mrf.mxu0
    %v3031 = vadd.f32 0.0, %v3030
    %v3032 = vpop.f32.mrf.mxu0
    %v3033 = vadd.f32 0.0, %v3032
    %v3034 = vpop.f32.mrf.mxu0
    %v3035 = vpop.f32.mrf.mxu0
    %3036 = vdwg.mxu0
    %3037 = vmatprep.subr.bf16.mxu0 0
    %3038 = vmatpush1.bf16.msra.mxu0 %v2971
    %3039 = vmatprep.subr.bf16.mxu0 0
    %3040 = vmatpush1.bf16.msra.mxu0 %v2968
    %3041 = vmatprep.subr.bf16.mxu0 0
    %3042 = vmatpush1.bf16.msra.mxu0 %v2965
    %3043 = vmatprep.subr.bf16.mxu0 0
    %3044 = vmatpush1.bf16.msra.mxu0 %v2962
    %3045 = vmatprep.subr.bf16.mxu0 0
    %3046 = vmatpush1.bf16.msra.mxu0 %v2959
    %3047 = vmatprep.subr.bf16.mxu0 0
    %3048 = vmatpush1.bf16.msra.mxu0 %v2956
    %3049 = vmatprep.subr.bf16.mxu0 0
    %3050 = vmatpush1.bf16.msra.mxu0 %v2953
    %3051 = vmatprep.subr.bf16.mxu0 0
    %3052 = vmatpush1.bf16.msra.mxu0 %v2950
    %3053 = vmatprep.subr.bf16.mxu0 0
    %3054 = vmatpush2.bf16.msra.mxu0 0
    %3055 = vmatprep.subr.bf16.mxu0 0
    %3056 = vmatpush2.bf16.msra.mxu0 0
    %3057 = vmatprep.subr.bf16.mxu0 0
    %3058 = vmatpush2.bf16.msra.mxu0 0
    %3059 = vmatprep.subr.bf16.mxu0 0
    %3060 = vmatpush2.bf16.msra.mxu0 0
    %3061 = vmatprep.subr.bf16.mxu0 0
    %3062 = vmatpush2.bf16.msra.mxu0 0
    %3063 = vmatprep.subr.bf16.mxu0 0
    %3064 = vmatpush2.bf16.msra.mxu0 0
    %3065 = vmatprep.subr.bf16.mxu0 0
    %3066 = vmatpush2.bf16.msra.mxu0 0
    %3067 = vmatprep.subr.bf16.mxu0 0
    %3068 = vmatpush2.bf16.msra.mxu0 0
    %3069 = vmatprep.mubr.bf16.mxu0 0
    %3070 = vmatmul.mubr.bf16.gmra.mxu0 %v2867
    %v3071 = vpop.f32.mrf.mxu0
    %v3072 = vadd.f32 0.0, %v3071
    %v3073 = vpop.f32.mrf.mxu0
    %v3074 = vpop.f32.mrf.mxu0
    %v3075 = vpop.f32.mrf.mxu0
    %3076 = vdwg.mxu0
    %s3077 = scalar_lea.vmem %s10, 128
    %v3078 = vld [vmem:[%s3077] sm:$0xff]
    %v3079 = vld [vmem:[%s3077 + $0x8] sm:$0xff]
    %v3080 = vld [vmem:[%s3077 + $0x10] sm:$0xff]
    %v3081 = vld [vmem:[%s3077 + $0x18] sm:$0xff]
    %v3082 = vld [vmem:[%s3077 + $0x20] sm:$0xff]
    %v3083 = vld [vmem:[%s3077 + $0x28] sm:$0xff]
    %v3084 = vld [vmem:[%s3077 + $0x30] sm:$0xff]
    %v3085 = vld [vmem:[%s3077 + $0x38] sm:$0xff]
    %v3086 = vlaneseq
    %v3087 = vshrl.u32 %v3086, 7
    %v3088 = vsub.s32 0, %v3087
    %v3089 = vrot.slane %v3033, %v3088
    %v3090 = vsel %vm400, %v3089, %v3078
    %v3091 = vsel %vm401, %v3089, %v3079
    %v3092 = vsel %vm402, %v3089, %v3080
    %v3093 = vsel %vm403, %v3089, %v3081
    %v3094 = vsel %vm404, %v3089, %v3082
    %v3095 = vsel %vm405, %v3089, %v3083
    %v3096 = vsel %vm406, %v3089, %v3084
    %v3097 = vsel %vm407, %v3089, %v3085
    %s3098 = scalar_lea.vmem %s11, 128
    %v3099 = vld [vmem:[%s3098] sm:$0xff]
    %v3100 = vld [vmem:[%s3098 + $0x8] sm:$0xff]
    %v3101 = vld [vmem:[%s3098 + $0x10] sm:$0xff]
    %v3102 = vld [vmem:[%s3098 + $0x18] sm:$0xff]
    %v3103 = vld [vmem:[%s3098 + $0x20] sm:$0xff]
    %v3104 = vld [vmem:[%s3098 + $0x28] sm:$0xff]
    %v3105 = vld [vmem:[%s3098 + $0x30] sm:$0xff]
    %v3106 = vld [vmem:[%s3098 + $0x38] sm:$0xff]
    %v3107 = vlaneseq
    %v3108 = vshrl.u32 %v3107, 7
    %v3109 = vsub.s32 0, %v3108
    %v3110 = vrot.slane %v3072, %v3109
    %v3111 = vsel %vm400, %v3110, %v3099
    %v3112 = vsel %vm401, %v3110, %v3100
    %v3113 = vsel %vm402, %v3110, %v3101
    %v3114 = vsel %vm403, %v3110, %v3102
    %v3115 = vsel %vm404, %v3110, %v3103
    %v3116 = vsel %vm405, %v3110, %v3104
    %v3117 = vsel %vm406, %v3110, %v3105
    %v3118 = vsel %vm407, %v3110, %v3106
    %s3119 = scalar_lea.vmem %s13, 128
    %3120 = vst [vmem:[%s3119] sm:$0xff] %v3090
    %3121 = vst [vmem:[%s3119 + $0x8] sm:$0xff] %v3091
    %3122 = vst [vmem:[%s3119 + $0x10] sm:$0xff] %v3092
    %3123 = vst [vmem:[%s3119 + $0x18] sm:$0xff] %v3093
    %3124 = vst [vmem:[%s3119 + $0x20] sm:$0xff] %v3094
    %3125 = vst [vmem:[%s3119 + $0x28] sm:$0xff] %v3095
    %3126 = vst [vmem:[%s3119 + $0x30] sm:$0xff] %v3096
    %3127 = vst [vmem:[%s3119 + $0x38] sm:$0xff] %v3097
    %s3128 = scalar_lea.vmem %s14, 128
    %3129 = vst [vmem:[%s3128] sm:$0xff] %v3111
    %3130 = vst [vmem:[%s3128 + $0x8] sm:$0xff] %v3112
    %3131 = vst [vmem:[%s3128 + $0x10] sm:$0xff] %v3113
    %3132 = vst [vmem:[%s3128 + $0x18] sm:$0xff] %v3114
    %3133 = vst [vmem:[%s3128 + $0x20] sm:$0xff] %v3115
    %3134 = vst [vmem:[%s3128 + $0x28] sm:$0xff] %v3116
    %3135 = vst [vmem:[%s3128 + $0x30] sm:$0xff] %v3117
    %3136 = vst [vmem:[%s3128 + $0x38] sm:$0xff] %v3118
    %v3138 = vsel %vm456, %v3031, 0
    %v3141 = vsel %vm456, %v3090, 0
    %v3144 = vsel %vm456, %v3091, 0
    %v3147 = vsel %vm456, %v3092, 0
    %v3150 = vsel %vm456, %v3093, 0
    %v3153 = vsel %vm456, %v3094, 0
    %v3156 = vsel %vm456, %v3095, 0
    %v3159 = vsel %vm456, %v3096, 0
    %v3162 = vsel %vm456, %v3097, 0
    %3164 = vmatprep.subr.mxu0 0.0
    %3165 = vmatpush1.xpose.msra.mxu0 0.0
    %3166 = vmatprep.subr.mxu0 0.0
    %3167 = vmatpush1.xpose.msra.mxu0 0.0
    %3168 = vmatprep.subr.mxu0 0.0
    %3169 = vmatpush1.xpose.msra.mxu0 0.0
    %3170 = vmatprep.subr.mxu0 0.0
    %3171 = vmatpush1.xpose.msra.mxu0 0.0
    %3172 = vmatprep.subr.mxu0 0.0
    %3173 = vmatpush1.xpose.msra.mxu0 0.0
    %3174 = vmatprep.subr.mxu0 0.0
    %3175 = vmatpush1.xpose.msra.mxu0 0.0
    %3176 = vmatprep.subr.mxu0 0.0
    %3177 = vmatpush1.xpose.msra.mxu0 0.0
    %3178 = vmatprep.subr.mxu0 0.0
    %3179 = vmatpush1.xpose.msra.mxu0 0.0
    %3180 = vmatprep.subr.mxu0 0.0
    %3181 = vmatpush1.xpose.msra.mxu0 %v3162
    %3182 = vmatprep.subr.mxu0 0.0
    %3183 = vmatpush1.xpose.msra.mxu0 %v3159
    %3184 = vmatprep.subr.mxu0 0.0
    %3185 = vmatpush1.xpose.msra.mxu0 %v3156
    %3186 = vmatprep.subr.mxu0 0.0
    %3187 = vmatpush1.xpose.msra.mxu0 %v3153
    %3188 = vmatprep.subr.mxu0 0.0
    %3189 = vmatpush1.xpose.msra.mxu0 %v3150
    %3190 = vmatprep.subr.mxu0 0.0
    %3191 = vmatpush1.xpose.msra.mxu0 %v3147
    %3192 = vmatprep.subr.mxu0 0.0
    %3193 = vmatpush1.xpose.msra.mxu0 %v3144
    %3194 = vmatprep.subr.mxu0 0.0
    %3195 = vmatpush1.xpose.msra.mxu0 %v3141
    %3196 = vmatprep.subr.mxu0 0.0
    %3197 = vmatpush2.xpose.msra.mxu0 0.0
    %3198 = vmatprep.subr.mxu0 0.0
    %3199 = vmatpush2.xpose.msra.mxu0 0.0
    %3200 = vmatprep.subr.mxu0 0.0
    %3201 = vmatpush2.xpose.msra.mxu0 0.0
    %3202 = vmatprep.subr.mxu0 0.0
    %3203 = vmatpush2.xpose.msra.mxu0 0.0
    %3204 = vmatprep.subr.mxu0 0.0
    %3205 = vmatpush2.xpose.msra.mxu0 0.0
    %3206 = vmatprep.subr.mxu0 0.0
    %3207 = vmatpush2.xpose.msra.mxu0 0.0
    %3208 = vmatprep.subr.mxu0 0.0
    %3209 = vmatpush2.xpose.msra.mxu0 0.0
    %3210 = vmatprep.subr.mxu0 0.0
    %3211 = vmatpush2.xpose.msra.mxu0 0.0
    %3212 = vmatprep.subr.mxu0 0.0
    %3213 = vmatpush2.xpose.msra.mxu0 0.0
    %3214 = vmatprep.subr.mxu0 0.0
    %3215 = vmatpush2.xpose.msra.mxu0 0.0
    %3216 = vmatprep.subr.mxu0 0.0
    %3217 = vmatpush2.xpose.msra.mxu0 0.0
    %3218 = vmatprep.subr.mxu0 0.0
    %3219 = vmatpush2.xpose.msra.mxu0 0.0
    %3220 = vmatprep.subr.mxu0 0.0
    %3221 = vmatpush2.xpose.msra.mxu0 0.0
    %3222 = vmatprep.subr.mxu0 0.0
    %3223 = vmatpush2.xpose.msra.mxu0 0.0
    %3224 = vmatprep.subr.mxu0 0.0
    %3225 = vmatpush2.xpose.msra.mxu0 0.0
    %3226 = vmatprep.subr.mxu0 0.0
    %3227 = vmatpush2.xpose.msra.mxu0 0.0
    %3228 = vmatprep.mubr.f32.mxu0 0.0
    %3229 = vmatmul.mubr.f32.gmra.mxu0 %v3138
    %v3230 = vpop.f32.mrf.mxu0
    %v3231 = vadd.f32 0.0, %v3230
    %v3232 = vpop.f32.mrf.mxu0
    %3233 = vdwg.mxu0
    %v3234 = vmul.f32 %v3231, 0.17677669
    %v3235 = vsel %vm115, %v3234, -1e+30
    %v3236 = vsel %vm556, %v3235, -inf
    %3237 = vmax.xlane.f32.xlu0 %v3236
    %v3238 = vpop.xlane.xlu0 %3237
    %v3239 = vsub.f32 %v3235, %v3238
    %v3240 = vmul.f32 %v3239, 1.442695
    %v3241 = vpow.pop %v3240
    %v3242 = vsel %vm556, %v3241, 0.0
    %3243 = vadd.xlane.f32.xlu0 %v3242
    %v3244 = vpop.xlane.xlu0 %3243
    %v3245 = vrcp.pop %v3244
    %v3246 = vmul.f32 %v3241, %v3245
    %v3248 = vsel %vm568, %v3246, 0
    %3250 = vmatprep.subr.mxu0 0.0
    %3251 = vmatpush1.msra.mxu0 0.0
    %3252 = vmatprep.subr.mxu0 0.0
    %3253 = vmatpush1.msra.mxu0 0.0
    %3254 = vmatprep.subr.mxu0 0.0
    %3255 = vmatpush1.msra.mxu0 0.0
    %3256 = vmatprep.subr.mxu0 0.0
    %3257 = vmatpush1.msra.mxu0 0.0
    %3258 = vmatprep.subr.mxu0 0.0
    %3259 = vmatpush1.msra.mxu0 0.0
    %3260 = vmatprep.subr.mxu0 0.0
    %3261 = vmatpush1.msra.mxu0 0.0
    %3262 = vmatprep.subr.mxu0 0.0
    %3263 = vmatpush1.msra.mxu0 0.0
    %3264 = vmatprep.subr.mxu0 0.0
    %3265 = vmatpush1.msra.mxu0 0.0
    %3266 = vmatprep.subr.mxu0 0.0
    %3267 = vmatpush1.msra.mxu0 %v3118
    %3268 = vmatprep.subr.mxu0 0.0
    %3269 = vmatpush1.msra.mxu0 %v3117
    %3270 = vmatprep.subr.mxu0 0.0
    %3271 = vmatpush1.msra.mxu0 %v3116
    %3272 = vmatprep.subr.mxu0 0.0
    %3273 = vmatpush1.msra.mxu0 %v3115
    %3274 = vmatprep.subr.mxu0 0.0
    %3275 = vmatpush1.msra.mxu0 %v3114
    %3276 = vmatprep.subr.mxu0 0.0
    %3277 = vmatpush1.msra.mxu0 %v3113
    %3278 = vmatprep.subr.mxu0 0.0
    %3279 = vmatpush1.msra.mxu0 %v3112
    %3280 = vmatprep.subr.mxu0 0.0
    %3281 = vmatpush1.msra.mxu0 %v3111
    %3282 = vmatprep.subr.mxu0 0.0
    %3283 = vmatpush2.msra.mxu0 0.0
    %3284 = vmatprep.subr.mxu0 0.0
    %3285 = vmatpush2.msra.mxu0 0.0
    %3286 = vmatprep.subr.mxu0 0.0
    %3287 = vmatpush2.msra.mxu0 0.0
    %3288 = vmatprep.subr.mxu0 0.0
    %3289 = vmatpush2.msra.mxu0 0.0
    %3290 = vmatprep.subr.mxu0 0.0
    %3291 = vmatpush2.msra.mxu0 0.0
    %3292 = vmatprep.subr.mxu0 0.0
    %3293 = vmatpush2.msra.mxu0 0.0
    %3294 = vmatprep.subr.mxu0 0.0
    %3295 = vmatpush2.msra.mxu0 0.0
    %3296 = vmatprep.subr.mxu0 0.0
    %3297 = vmatpush2.msra.mxu0 0.0
    %3298 = vmatprep.subr.mxu0 0.0
    %3299 = vmatpush2.msra.mxu0 0.0
    %3300 = vmatprep.subr.mxu0 0.0
    %3301 = vmatpush2.msra.mxu0 0.0
    %3302 = vmatprep.subr.mxu0 0.0
    %3303 = vmatpush2.msra.mxu0 0.0
    %3304 = vmatprep.subr.mxu0 0.0
    %3305 = vmatpush2.msra.mxu0 0.0
    %3306 = vmatprep.subr.mxu0 0.0
    %3307 = vmatpush2.msra.mxu0 0.0
    %3308 = vmatprep.subr.mxu0 0.0
    %3309 = vmatpush2.msra.mxu0 0.0
    %3310 = vmatprep.subr.mxu0 0.0
    %3311 = vmatpush2.msra.mxu0 0.0
    %3312 = vmatprep.subr.mxu0 0.0
    %3313 = vmatpush2.msra.mxu0 0.0
    %3314 = vmatprep.mubr.f32.mxu0 0.0
    %3315 = vmatmul.mubr.f32.gmra.mxu0 %v3248
    %v3316 = vpop.f32.mrf.mxu0
    %v3317 = vadd.f32 0.0, %v3316
    %v3318 = vpop.f32.mrf.mxu0
    %3319 = vdwg.mxu0
    %3320 = vrot.lane.b32.xlu0 %v3031, 96
    %v3321 = vpop.permute.xlu0 %3320
    %3322 = vrot.lane.b32.xlu0 %v3090, 96
    %v3323 = vpop.permute.xlu0 %3322
    %3324 = vrot.lane.b32.xlu0 %v3091, 96
    %v3325 = vpop.permute.xlu0 %3324
    %3326 = vrot.lane.b32.xlu0 %v3092, 96
    %v3327 = vpop.permute.xlu0 %3326
    %3328 = vrot.lane.b32.xlu0 %v3093, 96
    %v3329 = vpop.permute.xlu0 %3328
    %3330 = vrot.lane.b32.xlu0 %v3094, 96
    %v3331 = vpop.permute.xlu0 %3330
    %3332 = vrot.lane.b32.xlu0 %v3095, 96
    %v3333 = vpop.permute.xlu0 %3332
    %3334 = vrot.lane.b32.xlu0 %v3096, 96
    %v3335 = vpop.permute.xlu0 %3334
    %3336 = vrot.lane.b32.xlu0 %v3097, 96
    %v3337 = vpop.permute.xlu0 %3336
    %v3338 = vsel %vm456, %v3321, 0
    %v3340 = vsel %vm456, %v3323, 0
    %v3342 = vsel %vm456, %v3325, 0
    %v3344 = vsel %vm456, %v3327, 0
    %v3346 = vsel %vm456, %v3329, 0
    %v3348 = vsel %vm456, %v3331, 0
    %v3350 = vsel %vm456, %v3333, 0
    %v3352 = vsel %vm456, %v3335, 0
    %v3354 = vsel %vm456, %v3337, 0
    %3356 = vmatprep.subr.mxu0 0.0
    %3357 = vmatpush1.xpose.msra.mxu0 0.0
    %3358 = vmatprep.subr.mxu0 0.0
    %3359 = vmatpush1.xpose.msra.mxu0 0.0
    %3360 = vmatprep.subr.mxu0 0.0
    %3361 = vmatpush1.xpose.msra.mxu0 0.0
    %3362 = vmatprep.subr.mxu0 0.0
    %3363 = vmatpush1.xpose.msra.mxu0 0.0
    %3364 = vmatprep.subr.mxu0 0.0
    %3365 = vmatpush1.xpose.msra.mxu0 0.0
    %3366 = vmatprep.subr.mxu0 0.0
    %3367 = vmatpush1.xpose.msra.mxu0 0.0
    %3368 = vmatprep.subr.mxu0 0.0
    %3369 = vmatpush1.xpose.msra.mxu0 0.0
    %3370 = vmatprep.subr.mxu0 0.0
    %3371 = vmatpush1.xpose.msra.mxu0 0.0
    %3372 = vmatprep.subr.mxu0 0.0
    %3373 = vmatpush1.xpose.msra.mxu0 %v3354
    %3374 = vmatprep.subr.mxu0 0.0
    %3375 = vmatpush1.xpose.msra.mxu0 %v3352
    %3376 = vmatprep.subr.mxu0 0.0
    %3377 = vmatpush1.xpose.msra.mxu0 %v3350
    %3378 = vmatprep.subr.mxu0 0.0
    %3379 = vmatpush1.xpose.msra.mxu0 %v3348
    %3380 = vmatprep.subr.mxu0 0.0
    %3381 = vmatpush1.xpose.msra.mxu0 %v3346
    %3382 = vmatprep.subr.mxu0 0.0
    %3383 = vmatpush1.xpose.msra.mxu0 %v3344
    %3384 = vmatprep.subr.mxu0 0.0
    %3385 = vmatpush1.xpose.msra.mxu0 %v3342
    %3386 = vmatprep.subr.mxu0 0.0
    %3387 = vmatpush1.xpose.msra.mxu0 %v3340
    %3388 = vmatprep.subr.mxu0 0.0
    %3389 = vmatpush2.xpose.msra.mxu0 0.0
    %3390 = vmatprep.subr.mxu0 0.0
    %3391 = vmatpush2.xpose.msra.mxu0 0.0
    %3392 = vmatprep.subr.mxu0 0.0
    %3393 = vmatpush2.xpose.msra.mxu0 0.0
    %3394 = vmatprep.subr.mxu0 0.0
    %3395 = vmatpush2.xpose.msra.mxu0 0.0
    %3396 = vmatprep.subr.mxu0 0.0
    %3397 = vmatpush2.xpose.msra.mxu0 0.0
    %3398 = vmatprep.subr.mxu0 0.0
    %3399 = vmatpush2.xpose.msra.mxu0 0.0
    %3400 = vmatprep.subr.mxu0 0.0
    %3401 = vmatpush2.xpose.msra.mxu0 0.0
    %3402 = vmatprep.subr.mxu0 0.0
    %3403 = vmatpush2.xpose.msra.mxu0 0.0
    %3404 = vmatprep.subr.mxu0 0.0
    %3405 = vmatpush2.xpose.msra.mxu0 0.0
    %3406 = vmatprep.subr.mxu0 0.0
    %3407 = vmatpush2.xpose.msra.mxu0 0.0
    %3408 = vmatprep.subr.mxu0 0.0
    %3409 = vmatpush2.xpose.msra.mxu0 0.0
    %3410 = vmatprep.subr.mxu0 0.0
    %3411 = vmatpush2.xpose.msra.mxu0 0.0
    %3412 = vmatprep.subr.mxu0 0.0
    %3413 = vmatpush2.xpose.msra.mxu0 0.0
    %3414 = vmatprep.subr.mxu0 0.0
    %3415 = vmatpush2.xpose.msra.mxu0 0.0
    %3416 = vmatprep.subr.mxu0 0.0
    %3417 = vmatpush2.xpose.msra.mxu0 0.0
    %3418 = vmatprep.subr.mxu0 0.0
    %3419 = vmatpush2.xpose.msra.mxu0 0.0
    %3420 = vmatprep.mubr.f32.mxu0 0.0
    %3421 = vmatmul.mubr.f32.gmra.mxu0 %v3338
    %v3422 = vpop.f32.mrf.mxu0
    %v3423 = vadd.f32 0.0, %v3422
    %v3424 = vpop.f32.mrf.mxu0
    %3425 = vdwg.mxu0
    %v3426 = vmul.f32 %v3423, 0.17677669
    %v3427 = vsel %vm115, %v3426, -1e+30
    %v3428 = vsel %vm556, %v3427, -inf
    %3429 = vmax.xlane.f32.xlu0 %v3428
    %v3430 = vpop.xlane.xlu0 %3429
    %v3431 = vsub.f32 %v3427, %v3430
    %v3432 = vmul.f32 %v3431, 1.442695
    %v3433 = vpow.pop %v3432
    %v3434 = vsel %vm556, %v3433, 0.0
    %3435 = vadd.xlane.f32.xlu0 %v3434
    %v3436 = vpop.xlane.xlu0 %3435
    %v3437 = vrcp.pop %v3436
    %v3438 = vmul.f32 %v3433, %v3437
    %3447 = vrot.lane.b32.xlu0 %v3111, 96
    %v3448 = vpop.permute.xlu0 %3447
    %3449 = vrot.lane.b32.xlu0 %v3112, 96
    %v3450 = vpop.permute.xlu0 %3449
    %3451 = vrot.lane.b32.xlu0 %v3113, 96
    %v3452 = vpop.permute.xlu0 %3451
    %3453 = vrot.lane.b32.xlu0 %v3114, 96
    %v3454 = vpop.permute.xlu0 %3453
    %3455 = vrot.lane.b32.xlu0 %v3115, 96
    %v3456 = vpop.permute.xlu0 %3455
    %3457 = vrot.lane.b32.xlu0 %v3116, 96
    %v3458 = vpop.permute.xlu0 %3457
    %3459 = vrot.lane.b32.xlu0 %v3117, 96
    %v3460 = vpop.permute.xlu0 %3459
    %3461 = vrot.lane.b32.xlu0 %v3118, 96
    %v3462 = vpop.permute.xlu0 %3461
    %v3472 = vsel %vm568, %v3438, 0
    %3474 = vmatprep.subr.mxu0 0.0
    %3475 = vmatpush1.msra.mxu0 0.0
    %3476 = vmatprep.subr.mxu0 0.0
    %3477 = vmatpush1.msra.mxu0 0.0
    %3478 = vmatprep.subr.mxu0 0.0
    %3479 = vmatpush1.msra.mxu0 0.0
    %3480 = vmatprep.subr.mxu0 0.0
    %3481 = vmatpush1.msra.mxu0 0.0
    %3482 = vmatprep.subr.mxu0 0.0
    %3483 = vmatpush1.msra.mxu0 0.0
    %3484 = vmatprep.subr.mxu0 0.0
    %3485 = vmatpush1.msra.mxu0 0.0
    %3486 = vmatprep.subr.mxu0 0.0
    %3487 = vmatpush1.msra.mxu0 0.0
    %3488 = vmatprep.subr.mxu0 0.0
    %3489 = vmatpush1.msra.mxu0 0.0
    %3490 = vmatprep.subr.mxu0 0.0
    %3491 = vmatpush1.msra.mxu0 %v3462
    %3492 = vmatprep.subr.mxu0 0.0
    %3493 = vmatpush1.msra.mxu0 %v3460
    %3494 = vmatprep.subr.mxu0 0.0
    %3495 = vmatpush1.msra.mxu0 %v3458
    %3496 = vmatprep.subr.mxu0 0.0
    %3497 = vmatpush1.msra.mxu0 %v3456
    %3498 = vmatprep.subr.mxu0 0.0
    %3499 = vmatpush1.msra.mxu0 %v3454
    %3500 = vmatprep.subr.mxu0 0.0
    %3501 = vmatpush1.msra.mxu0 %v3452
    %3502 = vmatprep.subr.mxu0 0.0
    %3503 = vmatpush1.msra.mxu0 %v3450
    %3504 = vmatprep.subr.mxu0 0.0
    %3505 = vmatpush1.msra.mxu0 %v3448
    %3506 = vmatprep.subr.mxu0 0.0
    %3507 = vmatpush2.msra.mxu0 0.0
    %3508 = vmatprep.subr.mxu0 0.0
    %3509 = vmatpush2.msra.mxu0 0.0
    %3510 = vmatprep.subr.mxu0 0.0
    %3511 = vmatpush2.msra.mxu0 0.0
    %3512 = vmatprep.subr.mxu0 0.0
    %3513 = vmatpush2.msra.mxu0 0.0
    %3514 = vmatprep.subr.mxu0 0.0
    %3515 = vmatpush2.msra.mxu0 0.0
    %3516 = vmatprep.subr.mxu0 0.0
    %3517 = vmatpush2.msra.mxu0 0.0
    %3518 = vmatprep.subr.mxu0 0.0
    %3519 = vmatpush2.msra.mxu0 0.0
    %3520 = vmatprep.subr.mxu0 0.0
    %3521 = vmatpush2.msra.mxu0 0.0
    %3522 = vmatprep.subr.mxu0 0.0
    %3523 = vmatpush2.msra.mxu0 0.0
    %3524 = vmatprep.subr.mxu0 0.0
    %3525 = vmatpush2.msra.mxu0 0.0
    %3526 = vmatprep.subr.mxu0 0.0
    %3527 = vmatpush2.msra.mxu0 0.0
    %3528 = vmatprep.subr.mxu0 0.0
    %3529 = vmatpush2.msra.mxu0 0.0
    %3530 = vmatprep.subr.mxu0 0.0
    %3531 = vmatpush2.msra.mxu0 0.0
    %3532 = vmatprep.subr.mxu0 0.0
    %3533 = vmatpush2.msra.mxu0 0.0
    %3534 = vmatprep.subr.mxu0 0.0
    %3535 = vmatpush2.msra.mxu0 0.0
    %3536 = vmatprep.subr.mxu0 0.0
    %3537 = vmatpush2.msra.mxu0 0.0
    %3538 = vmatprep.mubr.f32.mxu0 0.0
    %3539 = vmatmul.mubr.f32.gmra.mxu0 %v3472
    %v3540 = vpop.f32.mrf.mxu0
    %v3541 = vadd.f32 0.0, %v3540
    %v3542 = vpop.f32.mrf.mxu0
    %3543 = vdwg.mxu0
    %3544 = vrot.lane.b32.xlu0 %v3031, 64
    %v3545 = vpop.permute.xlu0 %3544
    %3546 = vrot.lane.b32.xlu0 %v3090, 64
    %v3547 = vpop.permute.xlu0 %3546
    %3548 = vrot.lane.b32.xlu0 %v3091, 64
    %v3549 = vpop.permute.xlu0 %3548
    %3550 = vrot.lane.b32.xlu0 %v3092, 64
    %v3551 = vpop.permute.xlu0 %3550
    %3552 = vrot.lane.b32.xlu0 %v3093, 64
    %v3553 = vpop.permute.xlu0 %3552
    %3554 = vrot.lane.b32.xlu0 %v3094, 64
    %v3555 = vpop.permute.xlu0 %3554
    %3556 = vrot.lane.b32.xlu0 %v3095, 64
    %v3557 = vpop.permute.xlu0 %3556
    %3558 = vrot.lane.b32.xlu0 %v3096, 64
    %v3559 = vpop.permute.xlu0 %3558
    %3560 = vrot.lane.b32.xlu0 %v3097, 64
    %v3561 = vpop.permute.xlu0 %3560
    %v3562 = vsel %vm456, %v3545, 0
    %v3564 = vsel %vm456, %v3547, 0
    %v3566 = vsel %vm456, %v3549, 0
    %v3568 = vsel %vm456, %v3551, 0
    %v3570 = vsel %vm456, %v3553, 0
    %v3572 = vsel %vm456, %v3555, 0
    %v3574 = vsel %vm456, %v3557, 0
    %v3576 = vsel %vm456, %v3559, 0
    %v3578 = vsel %vm456, %v3561, 0
    %3580 = vmatprep.subr.mxu0 0.0
    %3581 = vmatpush1.xpose.msra.mxu0 0.0
    %3582 = vmatprep.subr.mxu0 0.0
    %3583 = vmatpush1.xpose.msra.mxu0 0.0
    %3584 = vmatprep.subr.mxu0 0.0
    %3585 = vmatpush1.xpose.msra.mxu0 0.0
    %3586 = vmatprep.subr.mxu0 0.0
    %3587 = vmatpush1.xpose.msra.mxu0 0.0
    %3588 = vmatprep.subr.mxu0 0.0
    %3589 = vmatpush1.xpose.msra.mxu0 0.0
    %3590 = vmatprep.subr.mxu0 0.0
    %3591 = vmatpush1.xpose.msra.mxu0 0.0
    %3592 = vmatprep.subr.mxu0 0.0
    %3593 = vmatpush1.xpose.msra.mxu0 0.0
    %3594 = vmatprep.subr.mxu0 0.0
    %3595 = vmatpush1.xpose.msra.mxu0 0.0
    %3596 = vmatprep.subr.mxu0 0.0
    %3597 = vmatpush1.xpose.msra.mxu0 %v3578
    %3598 = vmatprep.subr.mxu0 0.0
    %3599 = vmatpush1.xpose.msra.mxu0 %v3576
    %3600 = vmatprep.subr.mxu0 0.0
    %3601 = vmatpush1.xpose.msra.mxu0 %v3574
    %3602 = vmatprep.subr.mxu0 0.0
    %3603 = vmatpush1.xpose.msra.mxu0 %v3572
    %3604 = vmatprep.subr.mxu0 0.0
    %3605 = vmatpush1.xpose.msra.mxu0 %v3570
    %3606 = vmatprep.subr.mxu0 0.0
    %3607 = vmatpush1.xpose.msra.mxu0 %v3568
    %3608 = vmatprep.subr.mxu0 0.0
    %3609 = vmatpush1.xpose.msra.mxu0 %v3566
    %3610 = vmatprep.subr.mxu0 0.0
    %3611 = vmatpush1.xpose.msra.mxu0 %v3564
    %3612 = vmatprep.subr.mxu0 0.0
    %3613 = vmatpush2.xpose.msra.mxu0 0.0
    %3614 = vmatprep.subr.mxu0 0.0
    %3615 = vmatpush2.xpose.msra.mxu0 0.0
    %3616 = vmatprep.subr.mxu0 0.0
    %3617 = vmatpush2.xpose.msra.mxu0 0.0
    %3618 = vmatprep.subr.mxu0 0.0
    %3619 = vmatpush2.xpose.msra.mxu0 0.0
    %3620 = vmatprep.subr.mxu0 0.0
    %3621 = vmatpush2.xpose.msra.mxu0 0.0
    %3622 = vmatprep.subr.mxu0 0.0
    %3623 = vmatpush2.xpose.msra.mxu0 0.0
    %3624 = vmatprep.subr.mxu0 0.0
    %3625 = vmatpush2.xpose.msra.mxu0 0.0
    %3626 = vmatprep.subr.mxu0 0.0
    %3627 = vmatpush2.xpose.msra.mxu0 0.0
    %3628 = vmatprep.subr.mxu0 0.0
    %3629 = vmatpush2.xpose.msra.mxu0 0.0
    %3630 = vmatprep.subr.mxu0 0.0
    %3631 = vmatpush2.xpose.msra.mxu0 0.0
    %3632 = vmatprep.subr.mxu0 0.0
    %3633 = vmatpush2.xpose.msra.mxu0 0.0
    %3634 = vmatprep.subr.mxu0 0.0
    %3635 = vmatpush2.xpose.msra.mxu0 0.0
    %3636 = vmatprep.subr.mxu0 0.0
    %3637 = vmatpush2.xpose.msra.mxu0 0.0
    %3638 = vmatprep.subr.mxu0 0.0
    %3639 = vmatpush2.xpose.msra.mxu0 0.0
    %3640 = vmatprep.subr.mxu0 0.0
    %3641 = vmatpush2.xpose.msra.mxu0 0.0
    %3642 = vmatprep.subr.mxu0 0.0
    %3643 = vmatpush2.xpose.msra.mxu0 0.0
    %3644 = vmatprep.mubr.f32.mxu0 0.0
    %3645 = vmatmul.mubr.f32.gmra.mxu0 %v3562
    %v3646 = vpop.f32.mrf.mxu0
    %v3647 = vadd.f32 0.0, %v3646
    %v3648 = vpop.f32.mrf.mxu0
    %3649 = vdwg.mxu0
    %v3650 = vmul.f32 %v3647, 0.17677669
    %v3651 = vsel %vm115, %v3650, -1e+30
    %v3652 = vsel %vm556, %v3651, -inf
    %3653 = vmax.xlane.f32.xlu0 %v3652
    %v3654 = vpop.xlane.xlu0 %3653
    %v3655 = vsub.f32 %v3651, %v3654
    %v3656 = vmul.f32 %v3655, 1.442695
    %v3657 = vpow.pop %v3656
    %v3658 = vsel %vm556, %v3657, 0.0
    %3659 = vadd.xlane.f32.xlu0 %v3658
    %v3660 = vpop.xlane.xlu0 %3659
    %v3661 = vrcp.pop %v3660
    %v3662 = vmul.f32 %v3657, %v3661
    %3663 = vrot.lane.b32.xlu0 %v3111, 64
    %v3664 = vpop.permute.xlu0 %3663
    %3665 = vrot.lane.b32.xlu0 %v3112, 64
    %v3666 = vpop.permute.xlu0 %3665
    %3667 = vrot.lane.b32.xlu0 %v3113, 64
    %v3668 = vpop.permute.xlu0 %3667
    %3669 = vrot.lane.b32.xlu0 %v3114, 64
    %v3670 = vpop.permute.xlu0 %3669
    %3671 = vrot.lane.b32.xlu0 %v3115, 64
    %v3672 = vpop.permute.xlu0 %3671
    %3673 = vrot.lane.b32.xlu0 %v3116, 64
    %v3674 = vpop.permute.xlu0 %3673
    %3675 = vrot.lane.b32.xlu0 %v3117, 64
    %v3676 = vpop.permute.xlu0 %3675
    %3677 = vrot.lane.b32.xlu0 %v3118, 64
    %v3678 = vpop.permute.xlu0 %3677
    %v3688 = vsel %vm568, %v3662, 0
    %3690 = vmatprep.subr.mxu0 0.0
    %3691 = vmatpush1.msra.mxu0 0.0
    %3692 = vmatprep.subr.mxu0 0.0
    %3693 = vmatpush1.msra.mxu0 0.0
    %3694 = vmatprep.subr.mxu0 0.0
    %3695 = vmatpush1.msra.mxu0 0.0
    %3696 = vmatprep.subr.mxu0 0.0
    %3697 = vmatpush1.msra.mxu0 0.0
    %3698 = vmatprep.subr.mxu0 0.0
    %3699 = vmatpush1.msra.mxu0 0.0
    %3700 = vmatprep.subr.mxu0 0.0
    %3701 = vmatpush1.msra.mxu0 0.0
    %3702 = vmatprep.subr.mxu0 0.0
    %3703 = vmatpush1.msra.mxu0 0.0
    %3704 = vmatprep.subr.mxu0 0.0
    %3705 = vmatpush1.msra.mxu0 0.0
    %3706 = vmatprep.subr.mxu0 0.0
    %3707 = vmatpush1.msra.mxu0 %v3678
    %3708 = vmatprep.subr.mxu0 0.0
    %3709 = vmatpush1.msra.mxu0 %v3676
    %3710 = vmatprep.subr.mxu0 0.0
    %3711 = vmatpush1.msra.mxu0 %v3674
    %3712 = vmatprep.subr.mxu0 0.0
    %3713 = vmatpush1.msra.mxu0 %v3672
    %3714 = vmatprep.subr.mxu0 0.0
    %3715 = vmatpush1.msra.mxu0 %v3670
    %3716 = vmatprep.subr.mxu0 0.0
    %3717 = vmatpush1.msra.mxu0 %v3668
    %3718 = vmatprep.subr.mxu0 0.0
    %3719 = vmatpush1.msra.mxu0 %v3666
    %3720 = vmatprep.subr.mxu0 0.0
    %3721 = vmatpush1.msra.mxu0 %v3664
    %3722 = vmatprep.subr.mxu0 0.0
    %3723 = vmatpush2.msra.mxu0 0.0
    %3724 = vmatprep.subr.mxu0 0.0
    %3725 = vmatpush2.msra.mxu0 0.0
    %3726 = vmatprep.subr.mxu0 0.0
    %3727 = vmatpush2.msra.mxu0 0.0
    %3728 = vmatprep.subr.mxu0 0.0
    %3729 = vmatpush2.msra.mxu0 0.0
    %3730 = vmatprep.subr.mxu0 0.0
    %3731 = vmatpush2.msra.mxu0 0.0
    %3732 = vmatprep.subr.mxu0 0.0
    %3733 = vmatpush2.msra.mxu0 0.0
    %3734 = vmatprep.subr.mxu0 0.0
    %3735 = vmatpush2.msra.mxu0 0.0
    %3736 = vmatprep.subr.mxu0 0.0
    %3737 = vmatpush2.msra.mxu0 0.0
    %3738 = vmatprep.subr.mxu0 0.0
    %3739 = vmatpush2.msra.mxu0 0.0
    %3740 = vmatprep.subr.mxu0 0.0
    %3741 = vmatpush2.msra.mxu0 0.0
    %3742 = vmatprep.subr.mxu0 0.0
    %3743 = vmatpush2.msra.mxu0 0.0
    %3744 = vmatprep.subr.mxu0 0.0
    %3745 = vmatpush2.msra.mxu0 0.0
    %3746 = vmatprep.subr.mxu0 0.0
    %3747 = vmatpush2.msra.mxu0 0.0
    %3748 = vmatprep.subr.mxu0 0.0
    %3749 = vmatpush2.msra.mxu0 0.0
    %3750 = vmatprep.subr.mxu0 0.0
    %3751 = vmatpush2.msra.mxu0 0.0
    %3752 = vmatprep.subr.mxu0 0.0
    %3753 = vmatpush2.msra.mxu0 0.0
    %3754 = vmatprep.mubr.f32.mxu0 0.0
    %3755 = vmatmul.mubr.f32.gmra.mxu0 %v3688
    %v3756 = vpop.f32.mrf.mxu0
    %v3757 = vadd.f32 0.0, %v3756
    %v3758 = vpop.f32.mrf.mxu0
    %3759 = vdwg.mxu0
    %3760 = vrot.lane.b32.xlu0 %v3031, 32
    %v3761 = vpop.permute.xlu0 %3760
    %3762 = vrot.lane.b32.xlu0 %v3090, 32
    %v3763 = vpop.permute.xlu0 %3762
    %3764 = vrot.lane.b32.xlu0 %v3091, 32
    %v3765 = vpop.permute.xlu0 %3764
    %3766 = vrot.lane.b32.xlu0 %v3092, 32
    %v3767 = vpop.permute.xlu0 %3766
    %3768 = vrot.lane.b32.xlu0 %v3093, 32
    %v3769 = vpop.permute.xlu0 %3768
    %3770 = vrot.lane.b32.xlu0 %v3094, 32
    %v3771 = vpop.permute.xlu0 %3770
    %3772 = vrot.lane.b32.xlu0 %v3095, 32
    %v3773 = vpop.permute.xlu0 %3772
    %3774 = vrot.lane.b32.xlu0 %v3096, 32
    %v3775 = vpop.permute.xlu0 %3774
    %3776 = vrot.lane.b32.xlu0 %v3097, 32
    %v3777 = vpop.permute.xlu0 %3776
    %v3778 = vsel %vm456, %v3761, 0
    %v3780 = vsel %vm456, %v3763, 0
    %v3782 = vsel %vm456, %v3765, 0
    %v3784 = vsel %vm456, %v3767, 0
    %v3786 = vsel %vm456, %v3769, 0
    %v3788 = vsel %vm456, %v3771, 0
    %v3790 = vsel %vm456, %v3773, 0
    %v3792 = vsel %vm456, %v3775, 0
    %v3794 = vsel %vm456, %v3777, 0
    %3796 = vmatprep.subr.mxu0 0.0
    %3797 = vmatpush1.xpose.msra.mxu0 0.0
    %3798 = vmatprep.subr.mxu0 0.0
    %3799 = vmatpush1.xpose.msra.mxu0 0.0
    %3800 = vmatprep.subr.mxu0 0.0
    %3801 = vmatpush1.xpose.msra.mxu0 0.0
    %3802 = vmatprep.subr.mxu0 0.0
    %3803 = vmatpush1.xpose.msra.mxu0 0.0
    %3804 = vmatprep.subr.mxu0 0.0
    %3805 = vmatpush1.xpose.msra.mxu0 0.0
    %3806 = vmatprep.subr.mxu0 0.0
    %3807 = vmatpush1.xpose.msra.mxu0 0.0
    %3808 = vmatprep.subr.mxu0 0.0
    %3809 = vmatpush1.xpose.msra.mxu0 0.0
    %3810 = vmatprep.subr.mxu0 0.0
    %3811 = vmatpush1.xpose.msra.mxu0 0.0
    %3812 = vmatprep.subr.mxu0 0.0
    %3813 = vmatpush1.xpose.msra.mxu0 %v3794
    %3814 = vmatprep.subr.mxu0 0.0
    %3815 = vmatpush1.xpose.msra.mxu0 %v3792
    %3816 = vmatprep.subr.mxu0 0.0
    %3817 = vmatpush1.xpose.msra.mxu0 %v3790
    %3818 = vmatprep.subr.mxu0 0.0
    %3819 = vmatpush1.xpose.msra.mxu0 %v3788
    %3820 = vmatprep.subr.mxu0 0.0
    %3821 = vmatpush1.xpose.msra.mxu0 %v3786
    %3822 = vmatprep.subr.mxu0 0.0
    %3823 = vmatpush1.xpose.msra.mxu0 %v3784
    %3824 = vmatprep.subr.mxu0 0.0
    %3825 = vmatpush1.xpose.msra.mxu0 %v3782
    %3826 = vmatprep.subr.mxu0 0.0
    %3827 = vmatpush1.xpose.msra.mxu0 %v3780
    %3828 = vmatprep.subr.mxu0 0.0
    %3829 = vmatpush2.xpose.msra.mxu0 0.0
    %3830 = vmatprep.subr.mxu0 0.0
    %3831 = vmatpush2.xpose.msra.mxu0 0.0
    %3832 = vmatprep.subr.mxu0 0.0
    %3833 = vmatpush2.xpose.msra.mxu0 0.0
    %3834 = vmatprep.subr.mxu0 0.0
    %3835 = vmatpush2.xpose.msra.mxu0 0.0
    %3836 = vmatprep.subr.mxu0 0.0
    %3837 = vmatpush2.xpose.msra.mxu0 0.0
    %3838 = vmatprep.subr.mxu0 0.0
    %3839 = vmatpush2.xpose.msra.mxu0 0.0
    %3840 = vmatprep.subr.mxu0 0.0
    %3841 = vmatpush2.xpose.msra.mxu0 0.0
    %3842 = vmatprep.subr.mxu0 0.0
    %3843 = vmatpush2.xpose.msra.mxu0 0.0
    %3844 = vmatprep.subr.mxu0 0.0
    %3845 = vmatpush2.xpose.msra.mxu0 0.0
    %3846 = vmatprep.subr.mxu0 0.0
    %3847 = vmatpush2.xpose.msra.mxu0 0.0
    %3848 = vmatprep.subr.mxu0 0.0
    %3849 = vmatpush2.xpose.msra.mxu0 0.0
    %3850 = vmatprep.subr.mxu0 0.0
    %3851 = vmatpush2.xpose.msra.mxu0 0.0
    %3852 = vmatprep.subr.mxu0 0.0
    %3853 = vmatpush2.xpose.msra.mxu0 0.0
    %3854 = vmatprep.subr.mxu0 0.0
    %3855 = vmatpush2.xpose.msra.mxu0 0.0
    %3856 = vmatprep.subr.mxu0 0.0
    %3857 = vmatpush2.xpose.msra.mxu0 0.0
    %3858 = vmatprep.subr.mxu0 0.0
    %3859 = vmatpush2.xpose.msra.mxu0 0.0
    %3860 = vmatprep.mubr.f32.mxu0 0.0
    %3861 = vmatmul.mubr.f32.gmra.mxu0 %v3778
    %v3862 = vpop.f32.mrf.mxu0
    %v3863 = vadd.f32 0.0, %v3862
    %v3864 = vpop.f32.mrf.mxu0
    %3865 = vdwg.mxu0
    %v3866 = vmul.f32 %v3863, 0.17677669
    %v3867 = vsel %vm115, %v3866, -1e+30
    %v3868 = vsel %vm556, %v3867, -inf
    %3869 = vmax.xlane.f32.xlu0 %v3868
    %v3870 = vpop.xlane.xlu0 %3869
    %v3871 = vsub.f32 %v3867, %v3870
    %v3872 = vmul.f32 %v3871, 1.442695
    %v3873 = vpow.pop %v3872
    %v3874 = vsel %vm556, %v3873, 0.0
    %3875 = vadd.xlane.f32.xlu0 %v3874
    %v3876 = vpop.xlane.xlu0 %3875
    %v3877 = vrcp.pop %v3876
    %v3878 = vmul.f32 %v3873, %v3877
    %3879 = vrot.lane.b32.xlu0 %v3111, 32
    %v3880 = vpop.permute.xlu0 %3879
    %3881 = vrot.lane.b32.xlu0 %v3112, 32
    %v3882 = vpop.permute.xlu0 %3881
    %3883 = vrot.lane.b32.xlu0 %v3113, 32
    %v3884 = vpop.permute.xlu0 %3883
    %3885 = vrot.lane.b32.xlu0 %v3114, 32
    %v3886 = vpop.permute.xlu0 %3885
    %3887 = vrot.lane.b32.xlu0 %v3115, 32
    %v3888 = vpop.permute.xlu0 %3887
    %3889 = vrot.lane.b32.xlu0 %v3116, 32
    %v3890 = vpop.permute.xlu0 %3889
    %3891 = vrot.lane.b32.xlu0 %v3117, 32
    %v3892 = vpop.permute.xlu0 %3891
    %3893 = vrot.lane.b32.xlu0 %v3118, 32
    %v3894 = vpop.permute.xlu0 %3893
    %v3904 = vsel %vm568, %v3878, 0
    %3906 = vmatprep.subr.mxu0 0.0
    %3907 = vmatpush1.msra.mxu0 0.0
    %3908 = vmatprep.subr.mxu0 0.0
    %3909 = vmatpush1.msra.mxu0 0.0
    %3910 = vmatprep.subr.mxu0 0.0
    %3911 = vmatpush1.msra.mxu0 0.0
    %3912 = vmatprep.subr.mxu0 0.0
    %3913 = vmatpush1.msra.mxu0 0.0
    %3914 = vmatprep.subr.mxu0 0.0
    %3915 = vmatpush1.msra.mxu0 0.0
    %3916 = vmatprep.subr.mxu0 0.0
    %3917 = vmatpush1.msra.mxu0 0.0
    %3918 = vmatprep.subr.mxu0 0.0
    %3919 = vmatpush1.msra.mxu0 0.0
    %3920 = vmatprep.subr.mxu0 0.0
    %3921 = vmatpush1.msra.mxu0 0.0
    %3922 = vmatprep.subr.mxu0 0.0
    %3923 = vmatpush1.msra.mxu0 %v3894
    %3924 = vmatprep.subr.mxu0 0.0
    %3925 = vmatpush1.msra.mxu0 %v3892
    %3926 = vmatprep.subr.mxu0 0.0
    %3927 = vmatpush1.msra.mxu0 %v3890
    %3928 = vmatprep.subr.mxu0 0.0
    %3929 = vmatpush1.msra.mxu0 %v3888
    %3930 = vmatprep.subr.mxu0 0.0
    %3931 = vmatpush1.msra.mxu0 %v3886
    %3932 = vmatprep.subr.mxu0 0.0
    %3933 = vmatpush1.msra.mxu0 %v3884
    %3934 = vmatprep.subr.mxu0 0.0
    %3935 = vmatpush1.msra.mxu0 %v3882
    %3936 = vmatprep.subr.mxu0 0.0
    %3937 = vmatpush1.msra.mxu0 %v3880
    %3938 = vmatprep.subr.mxu0 0.0
    %3939 = vmatpush2.msra.mxu0 0.0
    %3940 = vmatprep.subr.mxu0 0.0
    %3941 = vmatpush2.msra.mxu0 0.0
    %3942 = vmatprep.subr.mxu0 0.0
    %3943 = vmatpush2.msra.mxu0 0.0
    %3944 = vmatprep.subr.mxu0 0.0
    %3945 = vmatpush2.msra.mxu0 0.0
    %3946 = vmatprep.subr.mxu0 0.0
    %3947 = vmatpush2.msra.mxu0 0.0
    %3948 = vmatprep.subr.mxu0 0.0
    %3949 = vmatpush2.msra.mxu0 0.0
    %3950 = vmatprep.subr.mxu0 0.0
    %3951 = vmatpush2.msra.mxu0 0.0
    %3952 = vmatprep.subr.mxu0 0.0
    %3953 = vmatpush2.msra.mxu0 0.0
    %3954 = vmatprep.subr.mxu0 0.0
    %3955 = vmatpush2.msra.mxu0 0.0
    %3956 = vmatprep.subr.mxu0 0.0
    %3957 = vmatpush2.msra.mxu0 0.0
    %3958 = vmatprep.subr.mxu0 0.0
    %3959 = vmatpush2.msra.mxu0 0.0
    %3960 = vmatprep.subr.mxu0 0.0
    %3961 = vmatpush2.msra.mxu0 0.0
    %3962 = vmatprep.subr.mxu0 0.0
    %3963 = vmatpush2.msra.mxu0 0.0
    %3964 = vmatprep.subr.mxu0 0.0
    %3965 = vmatpush2.msra.mxu0 0.0
    %3966 = vmatprep.subr.mxu0 0.0
    %3967 = vmatpush2.msra.mxu0 0.0
    %3968 = vmatprep.subr.mxu0 0.0
    %3969 = vmatpush2.msra.mxu0 0.0
    %3970 = vmatprep.mubr.f32.mxu0 0.0
    %3971 = vmatmul.mubr.f32.gmra.mxu0 %v3904
    %v3972 = vpop.f32.mrf.mxu0
    %v3973 = vadd.f32 0.0, %v3972
    %v3974 = vpop.f32.mrf.mxu0
    %3975 = vdwg.mxu0
    %3977 = vrot.lane.b32.xlu0 %v3541, 32
    %v3978 = vpop.permute.xlu0 %3977
    %3981 = vrot.lane.b32.xlu0 %v3757, 64
    %v3982 = vpop.permute.xlu0 %3981
    %3985 = vrot.lane.b32.xlu0 %v3973, 96
    %v3986 = vpop.permute.xlu0 %3985
    %v3988 = vsel %vm456, %v3317, %v3978
    %v3989 = vsel %vm568, %v3988, %v3982
    %v3990 = vsel %vm1312, %v3989, %v3986
    %s3991 = scalar_lea.vmem %s10, 192
    %v3992 = vld [vmem:[%s3991] sm:$0xff]
    %v3993 = vld [vmem:[%s3991 + $0x8] sm:$0xff]
    %v3994 = vld [vmem:[%s3991 + $0x10] sm:$0xff]
    %v3995 = vld [vmem:[%s3991 + $0x18] sm:$0xff]
    %v3996 = vld [vmem:[%s3991 + $0x20] sm:$0xff]
    %v3997 = vld [vmem:[%s3991 + $0x28] sm:$0xff]
    %v3998 = vld [vmem:[%s3991 + $0x30] sm:$0xff]
    %v3999 = vld [vmem:[%s3991 + $0x38] sm:$0xff]
    %v4000 = vlaneseq
    %v4001 = vshrl.u32 %v4000, 7
    %v4002 = vsub.s32 1, %v4001
    %v4003 = vrot.slane %v3033, %v4002
    %v4004 = vsel %vm400, %v4003, %v3992
    %v4005 = vsel %vm401, %v4003, %v3993
    %v4006 = vsel %vm402, %v4003, %v3994
    %v4007 = vsel %vm403, %v4003, %v3995
    %v4008 = vsel %vm404, %v4003, %v3996
    %v4009 = vsel %vm405, %v4003, %v3997
    %v4010 = vsel %vm406, %v4003, %v3998
    %v4011 = vsel %vm407, %v4003, %v3999
    %s4012 = scalar_lea.vmem %s11, 192
    %v4013 = vld [vmem:[%s4012] sm:$0xff]
    %v4014 = vld [vmem:[%s4012 + $0x8] sm:$0xff]
    %v4015 = vld [vmem:[%s4012 + $0x10] sm:$0xff]
    %v4016 = vld [vmem:[%s4012 + $0x18] sm:$0xff]
    %v4017 = vld [vmem:[%s4012 + $0x20] sm:$0xff]
    %v4018 = vld [vmem:[%s4012 + $0x28] sm:$0xff]
    %v4019 = vld [vmem:[%s4012 + $0x30] sm:$0xff]
    %v4020 = vld [vmem:[%s4012 + $0x38] sm:$0xff]
    %v4021 = vlaneseq
    %v4022 = vshrl.u32 %v4021, 7
    %v4023 = vsub.s32 1, %v4022
    %v4024 = vrot.slane %v3072, %v4023
    %v4025 = vsel %vm400, %v4024, %v4013
    %v4026 = vsel %vm401, %v4024, %v4014
    %v4027 = vsel %vm402, %v4024, %v4015
    %v4028 = vsel %vm403, %v4024, %v4016
    %v4029 = vsel %vm404, %v4024, %v4017
    %v4030 = vsel %vm405, %v4024, %v4018
    %v4031 = vsel %vm406, %v4024, %v4019
    %v4032 = vsel %vm407, %v4024, %v4020
    %s4033 = scalar_lea.vmem %s13, 192
    %4034 = vst [vmem:[%s4033] sm:$0xff] %v4004
    %4035 = vst [vmem:[%s4033 + $0x8] sm:$0xff] %v4005
    %4036 = vst [vmem:[%s4033 + $0x10] sm:$0xff] %v4006
    %4037 = vst [vmem:[%s4033 + $0x18] sm:$0xff] %v4007
    %4038 = vst [vmem:[%s4033 + $0x20] sm:$0xff] %v4008
    %4039 = vst [vmem:[%s4033 + $0x28] sm:$0xff] %v4009
    %4040 = vst [vmem:[%s4033 + $0x30] sm:$0xff] %v4010
    %4041 = vst [vmem:[%s4033 + $0x38] sm:$0xff] %v4011
    %s4042 = scalar_lea.vmem %s14, 192
    %4043 = vst [vmem:[%s4042] sm:$0xff] %v4025
    %4044 = vst [vmem:[%s4042 + $0x8] sm:$0xff] %v4026
    %4045 = vst [vmem:[%s4042 + $0x10] sm:$0xff] %v4027
    %4046 = vst [vmem:[%s4042 + $0x18] sm:$0xff] %v4028
    %4047 = vst [vmem:[%s4042 + $0x20] sm:$0xff] %v4029
    %4048 = vst [vmem:[%s4042 + $0x28] sm:$0xff] %v4030
    %4049 = vst [vmem:[%s4042 + $0x30] sm:$0xff] %v4031
    %4050 = vst [vmem:[%s4042 + $0x38] sm:$0xff] %v4032
    %v4051 = vrot.slane %v3031, 1
    %v4052 = vsel %vm456, %v4051, 0
    %v4055 = vsel %vm456, %v4004, 0
    %v4058 = vsel %vm456, %v4005, 0
    %v4061 = vsel %vm456, %v4006, 0
    %v4064 = vsel %vm456, %v4007, 0
    %v4067 = vsel %vm456, %v4008, 0
    %v4070 = vsel %vm456, %v4009, 0
    %v4073 = vsel %vm456, %v4010, 0
    %v4076 = vsel %vm456, %v4011, 0
    %4078 = vmatprep.subr.mxu0 0.0
    %4079 = vmatpush1.xpose.msra.mxu0 0.0
    %4080 = vmatprep.subr.mxu0 0.0
    %4081 = vmatpush1.xpose.msra.mxu0 0.0
    %4082 = vmatprep.subr.mxu0 0.0
    %4083 = vmatpush1.xpose.msra.mxu0 0.0
    %4084 = vmatprep.subr.mxu0 0.0
    %4085 = vmatpush1.xpose.msra.mxu0 0.0
    %4086 = vmatprep.subr.mxu0 0.0
    %4087 = vmatpush1.xpose.msra.mxu0 0.0
    %4088 = vmatprep.subr.mxu0 0.0
    %4089 = vmatpush1.xpose.msra.mxu0 0.0
    %4090 = vmatprep.subr.mxu0 0.0
    %4091 = vmatpush1.xpose.msra.mxu0 0.0
    %4092 = vmatprep.subr.mxu0 0.0
    %4093 = vmatpush1.xpose.msra.mxu0 0.0
    %4094 = vmatprep.subr.mxu0 0.0
    %4095 = vmatpush1.xpose.msra.mxu0 %v4076
    %4096 = vmatprep.subr.mxu0 0.0
    %4097 = vmatpush1.xpose.msra.mxu0 %v4073
    %4098 = vmatprep.subr.mxu0 0.0
    %4099 = vmatpush1.xpose.msra.mxu0 %v4070
    %4100 = vmatprep.subr.mxu0 0.0
    %4101 = vmatpush1.xpose.msra.mxu0 %v4067
    %4102 = vmatprep.subr.mxu0 0.0
    %4103 = vmatpush1.xpose.msra.mxu0 %v4064
    %4104 = vmatprep.subr.mxu0 0.0
    %4105 = vmatpush1.xpose.msra.mxu0 %v4061
    %4106 = vmatprep.subr.mxu0 0.0
    %4107 = vmatpush1.xpose.msra.mxu0 %v4058
    %4108 = vmatprep.subr.mxu0 0.0
    %4109 = vmatpush1.xpose.msra.mxu0 %v4055
    %4110 = vmatprep.subr.mxu0 0.0
    %4111 = vmatpush2.xpose.msra.mxu0 0.0
    %4112 = vmatprep.subr.mxu0 0.0
    %4113 = vmatpush2.xpose.msra.mxu0 0.0
    %4114 = vmatprep.subr.mxu0 0.0
    %4115 = vmatpush2.xpose.msra.mxu0 0.0
    %4116 = vmatprep.subr.mxu0 0.0
    %4117 = vmatpush2.xpose.msra.mxu0 0.0
    %4118 = vmatprep.subr.mxu0 0.0
    %4119 = vmatpush2.xpose.msra.mxu0 0.0
    %4120 = vmatprep.subr.mxu0 0.0
    %4121 = vmatpush2.xpose.msra.mxu0 0.0
    %4122 = vmatprep.subr.mxu0 0.0
    %4123 = vmatpush2.xpose.msra.mxu0 0.0
    %4124 = vmatprep.subr.mxu0 0.0
    %4125 = vmatpush2.xpose.msra.mxu0 0.0
    %4126 = vmatprep.subr.mxu0 0.0
    %4127 = vmatpush2.xpose.msra.mxu0 0.0
    %4128 = vmatprep.subr.mxu0 0.0
    %4129 = vmatpush2.xpose.msra.mxu0 0.0
    %4130 = vmatprep.subr.mxu0 0.0
    %4131 = vmatpush2.xpose.msra.mxu0 0.0
    %4132 = vmatprep.subr.mxu0 0.0
    %4133 = vmatpush2.xpose.msra.mxu0 0.0
    %4134 = vmatprep.subr.mxu0 0.0
    %4135 = vmatpush2.xpose.msra.mxu0 0.0
    %4136 = vmatprep.subr.mxu0 0.0
    %4137 = vmatpush2.xpose.msra.mxu0 0.0
    %4138 = vmatprep.subr.mxu0 0.0
    %4139 = vmatpush2.xpose.msra.mxu0 0.0
    %4140 = vmatprep.subr.mxu0 0.0
    %4141 = vmatpush2.xpose.msra.mxu0 0.0
    %4142 = vmatprep.mubr.f32.mxu0 0.0
    %4143 = vmatmul.mubr.f32.gmra.mxu0 %v4052
    %v4144 = vpop.f32.mrf.mxu0
    %v4145 = vadd.f32 0.0, %v4144
    %v4146 = vpop.f32.mrf.mxu0
    %4147 = vdwg.mxu0
    %v4148 = vmul.f32 %v4145, 0.17677669
    %v4149 = vsel %vm115, %v4148, -1e+30
    %v4150 = vsel %vm556, %v4149, -inf
    %4151 = vmax.xlane.f32.xlu0 %v4150
    %v4152 = vpop.xlane.xlu0 %4151
    %v4153 = vsub.f32 %v4149, %v4152
    %v4154 = vmul.f32 %v4153, 1.442695
    %v4155 = vpow.pop %v4154
    %v4156 = vsel %vm556, %v4155, 0.0
    %4157 = vadd.xlane.f32.xlu0 %v4156
    %v4158 = vpop.xlane.xlu0 %4157
    %v4159 = vrcp.pop %v4158
    %v4160 = vmul.f32 %v4155, %v4159
    %v4162 = vsel %vm568, %v4160, 0
    %4164 = vmatprep.subr.mxu0 0.0
    %4165 = vmatpush1.msra.mxu0 0.0
    %4166 = vmatprep.subr.mxu0 0.0
    %4167 = vmatpush1.msra.mxu0 0.0
    %4168 = vmatprep.subr.mxu0 0.0
    %4169 = vmatpush1.msra.mxu0 0.0
    %4170 = vmatprep.subr.mxu0 0.0
    %4171 = vmatpush1.msra.mxu0 0.0
    %4172 = vmatprep.subr.mxu0 0.0
    %4173 = vmatpush1.msra.mxu0 0.0
    %4174 = vmatprep.subr.mxu0 0.0
    %4175 = vmatpush1.msra.mxu0 0.0
    %4176 = vmatprep.subr.mxu0 0.0
    %4177 = vmatpush1.msra.mxu0 0.0
    %4178 = vmatprep.subr.mxu0 0.0
    %4179 = vmatpush1.msra.mxu0 0.0
    %4180 = vmatprep.subr.mxu0 0.0
    %4181 = vmatpush1.msra.mxu0 %v4032
    %4182 = vmatprep.subr.mxu0 0.0
    %4183 = vmatpush1.msra.mxu0 %v4031
    %4184 = vmatprep.subr.mxu0 0.0
    %4185 = vmatpush1.msra.mxu0 %v4030
    %4186 = vmatprep.subr.mxu0 0.0
    %4187 = vmatpush1.msra.mxu0 %v4029
    %4188 = vmatprep.subr.mxu0 0.0
    %4189 = vmatpush1.msra.mxu0 %v4028
    %4190 = vmatprep.subr.mxu0 0.0
    %4191 = vmatpush1.msra.mxu0 %v4027
    %4192 = vmatprep.subr.mxu0 0.0
    %4193 = vmatpush1.msra.mxu0 %v4026
    %4194 = vmatprep.subr.mxu0 0.0
    %4195 = vmatpush1.msra.mxu0 %v4025
    %4196 = vmatprep.subr.mxu0 0.0
    %4197 = vmatpush2.msra.mxu0 0.0
    %4198 = vmatprep.subr.mxu0 0.0
    %4199 = vmatpush2.msra.mxu0 0.0
    %4200 = vmatprep.subr.mxu0 0.0
    %4201 = vmatpush2.msra.mxu0 0.0
    %4202 = vmatprep.subr.mxu0 0.0
    %4203 = vmatpush2.msra.mxu0 0.0
    %4204 = vmatprep.subr.mxu0 0.0
    %4205 = vmatpush2.msra.mxu0 0.0
    %4206 = vmatprep.subr.mxu0 0.0
    %4207 = vmatpush2.msra.mxu0 0.0
    %4208 = vmatprep.subr.mxu0 0.0
    %4209 = vmatpush2.msra.mxu0 0.0
    %4210 = vmatprep.subr.mxu0 0.0
    %4211 = vmatpush2.msra.mxu0 0.0
    %4212 = vmatprep.subr.mxu0 0.0
    %4213 = vmatpush2.msra.mxu0 0.0
    %4214 = vmatprep.subr.mxu0 0.0
    %4215 = vmatpush2.msra.mxu0 0.0
    %4216 = vmatprep.subr.mxu0 0.0
    %4217 = vmatpush2.msra.mxu0 0.0
    %4218 = vmatprep.subr.mxu0 0.0
    %4219 = vmatpush2.msra.mxu0 0.0
    %4220 = vmatprep.subr.mxu0 0.0
    %4221 = vmatpush2.msra.mxu0 0.0
    %4222 = vmatprep.subr.mxu0 0.0
    %4223 = vmatpush2.msra.mxu0 0.0
    %4224 = vmatprep.subr.mxu0 0.0
    %4225 = vmatpush2.msra.mxu0 0.0
    %4226 = vmatprep.subr.mxu0 0.0
    %4227 = vmatpush2.msra.mxu0 0.0
    %4228 = vmatprep.mubr.f32.mxu0 0.0
    %4229 = vmatmul.mubr.f32.gmra.mxu0 %v4162
    %v4230 = vpop.f32.mrf.mxu0
    %v4231 = vadd.f32 0.0, %v4230
    %v4232 = vpop.f32.mrf.mxu0
    %4233 = vdwg.mxu0
    %4234 = vrot.lane.b32.xlu0 %v4051, 96
    %v4235 = vpop.permute.xlu0 %4234
    %4236 = vrot.lane.b32.xlu0 %v4004, 96
    %v4237 = vpop.permute.xlu0 %4236
    %4238 = vrot.lane.b32.xlu0 %v4005, 96
    %v4239 = vpop.permute.xlu0 %4238
    %4240 = vrot.lane.b32.xlu0 %v4006, 96
    %v4241 = vpop.permute.xlu0 %4240
    %4242 = vrot.lane.b32.xlu0 %v4007, 96
    %v4243 = vpop.permute.xlu0 %4242
    %4244 = vrot.lane.b32.xlu0 %v4008, 96
    %v4245 = vpop.permute.xlu0 %4244
    %4246 = vrot.lane.b32.xlu0 %v4009, 96
    %v4247 = vpop.permute.xlu0 %4246
    %4248 = vrot.lane.b32.xlu0 %v4010, 96
    %v4249 = vpop.permute.xlu0 %4248
    %4250 = vrot.lane.b32.xlu0 %v4011, 96
    %v4251 = vpop.permute.xlu0 %4250
    %v4252 = vsel %vm456, %v4235, 0
    %v4254 = vsel %vm456, %v4237, 0
    %v4256 = vsel %vm456, %v4239, 0
    %v4258 = vsel %vm456, %v4241, 0
    %v4260 = vsel %vm456, %v4243, 0
    %v4262 = vsel %vm456, %v4245, 0
    %v4264 = vsel %vm456, %v4247, 0
    %v4266 = vsel %vm456, %v4249, 0
    %v4268 = vsel %vm456, %v4251, 0
    %4270 = vmatprep.subr.mxu0 0.0
    %4271 = vmatpush1.xpose.msra.mxu0 0.0
    %4272 = vmatprep.subr.mxu0 0.0
    %4273 = vmatpush1.xpose.msra.mxu0 0.0
    %4274 = vmatprep.subr.mxu0 0.0
    %4275 = vmatpush1.xpose.msra.mxu0 0.0
    %4276 = vmatprep.subr.mxu0 0.0
    %4277 = vmatpush1.xpose.msra.mxu0 0.0
    %4278 = vmatprep.subr.mxu0 0.0
    %4279 = vmatpush1.xpose.msra.mxu0 0.0
    %4280 = vmatprep.subr.mxu0 0.0
    %4281 = vmatpush1.xpose.msra.mxu0 0.0
    %4282 = vmatprep.subr.mxu0 0.0
    %4283 = vmatpush1.xpose.msra.mxu0 0.0
    %4284 = vmatprep.subr.mxu0 0.0
    %4285 = vmatpush1.xpose.msra.mxu0 0.0
    %4286 = vmatprep.subr.mxu0 0.0
    %4287 = vmatpush1.xpose.msra.mxu0 %v4268
    %4288 = vmatprep.subr.mxu0 0.0
    %4289 = vmatpush1.xpose.msra.mxu0 %v4266
    %4290 = vmatprep.subr.mxu0 0.0
    %4291 = vmatpush1.xpose.msra.mxu0 %v4264
    %4292 = vmatprep.subr.mxu0 0.0
    %4293 = vmatpush1.xpose.msra.mxu0 %v4262
    %4294 = vmatprep.subr.mxu0 0.0
    %4295 = vmatpush1.xpose.msra.mxu0 %v4260
    %4296 = vmatprep.subr.mxu0 0.0
    %4297 = vmatpush1.xpose.msra.mxu0 %v4258
    %4298 = vmatprep.subr.mxu0 0.0
    %4299 = vmatpush1.xpose.msra.mxu0 %v4256
    %4300 = vmatprep.subr.mxu0 0.0
    %4301 = vmatpush1.xpose.msra.mxu0 %v4254
    %4302 = vmatprep.subr.mxu0 0.0
    %4303 = vmatpush2.xpose.msra.mxu0 0.0
    %4304 = vmatprep.subr.mxu0 0.0
    %4305 = vmatpush2.xpose.msra.mxu0 0.0
    %4306 = vmatprep.subr.mxu0 0.0
    %4307 = vmatpush2.xpose.msra.mxu0 0.0
    %4308 = vmatprep.subr.mxu0 0.0
    %4309 = vmatpush2.xpose.msra.mxu0 0.0
    %4310 = vmatprep.subr.mxu0 0.0
    %4311 = vmatpush2.xpose.msra.mxu0 0.0
    %4312 = vmatprep.subr.mxu0 0.0
    %4313 = vmatpush2.xpose.msra.mxu0 0.0
    %4314 = vmatprep.subr.mxu0 0.0
    %4315 = vmatpush2.xpose.msra.mxu0 0.0
    %4316 = vmatprep.subr.mxu0 0.0
    %4317 = vmatpush2.xpose.msra.mxu0 0.0
    %4318 = vmatprep.subr.mxu0 0.0
    %4319 = vmatpush2.xpose.msra.mxu0 0.0
    %4320 = vmatprep.subr.mxu0 0.0
    %4321 = vmatpush2.xpose.msra.mxu0 0.0
    %4322 = vmatprep.subr.mxu0 0.0
    %4323 = vmatpush2.xpose.msra.mxu0 0.0
    %4324 = vmatprep.subr.mxu0 0.0
    %4325 = vmatpush2.xpose.msra.mxu0 0.0
    %4326 = vmatprep.subr.mxu0 0.0
    %4327 = vmatpush2.xpose.msra.mxu0 0.0
    %4328 = vmatprep.subr.mxu0 0.0
    %4329 = vmatpush2.xpose.msra.mxu0 0.0
    %4330 = vmatprep.subr.mxu0 0.0
    %4331 = vmatpush2.xpose.msra.mxu0 0.0
    %4332 = vmatprep.subr.mxu0 0.0
    %4333 = vmatpush2.xpose.msra.mxu0 0.0
    %4334 = vmatprep.mubr.f32.mxu0 0.0
    %4335 = vmatmul.mubr.f32.gmra.mxu0 %v4252
    %v4336 = vpop.f32.mrf.mxu0
    %v4337 = vadd.f32 0.0, %v4336
    %v4338 = vpop.f32.mrf.mxu0
    %4339 = vdwg.mxu0
    %v4340 = vmul.f32 %v4337, 0.17677669
    %v4341 = vsel %vm115, %v4340, -1e+30
    %v4342 = vsel %vm556, %v4341, -inf
    %4343 = vmax.xlane.f32.xlu0 %v4342
    %v4344 = vpop.xlane.xlu0 %4343
    %v4345 = vsub.f32 %v4341, %v4344
    %v4346 = vmul.f32 %v4345, 1.442695
    %v4347 = vpow.pop %v4346
    %v4348 = vsel %vm556, %v4347, 0.0
    %4349 = vadd.xlane.f32.xlu0 %v4348
    %v4350 = vpop.xlane.xlu0 %4349
    %v4351 = vrcp.pop %v4350
    %v4352 = vmul.f32 %v4347, %v4351
    %4361 = vrot.lane.b32.xlu0 %v4025, 96
    %v4362 = vpop.permute.xlu0 %4361
    %4363 = vrot.lane.b32.xlu0 %v4026, 96
    %v4364 = vpop.permute.xlu0 %4363
    %4365 = vrot.lane.b32.xlu0 %v4027, 96
    %v4366 = vpop.permute.xlu0 %4365
    %4367 = vrot.lane.b32.xlu0 %v4028, 96
    %v4368 = vpop.permute.xlu0 %4367
    %4369 = vrot.lane.b32.xlu0 %v4029, 96
    %v4370 = vpop.permute.xlu0 %4369
    %4371 = vrot.lane.b32.xlu0 %v4030, 96
    %v4372 = vpop.permute.xlu0 %4371
    %4373 = vrot.lane.b32.xlu0 %v4031, 96
    %v4374 = vpop.permute.xlu0 %4373
    %4375 = vrot.lane.b32.xlu0 %v4032, 96
    %v4376 = vpop.permute.xlu0 %4375
    %v4386 = vsel %vm568, %v4352, 0
    %4388 = vmatprep.subr.mxu0 0.0
    %4389 = vmatpush1.msra.mxu0 0.0
    %4390 = vmatprep.subr.mxu0 0.0
    %4391 = vmatpush1.msra.mxu0 0.0
    %4392 = vmatprep.subr.mxu0 0.0
    %4393 = vmatpush1.msra.mxu0 0.0
    %4394 = vmatprep.subr.mxu0 0.0
    %4395 = vmatpush1.msra.mxu0 0.0
    %4396 = vmatprep.subr.mxu0 0.0
    %4397 = vmatpush1.msra.mxu0 0.0
    %4398 = vmatprep.subr.mxu0 0.0
    %4399 = vmatpush1.msra.mxu0 0.0
    %4400 = vmatprep.subr.mxu0 0.0
    %4401 = vmatpush1.msra.mxu0 0.0
    %4402 = vmatprep.subr.mxu0 0.0
    %4403 = vmatpush1.msra.mxu0 0.0
    %4404 = vmatprep.subr.mxu0 0.0
    %4405 = vmatpush1.msra.mxu0 %v4376
    %4406 = vmatprep.subr.mxu0 0.0
    %4407 = vmatpush1.msra.mxu0 %v4374
    %4408 = vmatprep.subr.mxu0 0.0
    %4409 = vmatpush1.msra.mxu0 %v4372
    %4410 = vmatprep.subr.mxu0 0.0
    %4411 = vmatpush1.msra.mxu0 %v4370
    %4412 = vmatprep.subr.mxu0 0.0
    %4413 = vmatpush1.msra.mxu0 %v4368
    %4414 = vmatprep.subr.mxu0 0.0
    %4415 = vmatpush1.msra.mxu0 %v4366
    %4416 = vmatprep.subr.mxu0 0.0
    %4417 = vmatpush1.msra.mxu0 %v4364
    %4418 = vmatprep.subr.mxu0 0.0
    %4419 = vmatpush1.msra.mxu0 %v4362
    %4420 = vmatprep.subr.mxu0 0.0
    %4421 = vmatpush2.msra.mxu0 0.0
    %4422 = vmatprep.subr.mxu0 0.0
    %4423 = vmatpush2.msra.mxu0 0.0
    %4424 = vmatprep.subr.mxu0 0.0
    %4425 = vmatpush2.msra.mxu0 0.0
    %4426 = vmatprep.subr.mxu0 0.0
    %4427 = vmatpush2.msra.mxu0 0.0
    %4428 = vmatprep.subr.mxu0 0.0
    %4429 = vmatpush2.msra.mxu0 0.0
    %4430 = vmatprep.subr.mxu0 0.0
    %4431 = vmatpush2.msra.mxu0 0.0
    %4432 = vmatprep.subr.mxu0 0.0
    %4433 = vmatpush2.msra.mxu0 0.0
    %4434 = vmatprep.subr.mxu0 0.0
    %4435 = vmatpush2.msra.mxu0 0.0
    %4436 = vmatprep.subr.mxu0 0.0
    %4437 = vmatpush2.msra.mxu0 0.0
    %4438 = vmatprep.subr.mxu0 0.0
    %4439 = vmatpush2.msra.mxu0 0.0
    %4440 = vmatprep.subr.mxu0 0.0
    %4441 = vmatpush2.msra.mxu0 0.0
    %4442 = vmatprep.subr.mxu0 0.0
    %4443 = vmatpush2.msra.mxu0 0.0
    %4444 = vmatprep.subr.mxu0 0.0
    %4445 = vmatpush2.msra.mxu0 0.0
    %4446 = vmatprep.subr.mxu0 0.0
    %4447 = vmatpush2.msra.mxu0 0.0
    %4448 = vmatprep.subr.mxu0 0.0
    %4449 = vmatpush2.msra.mxu0 0.0
    %4450 = vmatprep.subr.mxu0 0.0
    %4451 = vmatpush2.msra.mxu0 0.0
    %4452 = vmatprep.mubr.f32.mxu0 0.0
    %4453 = vmatmul.mubr.f32.gmra.mxu0 %v4386
    %v4454 = vpop.f32.mrf.mxu0
    %v4455 = vadd.f32 0.0, %v4454
    %v4456 = vpop.f32.mrf.mxu0
    %4457 = vdwg.mxu0
    %4458 = vrot.lane.b32.xlu0 %v4051, 64
    %v4459 = vpop.permute.xlu0 %4458
    %4460 = vrot.lane.b32.xlu0 %v4004, 64
    %v4461 = vpop.permute.xlu0 %4460
    %4462 = vrot.lane.b32.xlu0 %v4005, 64
    %v4463 = vpop.permute.xlu0 %4462
    %4464 = vrot.lane.b32.xlu0 %v4006, 64
    %v4465 = vpop.permute.xlu0 %4464
    %4466 = vrot.lane.b32.xlu0 %v4007, 64
    %v4467 = vpop.permute.xlu0 %4466
    %4468 = vrot.lane.b32.xlu0 %v4008, 64
    %v4469 = vpop.permute.xlu0 %4468
    %4470 = vrot.lane.b32.xlu0 %v4009, 64
    %v4471 = vpop.permute.xlu0 %4470
    %4472 = vrot.lane.b32.xlu0 %v4010, 64
    %v4473 = vpop.permute.xlu0 %4472
    %4474 = vrot.lane.b32.xlu0 %v4011, 64
    %v4475 = vpop.permute.xlu0 %4474
    %v4476 = vsel %vm456, %v4459, 0
    %v4478 = vsel %vm456, %v4461, 0
    %v4480 = vsel %vm456, %v4463, 0
    %v4482 = vsel %vm456, %v4465, 0
    %v4484 = vsel %vm456, %v4467, 0
    %v4486 = vsel %vm456, %v4469, 0
    %v4488 = vsel %vm456, %v4471, 0
    %v4490 = vsel %vm456, %v4473, 0
    %v4492 = vsel %vm456, %v4475, 0
    %4494 = vmatprep.subr.mxu0 0.0
    %4495 = vmatpush1.xpose.msra.mxu0 0.0
    %4496 = vmatprep.subr.mxu0 0.0
    %4497 = vmatpush1.xpose.msra.mxu0 0.0
    %4498 = vmatprep.subr.mxu0 0.0
    %4499 = vmatpush1.xpose.msra.mxu0 0.0
    %4500 = vmatprep.subr.mxu0 0.0
    %4501 = vmatpush1.xpose.msra.mxu0 0.0
    %4502 = vmatprep.subr.mxu0 0.0
    %4503 = vmatpush1.xpose.msra.mxu0 0.0
    %4504 = vmatprep.subr.mxu0 0.0
    %4505 = vmatpush1.xpose.msra.mxu0 0.0
    %4506 = vmatprep.subr.mxu0 0.0
    %4507 = vmatpush1.xpose.msra.mxu0 0.0
    %4508 = vmatprep.subr.mxu0 0.0
    %4509 = vmatpush1.xpose.msra.mxu0 0.0
    %4510 = vmatprep.subr.mxu0 0.0
    %4511 = vmatpush1.xpose.msra.mxu0 %v4492
    %4512 = vmatprep.subr.mxu0 0.0
    %4513 = vmatpush1.xpose.msra.mxu0 %v4490
    %4514 = vmatprep.subr.mxu0 0.0
    %4515 = vmatpush1.xpose.msra.mxu0 %v4488
    %4516 = vmatprep.subr.mxu0 0.0
    %4517 = vmatpush1.xpose.msra.mxu0 %v4486
    %4518 = vmatprep.subr.mxu0 0.0
    %4519 = vmatpush1.xpose.msra.mxu0 %v4484
    %4520 = vmatprep.subr.mxu0 0.0
    %4521 = vmatpush1.xpose.msra.mxu0 %v4482
    %4522 = vmatprep.subr.mxu0 0.0
    %4523 = vmatpush1.xpose.msra.mxu0 %v4480
    %4524 = vmatprep.subr.mxu0 0.0
    %4525 = vmatpush1.xpose.msra.mxu0 %v4478
    %4526 = vmatprep.subr.mxu0 0.0
    %4527 = vmatpush2.xpose.msra.mxu0 0.0
    %4528 = vmatprep.subr.mxu0 0.0
    %4529 = vmatpush2.xpose.msra.mxu0 0.0
    %4530 = vmatprep.subr.mxu0 0.0
    %4531 = vmatpush2.xpose.msra.mxu0 0.0
    %4532 = vmatprep.subr.mxu0 0.0
    %4533 = vmatpush2.xpose.msra.mxu0 0.0
    %4534 = vmatprep.subr.mxu0 0.0
    %4535 = vmatpush2.xpose.msra.mxu0 0.0
    %4536 = vmatprep.subr.mxu0 0.0
    %4537 = vmatpush2.xpose.msra.mxu0 0.0
    %4538 = vmatprep.subr.mxu0 0.0
    %4539 = vmatpush2.xpose.msra.mxu0 0.0
    %4540 = vmatprep.subr.mxu0 0.0
    %4541 = vmatpush2.xpose.msra.mxu0 0.0
    %4542 = vmatprep.subr.mxu0 0.0
    %4543 = vmatpush2.xpose.msra.mxu0 0.0
    %4544 = vmatprep.subr.mxu0 0.0
    %4545 = vmatpush2.xpose.msra.mxu0 0.0
    %4546 = vmatprep.subr.mxu0 0.0
    %4547 = vmatpush2.xpose.msra.mxu0 0.0
    %4548 = vmatprep.subr.mxu0 0.0
    %4549 = vmatpush2.xpose.msra.mxu0 0.0
    %4550 = vmatprep.subr.mxu0 0.0
    %4551 = vmatpush2.xpose.msra.mxu0 0.0
    %4552 = vmatprep.subr.mxu0 0.0
    %4553 = vmatpush2.xpose.msra.mxu0 0.0
    %4554 = vmatprep.subr.mxu0 0.0
    %4555 = vmatpush2.xpose.msra.mxu0 0.0
    %4556 = vmatprep.subr.mxu0 0.0
    %4557 = vmatpush2.xpose.msra.mxu0 0.0
    %4558 = vmatprep.mubr.f32.mxu0 0.0
    %4559 = vmatmul.mubr.f32.gmra.mxu0 %v4476
    %v4560 = vpop.f32.mrf.mxu0
    %v4561 = vadd.f32 0.0, %v4560
    %v4562 = vpop.f32.mrf.mxu0
    %4563 = vdwg.mxu0
    %v4564 = vmul.f32 %v4561, 0.17677669
    %v4565 = vsel %vm115, %v4564, -1e+30
    %v4566 = vsel %vm556, %v4565, -inf
    %4567 = vmax.xlane.f32.xlu0 %v4566
    %v4568 = vpop.xlane.xlu0 %4567
    %v4569 = vsub.f32 %v4565, %v4568
    %v4570 = vmul.f32 %v4569, 1.442695
    %v4571 = vpow.pop %v4570
    %v4572 = vsel %vm556, %v4571, 0.0
    %4573 = vadd.xlane.f32.xlu0 %v4572
    %v4574 = vpop.xlane.xlu0 %4573
    %v4575 = vrcp.pop %v4574
    %v4576 = vmul.f32 %v4571, %v4575
    %4577 = vrot.lane.b32.xlu0 %v4025, 64
    %v4578 = vpop.permute.xlu0 %4577
    %4579 = vrot.lane.b32.xlu0 %v4026, 64
    %v4580 = vpop.permute.xlu0 %4579
    %4581 = vrot.lane.b32.xlu0 %v4027, 64
    %v4582 = vpop.permute.xlu0 %4581
    %4583 = vrot.lane.b32.xlu0 %v4028, 64
    %v4584 = vpop.permute.xlu0 %4583
    %4585 = vrot.lane.b32.xlu0 %v4029, 64
    %v4586 = vpop.permute.xlu0 %4585
    %4587 = vrot.lane.b32.xlu0 %v4030, 64
    %v4588 = vpop.permute.xlu0 %4587
    %4589 = vrot.lane.b32.xlu0 %v4031, 64
    %v4590 = vpop.permute.xlu0 %4589
    %4591 = vrot.lane.b32.xlu0 %v4032, 64
    %v4592 = vpop.permute.xlu0 %4591
    %v4602 = vsel %vm568, %v4576, 0
    %4604 = vmatprep.subr.mxu0 0.0
    %4605 = vmatpush1.msra.mxu0 0.0
    %4606 = vmatprep.subr.mxu0 0.0
    %4607 = vmatpush1.msra.mxu0 0.0
    %4608 = vmatprep.subr.mxu0 0.0
    %4609 = vmatpush1.msra.mxu0 0.0
    %4610 = vmatprep.subr.mxu0 0.0
    %4611 = vmatpush1.msra.mxu0 0.0
    %4612 = vmatprep.subr.mxu0 0.0
    %4613 = vmatpush1.msra.mxu0 0.0
    %4614 = vmatprep.subr.mxu0 0.0
    %4615 = vmatpush1.msra.mxu0 0.0
    %4616 = vmatprep.subr.mxu0 0.0
    %4617 = vmatpush1.msra.mxu0 0.0
    %4618 = vmatprep.subr.mxu0 0.0
    %4619 = vmatpush1.msra.mxu0 0.0
    %4620 = vmatprep.subr.mxu0 0.0
    %4621 = vmatpush1.msra.mxu0 %v4592
    %4622 = vmatprep.subr.mxu0 0.0
    %4623 = vmatpush1.msra.mxu0 %v4590
    %4624 = vmatprep.subr.mxu0 0.0
    %4625 = vmatpush1.msra.mxu0 %v4588
    %4626 = vmatprep.subr.mxu0 0.0
    %4627 = vmatpush1.msra.mxu0 %v4586
    %4628 = vmatprep.subr.mxu0 0.0
    %4629 = vmatpush1.msra.mxu0 %v4584
    %4630 = vmatprep.subr.mxu0 0.0
    %4631 = vmatpush1.msra.mxu0 %v4582
    %4632 = vmatprep.subr.mxu0 0.0
    %4633 = vmatpush1.msra.mxu0 %v4580
    %4634 = vmatprep.subr.mxu0 0.0
    %4635 = vmatpush1.msra.mxu0 %v4578
    %4636 = vmatprep.subr.mxu0 0.0
    %4637 = vmatpush2.msra.mxu0 0.0
    %4638 = vmatprep.subr.mxu0 0.0
    %4639 = vmatpush2.msra.mxu0 0.0
    %4640 = vmatprep.subr.mxu0 0.0
    %4641 = vmatpush2.msra.mxu0 0.0
    %4642 = vmatprep.subr.mxu0 0.0
    %4643 = vmatpush2.msra.mxu0 0.0
    %4644 = vmatprep.subr.mxu0 0.0
    %4645 = vmatpush2.msra.mxu0 0.0
    %4646 = vmatprep.subr.mxu0 0.0
    %4647 = vmatpush2.msra.mxu0 0.0
    %4648 = vmatprep.subr.mxu0 0.0
    %4649 = vmatpush2.msra.mxu0 0.0
    %4650 = vmatprep.subr.mxu0 0.0
    %4651 = vmatpush2.msra.mxu0 0.0
    %4652 = vmatprep.subr.mxu0 0.0
    %4653 = vmatpush2.msra.mxu0 0.0
    %4654 = vmatprep.subr.mxu0 0.0
    %4655 = vmatpush2.msra.mxu0 0.0
    %4656 = vmatprep.subr.mxu0 0.0
    %4657 = vmatpush2.msra.mxu0 0.0
    %4658 = vmatprep.subr.mxu0 0.0
    %4659 = vmatpush2.msra.mxu0 0.0
    %4660 = vmatprep.subr.mxu0 0.0
    %4661 = vmatpush2.msra.mxu0 0.0
    %4662 = vmatprep.subr.mxu0 0.0
    %4663 = vmatpush2.msra.mxu0 0.0
    %4664 = vmatprep.subr.mxu0 0.0
    %4665 = vmatpush2.msra.mxu0 0.0
    %4666 = vmatprep.subr.mxu0 0.0
    %4667 = vmatpush2.msra.mxu0 0.0
    %4668 = vmatprep.mubr.f32.mxu0 0.0
    %4669 = vmatmul.mubr.f32.gmra.mxu0 %v4602
    %v4670 = vpop.f32.mrf.mxu0
    %v4671 = vadd.f32 0.0, %v4670
    %v4672 = vpop.f32.mrf.mxu0
    %4673 = vdwg.mxu0
    %4674 = vrot.lane.b32.xlu0 %v4051, 32
    %v4675 = vpop.permute.xlu0 %4674
    %4676 = vrot.lane.b32.xlu0 %v4004, 32
    %v4677 = vpop.permute.xlu0 %4676
    %4678 = vrot.lane.b32.xlu0 %v4005, 32
    %v4679 = vpop.permute.xlu0 %4678
    %4680 = vrot.lane.b32.xlu0 %v4006, 32
    %v4681 = vpop.permute.xlu0 %4680
    %4682 = vrot.lane.b32.xlu0 %v4007, 32
    %v4683 = vpop.permute.xlu0 %4682
    %4684 = vrot.lane.b32.xlu0 %v4008, 32
    %v4685 = vpop.permute.xlu0 %4684
    %4686 = vrot.lane.b32.xlu0 %v4009, 32
    %v4687 = vpop.permute.xlu0 %4686
    %4688 = vrot.lane.b32.xlu0 %v4010, 32
    %v4689 = vpop.permute.xlu0 %4688
    %4690 = vrot.lane.b32.xlu0 %v4011, 32
    %v4691 = vpop.permute.xlu0 %4690
    %v4692 = vsel %vm456, %v4675, 0
    %v4694 = vsel %vm456, %v4677, 0
    %v4696 = vsel %vm456, %v4679, 0
    %v4698 = vsel %vm456, %v4681, 0
    %v4700 = vsel %vm456, %v4683, 0
    %v4702 = vsel %vm456, %v4685, 0
    %v4704 = vsel %vm456, %v4687, 0
    %v4706 = vsel %vm456, %v4689, 0
    %v4708 = vsel %vm456, %v4691, 0
    %4710 = vmatprep.subr.mxu0 0.0
    %4711 = vmatpush1.xpose.msra.mxu0 0.0
    %4712 = vmatprep.subr.mxu0 0.0
    %4713 = vmatpush1.xpose.msra.mxu0 0.0
    %4714 = vmatprep.subr.mxu0 0.0
    %4715 = vmatpush1.xpose.msra.mxu0 0.0
    %4716 = vmatprep.subr.mxu0 0.0
    %4717 = vmatpush1.xpose.msra.mxu0 0.0
    %4718 = vmatprep.subr.mxu0 0.0
    %4719 = vmatpush1.xpose.msra.mxu0 0.0
    %4720 = vmatprep.subr.mxu0 0.0
    %4721 = vmatpush1.xpose.msra.mxu0 0.0
    %4722 = vmatprep.subr.mxu0 0.0
    %4723 = vmatpush1.xpose.msra.mxu0 0.0
    %4724 = vmatprep.subr.mxu0 0.0
    %4725 = vmatpush1.xpose.msra.mxu0 0.0
    %4726 = vmatprep.subr.mxu0 0.0
    %4727 = vmatpush1.xpose.msra.mxu0 %v4708
    %4728 = vmatprep.subr.mxu0 0.0
    %4729 = vmatpush1.xpose.msra.mxu0 %v4706
    %4730 = vmatprep.subr.mxu0 0.0
    %4731 = vmatpush1.xpose.msra.mxu0 %v4704
    %4732 = vmatprep.subr.mxu0 0.0
    %4733 = vmatpush1.xpose.msra.mxu0 %v4702
    %4734 = vmatprep.subr.mxu0 0.0
    %4735 = vmatpush1.xpose.msra.mxu0 %v4700
    %4736 = vmatprep.subr.mxu0 0.0
    %4737 = vmatpush1.xpose.msra.mxu0 %v4698
    %4738 = vmatprep.subr.mxu0 0.0
    %4739 = vmatpush1.xpose.msra.mxu0 %v4696
    %4740 = vmatprep.subr.mxu0 0.0
    %4741 = vmatpush1.xpose.msra.mxu0 %v4694
    %4742 = vmatprep.subr.mxu0 0.0
    %4743 = vmatpush2.xpose.msra.mxu0 0.0
    %4744 = vmatprep.subr.mxu0 0.0
    %4745 = vmatpush2.xpose.msra.mxu0 0.0
    %4746 = vmatprep.subr.mxu0 0.0
    %4747 = vmatpush2.xpose.msra.mxu0 0.0
    %4748 = vmatprep.subr.mxu0 0.0
    %4749 = vmatpush2.xpose.msra.mxu0 0.0
    %4750 = vmatprep.subr.mxu0 0.0
    %4751 = vmatpush2.xpose.msra.mxu0 0.0
    %4752 = vmatprep.subr.mxu0 0.0
    %4753 = vmatpush2.xpose.msra.mxu0 0.0
    %4754 = vmatprep.subr.mxu0 0.0
    %4755 = vmatpush2.xpose.msra.mxu0 0.0
    %4756 = vmatprep.subr.mxu0 0.0
    %4757 = vmatpush2.xpose.msra.mxu0 0.0
    %4758 = vmatprep.subr.mxu0 0.0
    %4759 = vmatpush2.xpose.msra.mxu0 0.0
    %4760 = vmatprep.subr.mxu0 0.0
    %4761 = vmatpush2.xpose.msra.mxu0 0.0
    %4762 = vmatprep.subr.mxu0 0.0
    %4763 = vmatpush2.xpose.msra.mxu0 0.0
    %4764 = vmatprep.subr.mxu0 0.0
    %4765 = vmatpush2.xpose.msra.mxu0 0.0
    %4766 = vmatprep.subr.mxu0 0.0
    %4767 = vmatpush2.xpose.msra.mxu0 0.0
    %4768 = vmatprep.subr.mxu0 0.0
    %4769 = vmatpush2.xpose.msra.mxu0 0.0
    %4770 = vmatprep.subr.mxu0 0.0
    %4771 = vmatpush2.xpose.msra.mxu0 0.0
    %4772 = vmatprep.subr.mxu0 0.0
    %4773 = vmatpush2.xpose.msra.mxu0 0.0
    %4774 = vmatprep.mubr.f32.mxu0 0.0
    %4775 = vmatmul.mubr.f32.gmra.mxu0 %v4692
    %v4776 = vpop.f32.mrf.mxu0
    %v4777 = vadd.f32 0.0, %v4776
    %v4778 = vpop.f32.mrf.mxu0
    %4779 = vdwg.mxu0
    %v4780 = vmul.f32 %v4777, 0.17677669
    %v4781 = vsel %vm115, %v4780, -1e+30
    %v4782 = vsel %vm556, %v4781, -inf
    %4783 = vmax.xlane.f32.xlu0 %v4782
    %v4784 = vpop.xlane.xlu0 %4783
    %v4785 = vsub.f32 %v4781, %v4784
    %v4786 = vmul.f32 %v4785, 1.442695
    %v4787 = vpow.pop %v4786
    %v4788 = vsel %vm556, %v4787, 0.0
    %4789 = vadd.xlane.f32.xlu0 %v4788
    %v4790 = vpop.xlane.xlu0 %4789
    %v4791 = vrcp.pop %v4790
    %v4792 = vmul.f32 %v4787, %v4791
    %4793 = vrot.lane.b32.xlu0 %v4025, 32
    %v4794 = vpop.permute.xlu0 %4793
    %4795 = vrot.lane.b32.xlu0 %v4026, 32
    %v4796 = vpop.permute.xlu0 %4795
    %4797 = vrot.lane.b32.xlu0 %v4027, 32
    %v4798 = vpop.permute.xlu0 %4797
    %4799 = vrot.lane.b32.xlu0 %v4028, 32
    %v4800 = vpop.permute.xlu0 %4799
    %4801 = vrot.lane.b32.xlu0 %v4029, 32
    %v4802 = vpop.permute.xlu0 %4801
    %4803 = vrot.lane.b32.xlu0 %v4030, 32
    %v4804 = vpop.permute.xlu0 %4803
    %4805 = vrot.lane.b32.xlu0 %v4031, 32
    %v4806 = vpop.permute.xlu0 %4805
    %4807 = vrot.lane.b32.xlu0 %v4032, 32
    %v4808 = vpop.permute.xlu0 %4807
    %v4818 = vsel %vm568, %v4792, 0
    %4820 = vmatprep.subr.mxu0 0.0
    %4821 = vmatpush1.msra.mxu0 0.0
    %4822 = vmatprep.subr.mxu0 0.0
    %4823 = vmatpush1.msra.mxu0 0.0
    %4824 = vmatprep.subr.mxu0 0.0
    %4825 = vmatpush1.msra.mxu0 0.0
    %4826 = vmatprep.subr.mxu0 0.0
    %4827 = vmatpush1.msra.mxu0 0.0
    %4828 = vmatprep.subr.mxu0 0.0
    %4829 = vmatpush1.msra.mxu0 0.0
    %4830 = vmatprep.subr.mxu0 0.0
    %4831 = vmatpush1.msra.mxu0 0.0
    %4832 = vmatprep.subr.mxu0 0.0
    %4833 = vmatpush1.msra.mxu0 0.0
    %4834 = vmatprep.subr.mxu0 0.0
    %4835 = vmatpush1.msra.mxu0 0.0
    %4836 = vmatprep.subr.mxu0 0.0
    %4837 = vmatpush1.msra.mxu0 %v4808
    %4838 = vmatprep.subr.mxu0 0.0
    %4839 = vmatpush1.msra.mxu0 %v4806
    %4840 = vmatprep.subr.mxu0 0.0
    %4841 = vmatpush1.msra.mxu0 %v4804
    %4842 = vmatprep.subr.mxu0 0.0
    %4843 = vmatpush1.msra.mxu0 %v4802
    %4844 = vmatprep.subr.mxu0 0.0
    %4845 = vmatpush1.msra.mxu0 %v4800
    %4846 = vmatprep.subr.mxu0 0.0
    %4847 = vmatpush1.msra.mxu0 %v4798
    %4848 = vmatprep.subr.mxu0 0.0
    %4849 = vmatpush1.msra.mxu0 %v4796
    %4850 = vmatprep.subr.mxu0 0.0
    %4851 = vmatpush1.msra.mxu0 %v4794
    %4852 = vmatprep.subr.mxu0 0.0
    %4853 = vmatpush2.msra.mxu0 0.0
    %4854 = vmatprep.subr.mxu0 0.0
    %4855 = vmatpush2.msra.mxu0 0.0
    %4856 = vmatprep.subr.mxu0 0.0
    %4857 = vmatpush2.msra.mxu0 0.0
    %4858 = vmatprep.subr.mxu0 0.0
    %4859 = vmatpush2.msra.mxu0 0.0
    %4860 = vmatprep.subr.mxu0 0.0
    %4861 = vmatpush2.msra.mxu0 0.0
    %4862 = vmatprep.subr.mxu0 0.0
    %4863 = vmatpush2.msra.mxu0 0.0
    %4864 = vmatprep.subr.mxu0 0.0
    %4865 = vmatpush2.msra.mxu0 0.0
    %4866 = vmatprep.subr.mxu0 0.0
    %4867 = vmatpush2.msra.mxu0 0.0
    %4868 = vmatprep.subr.mxu0 0.0
    %4869 = vmatpush2.msra.mxu0 0.0
    %4870 = vmatprep.subr.mxu0 0.0
    %4871 = vmatpush2.msra.mxu0 0.0
    %4872 = vmatprep.subr.mxu0 0.0
    %4873 = vmatpush2.msra.mxu0 0.0
    %4874 = vmatprep.subr.mxu0 0.0
    %4875 = vmatpush2.msra.mxu0 0.0
    %4876 = vmatprep.subr.mxu0 0.0
    %4877 = vmatpush2.msra.mxu0 0.0
    %4878 = vmatprep.subr.mxu0 0.0
    %4879 = vmatpush2.msra.mxu0 0.0
    %4880 = vmatprep.subr.mxu0 0.0
    %4881 = vmatpush2.msra.mxu0 0.0
    %4882 = vmatprep.subr.mxu0 0.0
    %4883 = vmatpush2.msra.mxu0 0.0
    %4884 = vmatprep.mubr.f32.mxu0 0.0
    %4885 = vmatmul.mubr.f32.gmra.mxu0 %v4818
    %v4886 = vpop.f32.mrf.mxu0
    %v4887 = vadd.f32 0.0, %v4886
    %v4888 = vpop.f32.mrf.mxu0
    %4889 = vdwg.mxu0
    %4891 = vrot.lane.b32.xlu0 %v4455, 32
    %v4892 = vpop.permute.xlu0 %4891
    %4895 = vrot.lane.b32.xlu0 %v4671, 64
    %v4896 = vpop.permute.xlu0 %4895
    %4899 = vrot.lane.b32.xlu0 %v4887, 96
    %v4900 = vpop.permute.xlu0 %4899
    %v4902 = vsel %vm456, %v4231, %v4892
    %v4903 = vsel %vm568, %v4902, %v4896
    %v4904 = vsel %vm1312, %v4903, %v4900
    %v4906 = vrot.slane %v4904, 7
    %v4908 = vsel %vm2231, %v3990, %v4906
    %s4909 = scalar_lea.vmem [#allocation5], 64
    %v4910 = vld [vmem:[%s4909] sm:$0xf]
    %v4911 = vld [vmem:[%s4909 + $0x4] sm:$0xf]
    %v4912 = vld [vmem:[%s4909 + $0x8] sm:$0xf]
    %v4913 = vld [vmem:[%s4909 + $0xc] sm:$0xf]
    %v4914 = vld [vmem:[%s4909 + $0x10] sm:$0xf]
    %v4915 = vld [vmem:[%s4909 + $0x14] sm:$0xf]
    %v4916 = vld [vmem:[%s4909 + $0x18] sm:$0xf]
    %v4917 = vld [vmem:[%s4909 + $0x1c] sm:$0xf]
    %v4918 = vld [vmem:[%s4909 + $0x20] sm:$0xf]
    %v4919 = vld [vmem:[%s4909 + $0x24] sm:$0xf]
    %v4920 = vld [vmem:[%s4909 + $0x28] sm:$0xf]
    %v4921 = vld [vmem:[%s4909 + $0x2c] sm:$0xf]
    %v4922 = vld [vmem:[%s4909 + $0x30] sm:$0xf]
    %v4923 = vld [vmem:[%s4909 + $0x34] sm:$0xf]
    %v4924 = vld [vmem:[%s4909 + $0x38] sm:$0xf]
    %v4925 = vld [vmem:[%s4909 + $0x3c] sm:$0xf]
    %v4926 = vpack.c.bf16 %v4908, %v4908
    %v4943 = vunpack.c.l.b16 %v4910
    %v4944 = vunpack.c.l.b16 %v4911
    %v4945 = vunpack.c.l.b16 %v4912
    %v4946 = vunpack.c.l.b16 %v4913
    %v4947 = vunpack.c.l.b16 %v4914
    %v4948 = vunpack.c.l.b16 %v4915
    %v4949 = vunpack.c.l.b16 %v4916
    %v4950 = vunpack.c.l.b16 %v4917
    %v4951 = vunpack.c.l.b16 %v4918
    %v4952 = vunpack.c.l.b16 %v4919
    %v4953 = vunpack.c.l.b16 %v4920
    %v4954 = vunpack.c.l.b16 %v4921
    %v4955 = vunpack.c.l.b16 %v4922
    %v4956 = vunpack.c.l.b16 %v4923
    %v4957 = vunpack.c.l.b16 %v4924
    %v4958 = vunpack.c.l.b16 %v4925
    %v4959 = vpack.c.b16 %v4944, %v4943
    %v4960 = vpack.c.b16 %v4946, %v4945
    %v4961 = vpack.c.b16 %v4948, %v4947
    %v4962 = vpack.c.b16 %v4950, %v4949
    %v4963 = vpack.c.b16 %v4952, %v4951
    %v4964 = vpack.c.b16 %v4954, %v4953
    %v4965 = vpack.c.b16 %v4956, %v4955
    %v4966 = vpack.c.b16 %v4958, %v4957
    %4975 = vmatprep.subr.bf16.mxu0 0
    %4976 = vmatpush1.bf16.msra.mxu0 %v4966
    %4977 = vmatprep.subr.bf16.mxu0 0
    %4978 = vmatpush1.bf16.msra.mxu0 %v4965
    %4979 = vmatprep.subr.bf16.mxu0 0
    %4980 = vmatpush1.bf16.msra.mxu0 %v4964
    %4981 = vmatprep.subr.bf16.mxu0 0
    %4982 = vmatpush1.bf16.msra.mxu0 %v4963
    %4983 = vmatprep.subr.bf16.mxu0 0
    %4984 = vmatpush1.bf16.msra.mxu0 %v4962
    %4985 = vmatprep.subr.bf16.mxu0 0
    %4986 = vmatpush1.bf16.msra.mxu0 %v4961
    %4987 = vmatprep.subr.bf16.mxu0 0
    %4988 = vmatpush1.bf16.msra.mxu0 %v4960
    %4989 = vmatprep.subr.bf16.mxu0 0
    %4990 = vmatpush1.bf16.msra.mxu0 %v4959
    %4991 = vmatprep.subr.bf16.mxu0 0
    %4992 = vmatpush2.bf16.msra.mxu0 0
    %4993 = vmatprep.subr.bf16.mxu0 0
    %4994 = vmatpush2.bf16.msra.mxu0 0
    %4995 = vmatprep.subr.bf16.mxu0 0
    %4996 = vmatpush2.bf16.msra.mxu0 0
    %4997 = vmatprep.subr.bf16.mxu0 0
    %4998 = vmatpush2.bf16.msra.mxu0 0
    %4999 = vmatprep.subr.bf16.mxu0 0
    %5000 = vmatpush2.bf16.msra.mxu0 0
    %5001 = vmatprep.subr.bf16.mxu0 0
    %5002 = vmatpush2.bf16.msra.mxu0 0
    %5003 = vmatprep.subr.bf16.mxu0 0
    %5004 = vmatpush2.bf16.msra.mxu0 0
    %5005 = vmatprep.subr.bf16.mxu0 0
    %5006 = vmatpush2.bf16.msra.mxu0 0
    %5007 = vmatprep.mubr.bf16.mxu0 0
    %5008 = vmatmul.mubr.bf16.gmra.mxu0 %v4926
    %v5009 = vpop.f32.mrf.mxu0
    %v5010 = vadd.f32 0.0, %v5009
    %v5011 = vpop.f32.mrf.mxu0
    %v5012 = vpop.f32.mrf.mxu0
    %v5013 = vpop.f32.mrf.mxu0
    %5014 = vdwg.mxu0
    %v5015 = vadd.f32 %v2816, %v5010
    %s5016 = scalar_lea.vmem %s5, 1
    %v5017 = vld [vmem:[%s5016] sm:$0x1]
    %v5018 = vmul.f32 %v5015, %v5015
    %v5019 = vsel %vm126, %v5018, 0.0
    %5020 = vadd.xlane.f32.xlu0 %v5019
    %v5021 = vpop.xlane.xlu0 %5020
    %v5022 = vmul.f32 %v5021, %v130
    %v5023 = vadd.f32 %v5022, 1e-05
    %v5024 = vrsqrt.pop %v5023
    %v5025 = vmul.f32 %v5015, %v5024
    %v5027 = vlaneseq
    %v5028 = vshrl.u32 %v5027, 7
    %v5029 = vsub.s32 0, %v5028
    %v5030 = vrot.slane %v5017, %v5029
    %v5032 = vmul.f32 %v5025, %v5030
    %s5033 = scalar_lea.vmem %s6, 256
    %v5034 = vld [vmem:[%s5033] sm:$0xff]
    %v5035 = vld [vmem:[%s5033 + $0x8] sm:$0xff]
    %v5036 = vld [vmem:[%s5033 + $0x10] sm:$0xff]
    %v5037 = vld [vmem:[%s5033 + $0x18] sm:$0xff]
    %v5038 = vld [vmem:[%s5033 + $0x20] sm:$0xff]
    %v5039 = vld [vmem:[%s5033 + $0x28] sm:$0xff]
    %v5040 = vld [vmem:[%s5033 + $0x30] sm:$0xff]
    %v5041 = vld [vmem:[%s5033 + $0x38] sm:$0xff]
    %v5042 = vld [vmem:[%s5033 + $0x40] sm:$0xff]
    %v5043 = vld [vmem:[%s5033 + $0x48] sm:$0xff]
    %v5044 = vld [vmem:[%s5033 + $0x50] sm:$0xff]
    %v5045 = vld [vmem:[%s5033 + $0x58] sm:$0xff]
    %v5046 = vld [vmem:[%s5033 + $0x60] sm:$0xff]
    %v5047 = vld [vmem:[%s5033 + $0x68] sm:$0xff]
    %v5048 = vld [vmem:[%s5033 + $0x70] sm:$0xff]
    %v5049 = vld [vmem:[%s5033 + $0x78] sm:$0xff]
    %v5050 = vld [vmem:[%s5033 + $0x80] sm:$0xff]
    %v5051 = vld [vmem:[%s5033 + $0x88] sm:$0xff]
    %v5052 = vld [vmem:[%s5033 + $0x90] sm:$0xff]
    %v5053 = vld [vmem:[%s5033 + $0x98] sm:$0xff]
    %v5054 = vld [vmem:[%s5033 + $0xa0] sm:$0xff]
    %v5055 = vld [vmem:[%s5033 + $0xa8] sm:$0xff]
    %v5056 = vld [vmem:[%s5033 + $0xb0] sm:$0xff]
    %v5057 = vld [vmem:[%s5033 + $0xb8] sm:$0xff]
    %v5058 = vld [vmem:[%s5033 + $0xc0] sm:$0xff]
    %v5059 = vld [vmem:[%s5033 + $0xc8] sm:$0xff]
    %v5060 = vld [vmem:[%s5033 + $0xd0] sm:$0xff]
    %v5061 = vld [vmem:[%s5033 + $0xd8] sm:$0xff]
    %v5062 = vld [vmem:[%s5033 + $0xe0] sm:$0xff]
    %v5063 = vld [vmem:[%s5033 + $0xe8] sm:$0xff]
    %v5064 = vld [vmem:[%s5033 + $0xf0] sm:$0xff]
    %v5065 = vld [vmem:[%s5033 + $0xf8] sm:$0xff]
    %v5066 = vpack.c.bf16 %v5032, %v5032
    %v5099 = vunpack.c.l.b16 %v5034
    %v5100 = vunpack.c.h.b16 %v5034
    %v5101 = vunpack.c.l.b16 %v5035
    %v5102 = vunpack.c.h.b16 %v5035
    %v5103 = vunpack.c.l.b16 %v5036
    %v5104 = vunpack.c.h.b16 %v5036
    %v5105 = vunpack.c.l.b16 %v5037
    %v5106 = vunpack.c.h.b16 %v5037
    %v5107 = vunpack.c.l.b16 %v5038
    %v5108 = vunpack.c.h.b16 %v5038
    %v5109 = vunpack.c.l.b16 %v5039
    %v5110 = vunpack.c.h.b16 %v5039
    %v5111 = vunpack.c.l.b16 %v5040
    %v5112 = vunpack.c.h.b16 %v5040
    %v5113 = vunpack.c.l.b16 %v5041
    %v5114 = vunpack.c.h.b16 %v5041
    %v5115 = vunpack.c.l.b16 %v5042
    %v5116 = vunpack.c.h.b16 %v5042
    %v5117 = vunpack.c.l.b16 %v5043
    %v5118 = vunpack.c.h.b16 %v5043
    %v5119 = vunpack.c.l.b16 %v5044
    %v5120 = vunpack.c.h.b16 %v5044
    %v5121 = vunpack.c.l.b16 %v5045
    %v5122 = vunpack.c.h.b16 %v5045
    %v5123 = vunpack.c.l.b16 %v5046
    %v5124 = vunpack.c.h.b16 %v5046
    %v5125 = vunpack.c.l.b16 %v5047
    %v5126 = vunpack.c.h.b16 %v5047
    %v5127 = vunpack.c.l.b16 %v5048
    %v5128 = vunpack.c.h.b16 %v5048
    %v5129 = vunpack.c.l.b16 %v5049
    %v5130 = vunpack.c.h.b16 %v5049
    %v5131 = vunpack.c.l.b16 %v5050
    %v5132 = vunpack.c.h.b16 %v5050
    %v5133 = vunpack.c.l.b16 %v5051
    %v5134 = vunpack.c.h.b16 %v5051
    %v5135 = vunpack.c.l.b16 %v5052
    %v5136 = vunpack.c.h.b16 %v5052
    %v5137 = vunpack.c.l.b16 %v5053
    %v5138 = vunpack.c.h.b16 %v5053
    %v5139 = vunpack.c.l.b16 %v5054
    %v5140 = vunpack.c.h.b16 %v5054
    %v5141 = vunpack.c.l.b16 %v5055
    %v5142 = vunpack.c.h.b16 %v5055
    %v5143 = vunpack.c.l.b16 %v5056
    %v5144 = vunpack.c.h.b16 %v5056
    %v5145 = vunpack.c.l.b16 %v5057
    %v5146 = vunpack.c.h.b16 %v5057
    %v5147 = vunpack.c.l.b16 %v5058
    %v5148 = vunpack.c.h.b16 %v5058
    %v5149 = vunpack.c.l.b16 %v5059
    %v5150 = vunpack.c.h.b16 %v5059
    %v5151 = vunpack.c.l.b16 %v5060
    %v5152 = vunpack.c.h.b16 %v5060
    %v5153 = vunpack.c.l.b16 %v5061
    %v5154 = vunpack.c.h.b16 %v5061
    %v5155 = vunpack.c.l.b16 %v5062
    %v5156 = vunpack.c.h.b16 %v5062
    %v5157 = vunpack.c.l.b16 %v5063
    %v5158 = vunpack.c.h.b16 %v5063
    %v5159 = vunpack.c.l.b16 %v5064
    %v5160 = vunpack.c.h.b16 %v5064
    %v5161 = vunpack.c.l.b16 %v5065
    %v5162 = vunpack.c.h.b16 %v5065
    %v5163 = vpack.c.b16 %v5103, %v5099
    %v5164 = vpack.c.b16 %v5104, %v5100
    %v5165 = vpack.c.b16 %v5105, %v5101
    %v5166 = vpack.c.b16 %v5106, %v5102
    %v5167 = vpack.c.b16 %v5111, %v5107
    %v5168 = vpack.c.b16 %v5112, %v5108
    %v5169 = vpack.c.b16 %v5113, %v5109
    %v5170 = vpack.c.b16 %v5114, %v5110
    %v5171 = vpack.c.b16 %v5119, %v5115
    %v5172 = vpack.c.b16 %v5120, %v5116
    %v5173 = vpack.c.b16 %v5121, %v5117
    %v5174 = vpack.c.b16 %v5122, %v5118
    %v5175 = vpack.c.b16 %v5127, %v5123
    %v5176 = vpack.c.b16 %v5128, %v5124
    %v5177 = vpack.c.b16 %v5129, %v5125
    %v5178 = vpack.c.b16 %v5130, %v5126
    %v5179 = vpack.c.b16 %v5135, %v5131
    %v5180 = vpack.c.b16 %v5136, %v5132
    %v5181 = vpack.c.b16 %v5137, %v5133
    %v5182 = vpack.c.b16 %v5138, %v5134
    %v5183 = vpack.c.b16 %v5143, %v5139
    %v5184 = vpack.c.b16 %v5144, %v5140
    %v5185 = vpack.c.b16 %v5145, %v5141
    %v5186 = vpack.c.b16 %v5146, %v5142
    %v5187 = vpack.c.b16 %v5151, %v5147
    %v5188 = vpack.c.b16 %v5152, %v5148
    %v5189 = vpack.c.b16 %v5153, %v5149
    %v5190 = vpack.c.b16 %v5154, %v5150
    %v5191 = vpack.c.b16 %v5159, %v5155
    %v5192 = vpack.c.b16 %v5160, %v5156
    %v5193 = vpack.c.b16 %v5161, %v5157
    %v5194 = vpack.c.b16 %v5162, %v5158
    %5227 = vmatprep.subr.bf16.mxu0 %v5192
    %5228 = vmatpush1.bf16.msra.mxu0 %v5191
    %5229 = vmatprep.subr.bf16.mxu0 %v5188
    %5230 = vmatpush1.bf16.msra.mxu0 %v5187
    %5231 = vmatprep.subr.bf16.mxu0 %v5184
    %5232 = vmatpush1.bf16.msra.mxu0 %v5183
    %5233 = vmatprep.subr.bf16.mxu0 %v5180
    %5234 = vmatpush1.bf16.msra.mxu0 %v5179
    %5235 = vmatprep.subr.bf16.mxu0 %v5176
    %5236 = vmatpush1.bf16.msra.mxu0 %v5175
    %5237 = vmatprep.subr.bf16.mxu0 %v5172
    %5238 = vmatpush1.bf16.msra.mxu0 %v5171
    %5239 = vmatprep.subr.bf16.mxu0 %v5168
    %5240 = vmatpush1.bf16.msra.mxu0 %v5167
    %5241 = vmatprep.subr.bf16.mxu0 %v5164
    %5242 = vmatpush1.bf16.msra.mxu0 %v5163
    %5243 = vmatprep.subr.bf16.mxu0 0
    %5244 = vmatpush2.bf16.msra.mxu0 0
    %5245 = vmatprep.subr.bf16.mxu0 0
    %5246 = vmatpush2.bf16.msra.mxu0 0
    %5247 = vmatprep.subr.bf16.mxu0 0
    %5248 = vmatpush2.bf16.msra.mxu0 0
    %5249 = vmatprep.subr.bf16.mxu0 0
    %5250 = vmatpush2.bf16.msra.mxu0 0
    %5251 = vmatprep.subr.bf16.mxu0 0
    %5252 = vmatpush2.bf16.msra.mxu0 0
    %5253 = vmatprep.subr.bf16.mxu0 0
    %5254 = vmatpush2.bf16.msra.mxu0 0
    %5255 = vmatprep.subr.bf16.mxu0 0
    %5256 = vmatpush2.bf16.msra.mxu0 0
    %5257 = vmatprep.subr.bf16.mxu0 0
    %5258 = vmatpush2.bf16.msra.mxu0 0
    %5259 = vmatprep.mubr.bf16.mxu0 0
    %5260 = vmatmul.mubr.bf16.gmra.mxu0 %v5066
    %v5261 = vpop.f32.mrf.mxu0
    %v5262 = vadd.f32 0.0, %v5261
    %v5263 = vpop.f32.mrf.mxu0
    %v5264 = vadd.f32 0.0, %v5263
    %v5265 = vpop.f32.mrf.mxu0
    %v5266 = vpop.f32.mrf.mxu0
    %5267 = vdwg.mxu0
    %5268 = vmatprep.subr.bf16.mxu0 %v5194
    %5269 = vmatpush1.bf16.msra.mxu0 %v5193
    %5270 = vmatprep.subr.bf16.mxu0 %v5190
    %5271 = vmatpush1.bf16.msra.mxu0 %v5189
    %5272 = vmatprep.subr.bf16.mxu0 %v5186
    %5273 = vmatpush1.bf16.msra.mxu0 %v5185
    %5274 = vmatprep.subr.bf16.mxu0 %v5182
    %5275 = vmatpush1.bf16.msra.mxu0 %v5181
    %5276 = vmatprep.subr.bf16.mxu0 %v5178
    %5277 = vmatpush1.bf16.msra.mxu0 %v5177
    %5278 = vmatprep.subr.bf16.mxu0 %v5174
    %5279 = vmatpush1.bf16.msra.mxu0 %v5173
    %5280 = vmatprep.subr.bf16.mxu0 %v5170
    %5281 = vmatpush1.bf16.msra.mxu0 %v5169
    %5282 = vmatprep.subr.bf16.mxu0 %v5166
    %5283 = vmatpush1.bf16.msra.mxu0 %v5165
    %5284 = vmatprep.subr.bf16.mxu0 0
    %5285 = vmatpush2.bf16.msra.mxu0 0
    %5286 = vmatprep.subr.bf16.mxu0 0
    %5287 = vmatpush2.bf16.msra.mxu0 0
    %5288 = vmatprep.subr.bf16.mxu0 0
    %5289 = vmatpush2.bf16.msra.mxu0 0
    %5290 = vmatprep.subr.bf16.mxu0 0
    %5291 = vmatpush2.bf16.msra.mxu0 0
    %5292 = vmatprep.subr.bf16.mxu0 0
    %5293 = vmatpush2.bf16.msra.mxu0 0
    %5294 = vmatprep.subr.bf16.mxu0 0
    %5295 = vmatpush2.bf16.msra.mxu0 0
    %5296 = vmatprep.subr.bf16.mxu0 0
    %5297 = vmatpush2.bf16.msra.mxu0 0
    %5298 = vmatprep.subr.bf16.mxu0 0
    %5299 = vmatpush2.bf16.msra.mxu0 0
    %5300 = vmatprep.mubr.bf16.mxu0 0
    %5301 = vmatmul.mubr.bf16.gmra.mxu0 %v5066
    %v5302 = vpop.f32.mrf.mxu0
    %v5303 = vadd.f32 0.0, %v5302
    %v5304 = vpop.f32.mrf.mxu0
    %v5305 = vadd.f32 0.0, %v5304
    %v5306 = vpop.f32.mrf.mxu0
    %v5307 = vpop.f32.mrf.mxu0
    %5308 = vdwg.mxu0
    %v5309 = vxor.u32 %v5262, 2147483648
    %v5310 = vxor.u32 %v5264, 2147483648
    %v5311 = vmul.f32 %v5309, 1.442695
    %v5312 = vpow.pop %v5311
    %v5313 = vmul.f32 %v5310, 1.442695
    %v5314 = vpow.pop %v5313
    %v5315 = vadd.f32 %v5312, 1.0
    %v5316 = vadd.f32 %v5314, 1.0
    %v5317 = vrcp.pop %v5315
    %v5318 = vmul.f32 1.0, %v5317
    %v5319 = vrcp.pop %v5316
    %v5320 = vmul.f32 1.0, %v5319
    %v5321 = vmul.f32 %v5262, %v5318
    %v5322 = vmul.f32 %v5264, %v5320
    %v5323 = vmul.f32 %v5321, %v5303
    %v5324 = vmul.f32 %v5322, %v5305
    %s5325 = scalar_lea.vmem [#allocation7], 128
    %v5326 = vld [vmem:[%s5325] sm:$0xf]
    %v5327 = vld [vmem:[%s5325 + $0x4] sm:$0xf]
    %v5328 = vld [vmem:[%s5325 + $0x8] sm:$0xf]
    %v5329 = vld [vmem:[%s5325 + $0xc] sm:$0xf]
    %v5330 = vld [vmem:[%s5325 + $0x10] sm:$0xf]
    %v5331 = vld [vmem:[%s5325 + $0x14] sm:$0xf]
    %v5332 = vld [vmem:[%s5325 + $0x18] sm:$0xf]
    %v5333 = vld [vmem:[%s5325 + $0x1c] sm:$0xf]
    %v5334 = vld [vmem:[%s5325 + $0x20] sm:$0xf]
    %v5335 = vld [vmem:[%s5325 + $0x24] sm:$0xf]
    %v5336 = vld [vmem:[%s5325 + $0x28] sm:$0xf]
    %v5337 = vld [vmem:[%s5325 + $0x2c] sm:$0xf]
    %v5338 = vld [vmem:[%s5325 + $0x30] sm:$0xf]
    %v5339 = vld [vmem:[%s5325 + $0x34] sm:$0xf]
    %v5340 = vld [vmem:[%s5325 + $0x38] sm:$0xf]
    %v5341 = vld [vmem:[%s5325 + $0x3c] sm:$0xf]
    %v5342 = vld [vmem:[%s5325 + $0x40] sm:$0xf]
    %v5343 = vld [vmem:[%s5325 + $0x44] sm:$0xf]
    %v5344 = vld [vmem:[%s5325 + $0x48] sm:$0xf]
    %v5345 = vld [vmem:[%s5325 + $0x4c] sm:$0xf]
    %v5346 = vld [vmem:[%s5325 + $0x50] sm:$0xf]
    %v5347 = vld [vmem:[%s5325 + $0x54] sm:$0xf]
    %v5348 = vld [vmem:[%s5325 + $0x58] sm:$0xf]
    %v5349 = vld [vmem:[%s5325 + $0x5c] sm:$0xf]
    %v5350 = vld [vmem:[%s5325 + $0x60] sm:$0xf]
    %v5351 = vld [vmem:[%s5325 + $0x64] sm:$0xf]
    %v5352 = vld [vmem:[%s5325 + $0x68] sm:$0xf]
    %v5353 = vld [vmem:[%s5325 + $0x6c] sm:$0xf]
    %v5354 = vld [vmem:[%s5325 + $0x70] sm:$0xf]
    %v5355 = vld [vmem:[%s5325 + $0x74] sm:$0xf]
    %v5356 = vld [vmem:[%s5325 + $0x78] sm:$0xf]
    %v5357 = vld [vmem:[%s5325 + $0x7c] sm:$0xf]
    %v5358 = vpack.c.bf16 %v5323, %v5323
    %v5359 = vpack.c.bf16 %v5324, %v5324
    %v5392 = vunpack.c.l.b16 %v5326
    %v5393 = vunpack.c.l.b16 %v5327
    %v5394 = vunpack.c.l.b16 %v5328
    %v5395 = vunpack.c.l.b16 %v5329
    %v5396 = vunpack.c.l.b16 %v5330
    %v5397 = vunpack.c.l.b16 %v5331
    %v5398 = vunpack.c.l.b16 %v5332
    %v5399 = vunpack.c.l.b16 %v5333
    %v5400 = vunpack.c.l.b16 %v5334
    %v5401 = vunpack.c.l.b16 %v5335
    %v5402 = vunpack.c.l.b16 %v5336
    %v5403 = vunpack.c.l.b16 %v5337
    %v5404 = vunpack.c.l.b16 %v5338
    %v5405 = vunpack.c.l.b16 %v5339
    %v5406 = vunpack.c.l.b16 %v5340
    %v5407 = vunpack.c.l.b16 %v5341
    %v5408 = vunpack.c.l.b16 %v5342
    %v5409 = vunpack.c.l.b16 %v5343
    %v5410 = vunpack.c.l.b16 %v5344
    %v5411 = vunpack.c.l.b16 %v5345
    %v5412 = vunpack.c.l.b16 %v5346
    %v5413 = vunpack.c.l.b16 %v5347
    %v5414 = vunpack.c.l.b16 %v5348
    %v5415 = vunpack.c.l.b16 %v5349
    %v5416 = vunpack.c.l.b16 %v5350
    %v5417 = vunpack.c.l.b16 %v5351
    %v5418 = vunpack.c.l.b16 %v5352
    %v5419 = vunpack.c.l.b16 %v5353
    %v5420 = vunpack.c.l.b16 %v5354
    %v5421 = vunpack.c.l.b16 %v5355
    %v5422 = vunpack.c.l.b16 %v5356
    %v5423 = vunpack.c.l.b16 %v5357
    %v5424 = vpack.c.b16 %v5393, %v5392
    %v5425 = vpack.c.b16 %v5395, %v5394
    %v5426 = vpack.c.b16 %v5397, %v5396
    %v5427 = vpack.c.b16 %v5399, %v5398
    %v5428 = vpack.c.b16 %v5401, %v5400
    %v5429 = vpack.c.b16 %v5403, %v5402
    %v5430 = vpack.c.b16 %v5405, %v5404
    %v5431 = vpack.c.b16 %v5407, %v5406
    %v5432 = vpack.c.b16 %v5409, %v5408
    %v5433 = vpack.c.b16 %v5411, %v5410
    %v5434 = vpack.c.b16 %v5413, %v5412
    %v5435 = vpack.c.b16 %v5415, %v5414
    %v5436 = vpack.c.b16 %v5417, %v5416
    %v5437 = vpack.c.b16 %v5419, %v5418
    %v5438 = vpack.c.b16 %v5421, %v5420
    %v5439 = vpack.c.b16 %v5423, %v5422
    %5456 = vmatprep.subr.bf16.mxu0 0
    %5457 = vmatpush1.bf16.msra.mxu0 %v5431
    %5458 = vmatprep.subr.bf16.mxu0 0
    %5459 = vmatpush1.bf16.msra.mxu0 %v5430
    %5460 = vmatprep.subr.bf16.mxu0 0
    %5461 = vmatpush1.bf16.msra.mxu0 %v5429
    %5462 = vmatprep.subr.bf16.mxu0 0
    %5463 = vmatpush1.bf16.msra.mxu0 %v5428
    %5464 = vmatprep.subr.bf16.mxu0 0
    %5465 = vmatpush1.bf16.msra.mxu0 %v5427
    %5466 = vmatprep.subr.bf16.mxu0 0
    %5467 = vmatpush1.bf16.msra.mxu0 %v5426
    %5468 = vmatprep.subr.bf16.mxu0 0
    %5469 = vmatpush1.bf16.msra.mxu0 %v5425
    %5470 = vmatprep.subr.bf16.mxu0 0
    %5471 = vmatpush1.bf16.msra.mxu0 %v5424
    %5472 = vmatprep.subr.bf16.mxu0 0
    %5473 = vmatpush2.bf16.msra.mxu0 %v5439
    %5474 = vmatprep.subr.bf16.mxu0 0
    %5475 = vmatpush2.bf16.msra.mxu0 %v5438
    %5476 = vmatprep.subr.bf16.mxu0 0
    %5477 = vmatpush2.bf16.msra.mxu0 %v5437
    %5478 = vmatprep.subr.bf16.mxu0 0
    %5479 = vmatpush2.bf16.msra.mxu0 %v5436
    %5480 = vmatprep.subr.bf16.mxu0 0
    %5481 = vmatpush2.bf16.msra.mxu0 %v5435
    %5482 = vmatprep.subr.bf16.mxu0 0
    %5483 = vmatpush2.bf16.msra.mxu0 %v5434
    %5484 = vmatprep.subr.bf16.mxu0 0
    %5485 = vmatpush2.bf16.msra.mxu0 %v5433
    %5486 = vmatprep.subr.bf16.mxu0 0
    %5487 = vmatpush2.bf16.msra.mxu0 %v5432
    %5488 = vmatprep.mubr.bf16.mxu0 %v5359
    %5489 = vmatmul.mubr.bf16.gmra.mxu0 %v5358
    %v5490 = vpop.f32.mrf.mxu0
    %v5491 = vadd.f32 0.0, %v5490
    %v5492 = vpop.f32.mrf.mxu0
    %v5493 = vpop.f32.mrf.mxu0
    %v5494 = vpop.f32.mrf.mxu0
    %5495 = vdwg.mxu0
    %v5496 = vadd.f32 %v5015, %v5491
    %v5497 = vld [vmem:[%s8] sm:$0x1]
    %v5498 = vmul.f32 %v5496, %v5496
    %v5499 = vsel %vm126, %v5498, 0.0
    %5500 = vadd.xlane.f32.xlu0 %v5499
    %v5501 = vpop.xlane.xlu0 %5500
    %v5502 = vmul.f32 %v5501, %v130
    %v5503 = vadd.f32 %v5502, 1e-05
    %v5504 = vrsqrt.pop %v5503
    %v5505 = vmul.f32 %v5496, %v5504
    %v5507 = vlaneseq
    %v5508 = vshrl.u32 %v5507, 7
    %v5509 = vsub.s32 0, %v5508
    %v5510 = vrot.slane %v5497, %v5509
    %v5512 = vmul.f32 %v5505, %v5510
    %v5513 = vld [vmem:[#allocation8] sm:$0xff]
    %v5514 = vld [vmem:[#allocation8 + $0x8] sm:$0xff]
    %v5515 = vld [vmem:[#allocation8 + $0x10] sm:$0xff]
    %v5516 = vld [vmem:[#allocation8 + $0x18] sm:$0xff]
    %v5517 = vld [vmem:[#allocation8 + $0x20] sm:$0xff]
    %v5518 = vld [vmem:[#allocation8 + $0x28] sm:$0xff]
    %v5519 = vld [vmem:[#allocation8 + $0x30] sm:$0xff]
    %v5520 = vld [vmem:[#allocation8 + $0x38] sm:$0xff]
    %v5521 = vld [vmem:[#allocation8 + $0x40] sm:$0xff]
    %v5522 = vld [vmem:[#allocation8 + $0x48] sm:$0xff]
    %v5523 = vld [vmem:[#allocation8 + $0x50] sm:$0xff]
    %v5524 = vld [vmem:[#allocation8 + $0x58] sm:$0xff]
    %v5525 = vld [vmem:[#allocation8 + $0x60] sm:$0xff]
    %v5526 = vld [vmem:[#allocation8 + $0x68] sm:$0xff]
    %v5527 = vld [vmem:[#allocation8 + $0x70] sm:$0xff]
    %v5528 = vld [vmem:[#allocation8 + $0x78] sm:$0xff]
    %v5529 = vpack.c.bf16 %v5512, %v5512
    %v5546 = vunpack.c.l.b16 %v5513
    %v5547 = vunpack.c.h.b16 %v5513
    %v5548 = vunpack.c.l.b16 %v5514
    %v5549 = vunpack.c.h.b16 %v5514
    %v5550 = vunpack.c.l.b16 %v5515
    %v5551 = vunpack.c.h.b16 %v5515
    %v5552 = vunpack.c.l.b16 %v5516
    %v5553 = vunpack.c.h.b16 %v5516
    %v5554 = vunpack.c.l.b16 %v5517
    %v5555 = vunpack.c.h.b16 %v5517
    %v5556 = vunpack.c.l.b16 %v5518
    %v5557 = vunpack.c.h.b16 %v5518
    %v5558 = vunpack.c.l.b16 %v5519
    %v5559 = vunpack.c.h.b16 %v5519
    %v5560 = vunpack.c.l.b16 %v5520
    %v5561 = vunpack.c.h.b16 %v5520
    %v5562 = vunpack.c.l.b16 %v5521
    %v5563 = vunpack.c.h.b16 %v5521
    %v5564 = vunpack.c.l.b16 %v5522
    %v5565 = vunpack.c.h.b16 %v5522
    %v5566 = vunpack.c.l.b16 %v5523
    %v5567 = vunpack.c.h.b16 %v5523
    %v5568 = vunpack.c.l.b16 %v5524
    %v5569 = vunpack.c.h.b16 %v5524
    %v5570 = vunpack.c.l.b16 %v5525
    %v5571 = vunpack.c.h.b16 %v5525
    %v5572 = vunpack.c.l.b16 %v5526
    %v5573 = vunpack.c.h.b16 %v5526
    %v5574 = vunpack.c.l.b16 %v5527
    %v5575 = vunpack.c.h.b16 %v5527
    %v5576 = vunpack.c.l.b16 %v5528
    %v5577 = vunpack.c.h.b16 %v5528
    %v5578 = vpack.c.b16 %v5548, %v5546
    %v5579 = vpack.c.b16 %v5549, %v5547
    %v5580 = vpack.c.b16 %v5552, %v5550
    %v5581 = vpack.c.b16 %v5553, %v5551
    %v5582 = vpack.c.b16 %v5556, %v5554
    %v5583 = vpack.c.b16 %v5557, %v5555
    %v5584 = vpack.c.b16 %v5560, %v5558
    %v5585 = vpack.c.b16 %v5561, %v5559
    %v5586 = vpack.c.b16 %v5564, %v5562
    %v5587 = vpack.c.b16 %v5565, %v5563
    %v5588 = vpack.c.b16 %v5568, %v5566
    %v5589 = vpack.c.b16 %v5569, %v5567
    %v5590 = vpack.c.b16 %v5572, %v5570
    %v5591 = vpack.c.b16 %v5573, %v5571
    %v5592 = vpack.c.b16 %v5576, %v5574
    %v5593 = vpack.c.b16 %v5577, %v5575
    %5610 = vmatprep.subr.bf16.mxu0 %v5593
    %5611 = vmatpush1.bf16.msra.mxu0 %v5592
    %5612 = vmatprep.subr.bf16.mxu0 %v5591
    %5613 = vmatpush1.bf16.msra.mxu0 %v5590
    %5614 = vmatprep.subr.bf16.mxu0 %v5589
    %5615 = vmatpush1.bf16.msra.mxu0 %v5588
    %5616 = vmatprep.subr.bf16.mxu0 %v5587
    %5617 = vmatpush1.bf16.msra.mxu0 %v5586
    %5618 = vmatprep.subr.bf16.mxu0 %v5585
    %5619 = vmatpush1.bf16.msra.mxu0 %v5584
    %5620 = vmatprep.subr.bf16.mxu0 %v5583
    %5621 = vmatpush1.bf16.msra.mxu0 %v5582
    %5622 = vmatprep.subr.bf16.mxu0 %v5581
    %5623 = vmatpush1.bf16.msra.mxu0 %v5580
    %5624 = vmatprep.subr.bf16.mxu0 %v5579
    %5625 = vmatpush1.bf16.msra.mxu0 %v5578
    %5626 = vmatprep.subr.bf16.mxu0 0
    %5627 = vmatpush2.bf16.msra.mxu0 0
    %5628 = vmatprep.subr.bf16.mxu0 0
    %5629 = vmatpush2.bf16.msra.mxu0 0
    %5630 = vmatprep.subr.bf16.mxu0 0
    %5631 = vmatpush2.bf16.msra.mxu0 0
    %5632 = vmatprep.subr.bf16.mxu0 0
    %5633 = vmatpush2.bf16.msra.mxu0 0
    %5634 = vmatprep.subr.bf16.mxu0 0
    %5635 = vmatpush2.bf16.msra.mxu0 0
    %5636 = vmatprep.subr.bf16.mxu0 0
    %5637 = vmatpush2.bf16.msra.mxu0 0
    %5638 = vmatprep.subr.bf16.mxu0 0
    %5639 = vmatpush2.bf16.msra.mxu0 0
    %5640 = vmatprep.subr.bf16.mxu0 0
    %5641 = vmatpush2.bf16.msra.mxu0 0
    %5642 = vmatprep.mubr.bf16.mxu0 0
    %5643 = vmatmul.mubr.bf16.gmra.mxu0 %v5529
    %v5644 = vpop.f32.mrf.mxu0
    %v5645 = vadd.f32 0.0, %v5644
    %v5646 = vpop.f32.mrf.mxu0
    %v5647 = vadd.f32 0.0, %v5646
    %v5648 = vpop.f32.mrf.mxu0
    %v5649 = vpop.f32.mrf.mxu0
    %5650 = vdwg.mxu0
    %v5653 = vcombine.low %v5645, %v5647
    %v5655 = vunpack.c.l.s4 1983009808
    %v5656 = vunpack.c.0.s8 %v5655
    %v5657 = vlaneseq
    %v5658 = vshrl.u32 %v5657, 7
    %v5659 = vsub.s32 %v5656, %v5658
    %v5660 = vrot.slane %v5653, %v5659
    %5662 = vst [vmem:[%s12] sm:$0xf] %v5660
    // Predicated region
    $region66: #{closed_call.23} parent=1 // pred_check
      _
    $region67: #{closed_call.23} parent=1 // pred_check_branch
      %5664 = sbr.rel (0) target = $region69
    $region68: #{closed_call.23} parent=1 // pred_region
      _
    $region69: #{closed_call.23} parent=1 // pred_fallthru
      _
    // Predicated region
    $region70: #{closed_call.23} parent=1 // pred_check
      _
    $region71: #{closed_call.23} parent=1 // pred_check_branch
      %5666 = sbr.rel (0) target = $region73
    $region72: #{closed_call.23} parent=1 // pred_region
      _
    $region73: #{closed_call.23} parent=1 // pred_fallthru
      _
    // Predicated region
    $region74: #{closed_call.23} parent=1 // pred_check
      _
    $region75: #{closed_call.23} parent=1 // pred_check_branch
      %5668 = sbr.rel (0) target = $region77
    $region76: #{closed_call.23} parent=1 // pred_region
      _
    $region77: #{closed_call.23} parent=1 // pred_fallthru
      _
    // Predicated region
    $region78: #{closed_call.23} parent=1 // pred_check
      _
    $region79: #{closed_call.23} parent=1 // pred_check_branch
      %5670 = sbr.rel (0) target = $region81
    $region80: #{closed_call.23} parent=1 // pred_region
      _
    $region81: #{closed_call.23} parent=1 // pred_fallthru
      _
    // Predicated region
    $region82: #{closed_call.23} parent=1 // pred_check
      _
    $region83: #{closed_call.23} parent=1 // pred_check_branch
      %5672 = sbr.rel (0) target = $region85
    $region84: #{closed_call.23} parent=1 // pred_region
      _
    $region85: #{closed_call.23} parent=1 // pred_fallthru
      _
    // Predicated region
    $region86: #{closed_call.23} parent=1 // pred_check
      _
    $region87: #{closed_call.23} parent=1 // pred_check_branch
      %5674 = sbr.rel (0) target = $region89
    $region88: #{closed_call.23} parent=1 // pred_region
      _
    $region89: #{closed_call.23} parent=1 // pred_fallthru
      _
    %5675 = vsyncpa [#allocation4], 1
    %5676 = vsyncpa [#allocation6], 1
    %5677 = vsyncpa [#allocation9], 1

</llo_original>
